<compile_context>
chip_gen: v6e
topology: v6e:2x2x1
jax: 0.10.0
libtpu: 0.0.40
codegen_flags: <defaults>
</compile_context>

<pallas_src>
import functools

import jax
import jax.numpy as jnp
from jax.experimental import pallas as pl
from jax.experimental.pallas import tpu as pltpu

I_DIM = 28 * 28          # 784 (module hard-codes x.view(-1, 28*28))
HID1, HID2 = 300, 100

KP = 1024                # padded input-feature dim (multiple of 128)
TK = 512                 # layer-1 K chunk streamed per grid step (2 steps)
N1P = 384                # 300 -> 384
N2P = 128                # 100 -> 128


def _round_up(x, m):
    return ((x + m - 1) // m) * m


def _mlp_bbb_kernel(x_ref,
                    w1m, w1s, w1e, b1m, b1s, b1e,
                    w2m, w2s, w2e, b2m, b2s, b2e,
                    w3m, w3s, w3e, b3m, b3s, b3e,
                    o_ref, h1_acc):
    """BBB MLP forward.  Grid axis 0 streams the layer-1 K dim in TK chunks."""
    k = pl.program_id(0)
    nk = pl.num_programs(0)

    def sample(m_ref, s_ref, e_ref):
        # sigma = softplus(rho) was precomputed outside the kernel; the
        # reparameterization w = mu + sigma * eps is a pure VPU FMA in f32.
        return (m_ref[...].astype(jnp.float32)
                + s_ref[...].astype(jnp.float32) * e_ref[...].astype(jnp.float32))

    @pl.when(k == 0)
    def _():
        h1_acc[...] = jnp.zeros_like(h1_acc)

    # Layer-1 partial product for this K chunk (W1 mu/sigma/eps streamed).
    w1 = sample(w1m, w1s, w1e)
    h1_acc[...] += jnp.dot(x_ref[...], w1, preferred_element_type=jnp.float32)

    # Layers 2/3 are small and resident; run them exactly once, on the last step.
    @pl.when(k == nk - 1)
    def _():
        b1 = sample(b1m, b1s, b1e)
        h = jnp.maximum(h1_acc[...] + b1, 0.0)                                   # relu_1

        w2 = sample(w2m, w2s, w2e)
        b2 = sample(b2m, b2s, b2e)
        h = jnp.maximum(jnp.dot(h, w2, preferred_element_type=jnp.float32) + b2,
                        0.0)                                                     # relu_2

        w3 = sample(w3m, w3s, w3e)
        b3 = sample(b3m, b3s, b3e)
        o_ref[...] = jnp.dot(h, w3, preferred_element_type=jnp.float32) + b3


def init_params(key, i_dim, o_dim):
    """Deterministic synthetic BayesianLinear parameters + pre-drawn epsilons.

    Per layer: weight_mu/rho/eps with PyTorch (out, in) convention, and
    bias_mu/rho/eps of shape (out,).
    """
    dims = [i_dim, 300, 100, o_dim]
    params = []
    for li in range(3):
        fan_in, fan_out = dims[li], dims[li + 1]
        key, kwm, kwe, kbm, kbe = jax.random.split(key, 5)
        params.append(dict(
            weight_mu=0.1 * jax.random.normal(kwm, (fan_out, fan_in), jnp.float32),
            weight_rho=jnp.full((fan_out, fan_in), -3.0, jnp.float32),
            weight_eps=jax.random.normal(kwe, (fan_out, fan_in), jnp.float32),
            bias_mu=0.1 * jax.random.normal(kbm, (fan_out,), jnp.float32),
            bias_rho=jnp.full((fan_out,), -3.0, jnp.float32),
            bias_eps=jax.random.normal(kbe, (fan_out,), jnp.float32),
        ))
    return params


def prepare_params(params, o_dim, dtype=jnp.bfloat16):
    """One-time parameter preparation (NOT in the per-forward hot path):

      * sigma = softplus(rho) precomputed with the numerically stable jax.nn
        implementation (kernel then only does mu + sigma*eps),
      * weights transposed to (in, out) so the kernel computes h @ W on the MXU,
      * everything zero-padded to MXU/lane-friendly shapes,
      * stored in bf16 to halve the HBM weight read (upcast in-kernel).
    """
    n3 = _round_up(o_dim, 128)
    dims_in = [KP, N1P, N2P]
    dims_out = [N1P, N2P, n3]

    flat = []
    for li, layer in enumerate(params):
        in_p, out_p = dims_in[li], dims_out[li]

        def pad_w(a):
            return jnp.pad(a, ((0, in_p - a.shape[0]),
                               (0, out_p - a.shape[1]))).astype(dtype)

        def pad_b(a):
            a = a.reshape(1, -1)
            return jnp.pad(a, ((0, 0), (0, out_p - a.shape[1]))).astype(dtype)

        flat.append(pad_w(layer["weight_mu"].T))
        flat.append(pad_w(jax.nn.softplus(layer["weight_rho"]).T))
        flat.append(pad_w(layer["weight_eps"].T))
        flat.append(pad_b(layer["bias_mu"]))
        flat.append(pad_b(jax.nn.softplus(layer["bias_rho"])))
        flat.append(pad_b(layer["bias_eps"]))
    return tuple(jax.device_put(a) for a in flat)


@functools.partial(jax.jit, static_argnames=("o_dim",))
def lenet300_100_bbb_forward(x, prepared, o_dim):
    """Forward pass of Lenet300_100BBB with pre-drawn weight epsilons."""
    # x.view(-1, 28*28)
    x2 = x.reshape(-1, I_DIM).astype(jnp.float32)
    batch = x2.shape[0]
    bp = _round_up(batch, 8)
    n3 = _round_up(o_dim, 128)

    x_p = jnp.pad(x2, ((0, bp - batch), (0, KP - I_DIM)))

    nk = KP // TK   # 2 grid steps over the layer-1 reduction dim

    stream_w1 = pl.BlockSpec((TK, N1P), lambda k: (k, 0))

    def const(shape):
        return pl.BlockSpec(shape, lambda k: (0, 0))

    grid_spec = pltpu.PrefetchScalarGridSpec(
        num_scalar_prefetch=0,
        grid=(nk,),
        in_specs=[
            pl.BlockSpec((bp, TK), lambda k: (0, k)),                    # x (streamed along K)
            stream_w1, stream_w1, stream_w1,                             # W1 mu / sigma / eps
            const((1, N1P)), const((1, N1P)), const((1, N1P)),           # b1
            const((N1P, N2P)), const((N1P, N2P)), const((N1P, N2P)),     # W2 (resident)
            const((1, N2P)), const((1, N2P)), const((1, N2P)),           # b2
            const((N2P, n3)), const((N2P, n3)), const((N2P, n3)),        # W3 (resident)
            const((1, n3)), const((1, n3)), const((1, n3)),              # b3
        ],
        out_specs=pl.BlockSpec((bp, n3), lambda k: (0, 0)),              # resident across k
        scratch_shapes=[pltpu.VMEM((bp, N1P), jnp.float32)],             # h1 accumulator
    )

    out_p = pl.pallas_call(
        _mlp_bbb_kernel,
        out_shape=jax.ShapeDtypeStruct((bp, n3), jnp.float32),
        grid_spec=grid_spec,
        compiler_params=pltpu.CompilerParams(
            dimension_semantics=("arbitrary",)),
    )(x_p, *prepared)

    return out_p[:batch, :o_dim]


def _reference_forward(x, prepared, o_dim):
    """Plain-JAX reference using the SAME prepared (bf16, padded, transposed)
    parameters the kernel consumes, so the comparison is apples-to-apples."""
    h = x.reshape(-1, I_DIM).astype(jnp.float32)
    h = jnp.pad(h, ((0, 0), (0, KP - I_DIM)))
    for li in range(3):
        wm, ws, we, bm, bs, be = prepared[6 * li: 6 * li + 6]
        w = wm.astype(jnp.float32) + ws.astype(jnp.float32) * we.astype(jnp.float32)
        b = bm.astype(jnp.float32) + bs.astype(jnp.float32) * be.astype(jnp.float32)
        h = jnp.dot(h, w, preferred_element_type=jnp.float32) + b[0]
        if li < 2:
            h = jnp.maximum(h, 0.0)
    return h[:, :o_dim]


if __name__ == "__main__":
    key = jax.random.PRNGKey(0)
    k_x, k_p = jax.random.split(key)

    o_dim = 10
    batch = 2
    # input consistent with x.view(-1, 28*28): NCHW MNIST-like images
    x = jax.random.normal(k_x, (batch, 1, 28, 28), jnp.float32)

    params = init_params(k_p, I_DIM, o_dim)
    prepared = prepare_params(params, o_dim)   # one-time prep, outside the hot path

    out = lenet300_100_bbb_forward(x, prepared, o_dim)
    out = jax.block_until_ready(out)

    ref = _reference_forward(x, prepared, o_dim)
    assert out.shape == (batch, o_dim), out.shape
    max_err = float(jnp.max(jnp.abs(out - ref)))
    assert jnp.allclose(out, ref, atol=1e-2, rtol=1e-2), max_err

    print("KERNEL_OK")
</pallas_src>

<mosaic_0001>
module attributes {stable_mosaic.version = 11 : i64} {
  func.func @_mlp_bbb_kernel(%arg0: i32, %arg1: memref<8x512xf32, #tpu.memory_space<vmem>>, %arg2: memref<512x384xbf16, #tpu.memory_space<vmem>>, %arg3: memref<512x384xbf16, #tpu.memory_space<vmem>>, %arg4: memref<512x384xbf16, #tpu.memory_space<vmem>>, %arg5: memref<1x384xbf16, #tpu.memory_space<vmem>>, %arg6: memref<1x384xbf16, #tpu.memory_space<vmem>>, %arg7: memref<1x384xbf16, #tpu.memory_space<vmem>>, %arg8: memref<384x128xbf16, #tpu.memory_space<vmem>>, %arg9: memref<384x128xbf16, #tpu.memory_space<vmem>>, %arg10: memref<384x128xbf16, #tpu.memory_space<vmem>>, %arg11: memref<1x128xbf16, #tpu.memory_space<vmem>>, %arg12: memref<1x128xbf16, #tpu.memory_space<vmem>>, %arg13: memref<1x128xbf16, #tpu.memory_space<vmem>>, %arg14: memref<128x128xbf16, #tpu.memory_space<vmem>>, %arg15: memref<128x128xbf16, #tpu.memory_space<vmem>>, %arg16: memref<128x128xbf16, #tpu.memory_space<vmem>>, %arg17: memref<1x128xbf16, #tpu.memory_space<vmem>>, %arg18: memref<1x128xbf16, #tpu.memory_space<vmem>>, %arg19: memref<1x128xbf16, #tpu.memory_space<vmem>>, %arg20: memref<8x128xf32, #tpu.memory_space<vmem>>, %arg21: memref<8x384xf32, #tpu.memory_space<vmem>>) attributes {dimension_semantics = [#tpu.dimension_semantics<arbitrary>], iteration_bounds = array<i64: 2>, scalar_prefetch = 0 : i64, scratch_operands = 1 : i64, tpu.core_type = #tpu.core_type<tc>, window_params = [{transform_indices = @transform_0, window_bounds = array<i64: 8, 512>}, {transform_indices = @transform_1, window_bounds = array<i64: 512, 384>}, {transform_indices = @transform_2, window_bounds = array<i64: 512, 384>}, {transform_indices = @transform_3, window_bounds = array<i64: 512, 384>}, {pipeline_mode = #tpu.pipeline_mode<synchronous>, transform_indices = @transform_4, window_bounds = array<i64: 1, 384>}, {pipeline_mode = #tpu.pipeline_mode<synchronous>, transform_indices = @transform_5, window_bounds = array<i64: 1, 384>}, {pipeline_mode = #tpu.pipeline_mode<synchronous>, transform_indices = @transform_6, window_bounds = array<i64: 1, 384>}, {pipeline_mode = #tpu.pipeline_mode<synchronous>, transform_indices = @transform_7, window_bounds = array<i64: 384, 128>}, {pipeline_mode = #tpu.pipeline_mode<synchronous>, transform_indices = @transform_8, window_bounds = array<i64: 384, 128>}, {pipeline_mode = #tpu.pipeline_mode<synchronous>, transform_indices = @transform_9, window_bounds = array<i64: 384, 128>}, {pipeline_mode = #tpu.pipeline_mode<synchronous>, transform_indices = @transform_10, window_bounds = array<i64: 1, 128>}, {pipeline_mode = #tpu.pipeline_mode<synchronous>, transform_indices = @transform_11, window_bounds = array<i64: 1, 128>}, {pipeline_mode = #tpu.pipeline_mode<synchronous>, transform_indices = @transform_12, window_bounds = array<i64: 1, 128>}, {pipeline_mode = #tpu.pipeline_mode<synchronous>, transform_indices = @transform_13, window_bounds = array<i64: 128, 128>}, {pipeline_mode = #tpu.pipeline_mode<synchronous>, transform_indices = @transform_14, window_bounds = array<i64: 128, 128>}, {pipeline_mode = #tpu.pipeline_mode<synchronous>, transform_indices = @transform_15, window_bounds = array<i64: 128, 128>}, {pipeline_mode = #tpu.pipeline_mode<synchronous>, transform_indices = @transform_16, window_bounds = array<i64: 1, 128>}, {pipeline_mode = #tpu.pipeline_mode<synchronous>, transform_indices = @transform_17, window_bounds = array<i64: 1, 128>}, {pipeline_mode = #tpu.pipeline_mode<synchronous>, transform_indices = @transform_18, window_bounds = array<i64: 1, 128>}, {pipeline_mode = #tpu.pipeline_mode<synchronous>, transform_indices = @transform_19, window_bounds = array<i64: 8, 128>}]} {
    %c0_i32 = arith.constant 0 : i32
    %0 = arith.cmpi eq, %arg0, %c0_i32 : i32
    %1 = arith.extui %0 : i1 to i32
    %c0_i32_0 = arith.constant 0 : i32
    %2 = arith.cmpi ne, %1, %c0_i32_0 : i32
    scf.if %2 {
      %cst_13 = arith.constant 0.000000e+00 : f32
      %19 = vector.broadcast %cst_13 : f32 to vector<8x384xf32>
      %c0_14 = arith.constant 0 : index
      %c0_15 = arith.constant 0 : index
      %20 = vector.load %arg21[%c0_14, %c0_15] : memref<8x384xf32, #tpu.memory_space<vmem>>, vector<8x384xf32>
      tpu.vector_store %arg21[%c0_14, %c0_15], %19 {strides = array<i32>} : memref<8x384xf32, #tpu.memory_space<vmem>>, vector<8x384xf32>,
    } else {
    }
    %c0 = arith.constant 0 : index
    %c0_1 = arith.constant 0 : index
    %3 = vector.load %arg2[%c0, %c0_1] : memref<512x384xbf16, #tpu.memory_space<vmem>>, vector<512x384xbf16>
    %4 = arith.extf %3 : vector<512x384xbf16> to vector<512x384xf32>
    %c0_2 = arith.constant 0 : index
    %c0_3 = arith.constant 0 : index
    %5 = vector.load %arg3[%c0_2, %c0_3] : memref<512x384xbf16, #tpu.memory_space<vmem>>, vector<512x384xbf16>
    %6 = arith.extf %5 : vector<512x384xbf16> to vector<512x384xf32>
    %c0_4 = arith.constant 0 : index
    %c0_5 = arith.constant 0 : index
    %7 = vector.load %arg4[%c0_4, %c0_5] : memref<512x384xbf16, #tpu.memory_space<vmem>>, vector<512x384xbf16>
    %8 = arith.extf %7 : vector<512x384xbf16> to vector<512x384xf32>
    %9 = arith.mulf %6, %8 : vector<512x384xf32>
    %10 = arith.addf %4, %9 : vector<512x384xf32>
    %c0_6 = arith.constant 0 : index
    %c0_7 = arith.constant 0 : index
    %11 = vector.load %arg21[%c0_6, %c0_7] : memref<8x384xf32, #tpu.memory_space<vmem>>, vector<8x384xf32>
    %c0_8 = arith.constant 0 : index
    %c0_9 = arith.constant 0 : index
    %12 = vector.load %arg1[%c0_8, %c0_9] : memref<8x512xf32, #tpu.memory_space<vmem>>, vector<8x512xf32>
    %cst = arith.constant dense<0.000000e+00> : vector<8x384xf32>
    %13 = tpu.matmul %12, %10, %cst {dimension_numbers = #tpu.dot_dimension_numbers<[1], [0], [0], [1], [0, 0, 1, 1], [], []>} : vector<8x512xf32>, vector<512x384xf32>, vector<8x384xf32> -> vector<8x384xf32>
    %14 = arith.addf %11, %13 : vector<8x384xf32>
    %c0_10 = arith.constant 0 : index
    %c0_11 = arith.constant 0 : index
    %15 = vector.load %arg21[%c0_10, %c0_11] : memref<8x384xf32, #tpu.memory_space<vmem>>, vector<8x384xf32>
    tpu.vector_store %arg21[%c0_10, %c0_11], %14 {strides = array<i32>} : memref<8x384xf32, #tpu.memory_space<vmem>>, vector<8x384xf32>,
    %c1_i32 = arith.constant 1 : i32
    %16 = arith.cmpi eq, %arg0, %c1_i32 : i32
    %17 = arith.extui %16 : i1 to i32
    %c0_i32_12 = arith.constant 0 : i32
    %18 = arith.cmpi ne, %17, %c0_i32_12 : i32
    scf.if %18 {
      %c0_13 = arith.constant 0 : index
      %c0_14 = arith.constant 0 : index
      %19 = vector.load %arg5[%c0_13, %c0_14] : memref<1x384xbf16, #tpu.memory_space<vmem>>, vector<1x384xbf16>
      %20 = arith.extf %19 : vector<1x384xbf16> to vector<1x384xf32>
      %c0_15 = arith.constant 0 : index
      %c0_16 = arith.constant 0 : index
      %21 = vector.load %arg6[%c0_15, %c0_16] : memref<1x384xbf16, #tpu.memory_space<vmem>>, vector<1x384xbf16>
      %22 = arith.extf %21 : vector<1x384xbf16> to vector<1x384xf32>
      %c0_17 = arith.constant 0 : index
      %c0_18 = arith.constant 0 : index
      %23 = vector.load %arg7[%c0_17, %c0_18] : memref<1x384xbf16, #tpu.memory_space<vmem>>, vector<1x384xbf16>
      %24 = arith.extf %23 : vector<1x384xbf16> to vector<1x384xf32>
      %25 = arith.mulf %22, %24 : vector<1x384xf32>
      %26 = arith.addf %20, %25 : vector<1x384xf32>
      %c0_19 = arith.constant 0 : index
      %c0_20 = arith.constant 0 : index
      %27 = vector.load %arg21[%c0_19, %c0_20] : memref<8x384xf32, #tpu.memory_space<vmem>>, vector<8x384xf32>
      %28 = vector.broadcast %26 : vector<1x384xf32> to vector<8x384xf32>
      %29 = arith.addf %27, %28 : vector<8x384xf32>
      %cst_21 = arith.constant 0.000000e+00 : f32
      %30 = vector.broadcast %cst_21 : f32 to vector<8x384xf32>
      %31 = arith.maximumf %29, %30 : vector<8x384xf32>
      %c0_22 = arith.constant 0 : index
      %c0_23 = arith.constant 0 : index
      %32 = vector.load %arg8[%c0_22, %c0_23] : memref<384x128xbf16, #tpu.memory_space<vmem>>, vector<384x128xbf16>
      %33 = arith.extf %32 : vector<384x128xbf16> to vector<384x128xf32>
      %c0_24 = arith.constant 0 : index
      %c0_25 = arith.constant 0 : index
      %34 = vector.load %arg9[%c0_24, %c0_25] : memref<384x128xbf16, #tpu.memory_space<vmem>>, vector<384x128xbf16>
      %35 = arith.extf %34 : vector<384x128xbf16> to vector<384x128xf32>
      %c0_26 = arith.constant 0 : index
      %c0_27 = arith.constant 0 : index
      %36 = vector.load %arg10[%c0_26, %c0_27] : memref<384x128xbf16, #tpu.memory_space<vmem>>, vector<384x128xbf16>
      %37 = arith.extf %36 : vector<384x128xbf16> to vector<384x128xf32>
      %38 = arith.mulf %35, %37 : vector<384x128xf32>
      %39 = arith.addf %33, %38 : vector<384x128xf32>
      %c0_28 = arith.constant 0 : index
      %c0_29 = arith.constant 0 : index
      %40 = vector.load %arg11[%c0_28, %c0_29] : memref<1x128xbf16, #tpu.memory_space<vmem>>, vector<1x128xbf16>
      %41 = arith.extf %40 : vector<1x128xbf16> to vector<1x128xf32>
      %c0_30 = arith.constant 0 : index
      %c0_31 = arith.constant 0 : index
      %42 = vector.load %arg12[%c0_30, %c0_31] : memref<1x128xbf16, #tpu.memory_space<vmem>>, vector<1x128xbf16>
      %43 = arith.extf %42 : vector<1x128xbf16> to vector<1x128xf32>
      %c0_32 = arith.constant 0 : index
      %c0_33 = arith.constant 0 : index
      %44 = vector.load %arg13[%c0_32, %c0_33] : memref<1x128xbf16, #tpu.memory_space<vmem>>, vector<1x128xbf16>
      %45 = arith.extf %44 : vector<1x128xbf16> to vector<1x128xf32>
      %46 = arith.mulf %43, %45 : vector<1x128xf32>
      %47 = arith.addf %41, %46 : vector<1x128xf32>
      %cst_34 = arith.constant dense<0.000000e+00> : vector<8x128xf32>
      %48 = tpu.matmul %31, %39, %cst_34 {dimension_numbers = #tpu.dot_dimension_numbers<[1], [0], [0], [1], [0, 0, 1, 1], [], []>} : vector<8x384xf32>, vector<384x128xf32>, vector<8x128xf32> -> vector<8x128xf32>
      %49 = vector.broadcast %47 : vector<1x128xf32> to vector<8x128xf32>
      %50 = arith.addf %48, %49 : vector<8x128xf32>
      %cst_35 = arith.constant 0.000000e+00 : f32
      %51 = vector.broadcast %cst_35 : f32 to vector<8x128xf32>
      %52 = arith.maximumf %50, %51 : vector<8x128xf32>
      %c0_36 = arith.constant 0 : index
      %c0_37 = arith.constant 0 : index
      %53 = vector.load %arg14[%c0_36, %c0_37] : memref<128x128xbf16, #tpu.memory_space<vmem>>, vector<128x128xbf16>
      %54 = arith.extf %53 : vector<128x128xbf16> to vector<128x128xf32>
      %c0_38 = arith.constant 0 : index
      %c0_39 = arith.constant 0 : index
      %55 = vector.load %arg15[%c0_38, %c0_39] : memref<128x128xbf16, #tpu.memory_space<vmem>>, vector<128x128xbf16>
      %56 = arith.extf %55 : vector<128x128xbf16> to vector<128x128xf32>
      %c0_40 = arith.constant 0 : index
      %c0_41 = arith.constant 0 : index
      %57 = vector.load %arg16[%c0_40, %c0_41] : memref<128x128xbf16, #tpu.memory_space<vmem>>, vector<128x128xbf16>
      %58 = arith.extf %57 : vector<128x128xbf16> to vector<128x128xf32>
      %59 = arith.mulf %56, %58 : vector<128x128xf32>
      %60 = arith.addf %54, %59 : vector<128x128xf32>
      %c0_42 = arith.constant 0 : index
      %c0_43 = arith.constant 0 : index
      %61 = vector.load %arg17[%c0_42, %c0_43] : memref<1x128xbf16, #tpu.memory_space<vmem>>, vector<1x128xbf16>
      %62 = arith.extf %61 : vector<1x128xbf16> to vector<1x128xf32>
      %c0_44 = arith.constant 0 : index
      %c0_45 = arith.constant 0 : index
      %63 = vector.load %arg18[%c0_44, %c0_45] : memref<1x128xbf16, #tpu.memory_space<vmem>>, vector<1x128xbf16>
      %64 = arith.extf %63 : vector<1x128xbf16> to vector<1x128xf32>
      %c0_46 = arith.constant 0 : index
      %c0_47 = arith.constant 0 : index
      %65 = vector.load %arg19[%c0_46, %c0_47] : memref<1x128xbf16, #tpu.memory_space<vmem>>, vector<1x128xbf16>
      %66 = arith.extf %65 : vector<1x128xbf16> to vector<1x128xf32>
      %67 = arith.mulf %64, %66 : vector<1x128xf32>
      %68 = arith.addf %62, %67 : vector<1x128xf32>
      %cst_48 = arith.constant dense<0.000000e+00> : vector<8x128xf32>
      %69 = tpu.matmul %52, %60, %cst_48 {dimension_numbers = #tpu.dot_dimension_numbers<[1], [0], [0], [1], [0, 0, 1, 1], [], []>} : vector<8x128xf32>, vector<128x128xf32>, vector<8x128xf32> -> vector<8x128xf32>
      %70 = vector.broadcast %68 : vector<1x128xf32> to vector<8x128xf32>
      %71 = arith.addf %69, %70 : vector<8x128xf32>
      %c0_49 = arith.constant 0 : index
      %c0_50 = arith.constant 0 : index
      %72 = vector.load %arg20[%c0_49, %c0_50] : memref<8x128xf32, #tpu.memory_space<vmem>>, vector<8x128xf32>
      tpu.vector_store %arg20[%c0_49, %c0_50], %71 {strides = array<i32>} : memref<8x128xf32, #tpu.memory_space<vmem>>, vector<8x128xf32>,
    } else {
    }
    return
  }
  func.func @transform_0(%arg0: i32) -> (i32, i32) {
    %c0_i32 = arith.constant 0 : i32
    %c0_i32_0 = arith.constant 0 : i32
    return %c0_i32, %arg0 : i32, i32
  }
  func.func @transform_1(%arg0: i32) -> (i32, i32) {
    %c0_i32 = arith.constant 0 : i32
    %c0_i32_0 = arith.constant 0 : i32
    return %arg0, %c0_i32 : i32, i32
  }
  func.func @transform_2(%arg0: i32) -> (i32, i32) {
    %c0_i32 = arith.constant 0 : i32
    %c0_i32_0 = arith.constant 0 : i32
    return %arg0, %c0_i32 : i32, i32
  }
  func.func @transform_3(%arg0: i32) -> (i32, i32) {
    %c0_i32 = arith.constant 0 : i32
    %c0_i32_0 = arith.constant 0 : i32
    return %arg0, %c0_i32 : i32, i32
  }
  func.func @transform_4(%arg0: i32) -> (i32, i32) {
    %c0_i32 = arith.constant 0 : i32
    %c0_i32_0 = arith.constant 0 : i32
    %c0_i32_1 = arith.constant 0 : i32
    return %c0_i32, %c0_i32_0 : i32, i32
  }
  func.func @transform_5(%arg0: i32) -> (i32, i32) {
    %c0_i32 = arith.constant 0 : i32
    %c0_i32_0 = arith.constant 0 : i32
    %c0_i32_1 = arith.constant 0 : i32
    return %c0_i32, %c0_i32_0 : i32, i32
  }
  func.func @transform_6(%arg0: i32) -> (i32, i32) {
    %c0_i32 = arith.constant 0 : i32
    %c0_i32_0 = arith.constant 0 : i32
    %c0_i32_1 = arith.constant 0 : i32
    return %c0_i32, %c0_i32_0 : i32, i32
  }
  func.func @transform_7(%arg0: i32) -> (i32, i32) {
    %c0_i32 = arith.constant 0 : i32
    %c0_i32_0 = arith.constant 0 : i32
    %c0_i32_1 = arith.constant 0 : i32
    return %c0_i32, %c0_i32_0 : i32, i32
  }
  func.func @transform_8(%arg0: i32) -> (i32, i32) {
    %c0_i32 = arith.constant 0 : i32
    %c0_i32_0 = arith.constant 0 : i32
    %c0_i32_1 = arith.constant 0 : i32
    return %c0_i32, %c0_i32_0 : i32, i32
  }
  func.func @transform_9(%arg0: i32) -> (i32, i32) {
    %c0_i32 = arith.constant 0 : i32
    %c0_i32_0 = arith.constant 0 : i32
    %c0_i32_1 = arith.constant 0 : i32
    return %c0_i32, %c0_i32_0 : i32, i32
  }
  func.func @transform_10(%arg0: i32) -> (i32, i32) {
    %c0_i32 = arith.constant 0 : i32
    %c0_i32_0 = arith.constant 0 : i32
    %c0_i32_1 = arith.constant 0 : i32
    return %c0_i32, %c0_i32_0 : i32, i32
  }
  func.func @transform_11(%arg0: i32) -> (i32, i32) {
    %c0_i32 = arith.constant 0 : i32
    %c0_i32_0 = arith.constant 0 : i32
    %c0_i32_1 = arith.constant 0 : i32
    return %c0_i32, %c0_i32_0 : i32, i32
  }
  func.func @transform_12(%arg0: i32) -> (i32, i32) {
    %c0_i32 = arith.constant 0 : i32
    %c0_i32_0 = arith.constant 0 : i32
    %c0_i32_1 = arith.constant 0 : i32
    return %c0_i32, %c0_i32_0 : i32, i32
  }
  func.func @transform_13(%arg0: i32) -> (i32, i32) {
    %c0_i32 = arith.constant 0 : i32
    %c0_i32_0 = arith.constant 0 : i32
    %c0_i32_1 = arith.constant 0 : i32
    return %c0_i32, %c0_i32_0 : i32, i32
  }
  func.func @transform_14(%arg0: i32) -> (i32, i32) {
    %c0_i32 = arith.constant 0 : i32
    %c0_i32_0 = arith.constant 0 : i32
    %c0_i32_1 = arith.constant 0 : i32
    return %c0_i32, %c0_i32_0 : i32, i32
  }
  func.func @transform_15(%arg0: i32) -> (i32, i32) {
    %c0_i32 = arith.constant 0 : i32
    %c0_i32_0 = arith.constant 0 : i32
    %c0_i32_1 = arith.constant 0 : i32
    return %c0_i32, %c0_i32_0 : i32, i32
  }
  func.func @transform_16(%arg0: i32) -> (i32, i32) {
    %c0_i32 = arith.constant 0 : i32
    %c0_i32_0 = arith.constant 0 : i32
    %c0_i32_1 = arith.constant 0 : i32
    return %c0_i32, %c0_i32_0 : i32, i32
  }
  func.func @transform_17(%arg0: i32) -> (i32, i32) {
    %c0_i32 = arith.constant 0 : i32
    %c0_i32_0 = arith.constant 0 : i32
    %c0_i32_1 = arith.constant 0 : i32
    return %c0_i32, %c0_i32_0 : i32, i32
  }
  func.func @transform_18(%arg0: i32) -> (i32, i32) {
    %c0_i32 = arith.constant 0 : i32
    %c0_i32_0 = arith.constant 0 : i32
    %c0_i32_1 = arith.constant 0 : i32
    return %c0_i32, %c0_i32_0 : i32, i32
  }
  func.func @transform_19(%arg0: i32) -> (i32, i32) {
    %c0_i32 = arith.constant 0 : i32
    %c0_i32_0 = arith.constant 0 : i32
    %c0_i32_1 = arith.constant 0 : i32
    return %c0_i32, %c0_i32_0 : i32, i32
  }
}

</mosaic_0001>

<llo_original>
// kernel: lenet300_100_bbb_forward.1
$region0: #{lenet300_100_bbb_forward.1}
  #allocation0 [shape = 'u32[]', space=smem, size = 0x4, offset = 0x4, fixed_abs, tag = 'smem constant byte address 0x4 - core index']
  #allocation1 [shape = 'u32[144,128]{1,0:T(1,128)}', space=vmem, size = 0x12000, scoped, tag = 'internal scratch']
  #allocation2 [shape = 'f32[8,384]{1,0:T(8,128)}', space=vmem, size = 0x3000, scoped, tag = 'scratch operand']
  %s0 = inlined_call_operand.vmem [shape: f32[8,1024], index: 0, kind: input, shape index: {}]
  %s1 = inlined_call_operand.hbm [shape: bf16[1024,384], index: 1, kind: input, shape index: {}]
  %s2 = inlined_call_operand.hbm [shape: bf16[1024,384], index: 2, kind: input, shape index: {}]
  %s3 = inlined_call_operand.hbm [shape: bf16[1024,384], index: 3, kind: input, shape index: {}]
  %s4 = inlined_call_operand.vmem [shape: bf16[1,384], index: 4, kind: input, shape index: {}]
  %s5 = inlined_call_operand.vmem [shape: bf16[1,384], index: 5, kind: input, shape index: {}]
  %s6 = inlined_call_operand.vmem [shape: bf16[1,384], index: 6, kind: input, shape index: {}]
  %s7 = inlined_call_operand.vmem [shape: bf16[384,128], index: 7, kind: input, shape index: {}]
  %s8 = inlined_call_operand.hbm [shape: bf16[384,128], index: 8, kind: input, shape index: {}]
  %s9 = inlined_call_operand.hbm [shape: bf16[384,128], index: 9, kind: input, shape index: {}]
  %s10 = inlined_call_operand.vmem [shape: bf16[1,128], index: 10, kind: input, shape index: {}]
  %s11 = inlined_call_operand.vmem [shape: bf16[1,128], index: 11, kind: input, shape index: {}]
  %s12 = inlined_call_operand.vmem [shape: bf16[1,128], index: 12, kind: input, shape index: {}]
  %s13 = inlined_call_operand.vmem [shape: bf16[128,128], index: 13, kind: input, shape index: {}]
  %s14 = inlined_call_operand.hbm [shape: bf16[128,128], index: 14, kind: input, shape index: {}]
  %s15 = inlined_call_operand.hbm [shape: bf16[128,128], index: 15, kind: input, shape index: {}]
  %s16 = inlined_call_operand.vmem [shape: bf16[1,128], index: 16, kind: input, shape index: {}]
  %s17 = inlined_call_operand.vmem [shape: bf16[1,128], index: 17, kind: input, shape index: {}]
  %s18 = inlined_call_operand.vmem [shape: bf16[1,128], index: 18, kind: input, shape index: {}]
  %s19 = inlined_call_operand.vmem [shape: f32[8,128], index: 19, kind: output, shape index: {}]
  %s20 = sld [smem:[#allocation0]]
  $region145: #{lenet300_100_bbb_forward.1} parent=0
    _
  %s22 = ssub.s32 1, %s20
  %s23 = scalar_select 0, %s22, %s20
  $region1: #{lenet300_100_bbb_forward.1} parent=0
    #allocation3 [shape = 'u8[786432]{0}', space=vmem, size = 0xc0000, scoped, tag = 'input window, operand 1']
    #allocation4 [shape = 's32[2]{0}', space=sflag, size = 0x8, scoped, tag = 'scoped memory for lenet300_100_bbb_forward.1']
    #allocation5 [shape = 'u8[786432]{0}', space=vmem, size = 0xc0000, scoped, tag = 'input window, operand 2']
    #allocation6 [shape = 's32[2]{0}', space=sflag, size = 0x8, scoped, tag = 'scoped memory for lenet300_100_bbb_forward.1']
    #allocation7 [shape = 'u8[786432]{0}', space=vmem, size = 0xc0000, scoped, tag = 'input window, operand 3']
    #allocation8 [shape = 'u8[98304]{0}', space=vmem, size = 0x18000, scoped, tag = 'input window, operand 8, single buffered']
    #allocation9 [shape = 's32[1]{0}', space=sflag, size = 0x4, scoped, tag = 'scoped memory for lenet300_100_bbb_forward.1']
    #allocation10 [shape = 'u8[98304]{0}', space=vmem, size = 0x18000, scoped, tag = 'input window, operand 9, single buffered']
    #allocation11 [shape = 'u8[32768]{0}', space=vmem, size = 0x8000, scoped, tag = 'input window, operand 14, single buffered']
    #allocation12 [shape = 's32[1]{0}', space=sflag, size = 0x4, scoped, tag = 'scoped memory for lenet300_100_bbb_forward.1']
    #allocation13 [shape = 'u8[32768]{0}', space=vmem, size = 0x8000, scoped, tag = 'input window, operand 15, single buffered']
    %24 = vsyncpa [#allocation4], 0
    %s25 = scalar_lea.sflag [#allocation4], 1
    %26 = vsyncpa %s25, 0
    %27 = vsyncpa [#allocation6], 0
    %s28 = scalar_lea.sflag [#allocation6], 1
    %29 = vsyncpa %s28, 0
    %30 = vsyncpa [#allocation9], 0
    %31 = vsyncpa [#allocation12], 0
    loop: start=0, step=1, limit=4
    $region2: #{lenet300_100_bbb_forward.1} parent=1 // loop_pre_header
      _
    $region3: #{lenet300_100_bbb_forward.1} parent=1 // loop_header
      %s33 = sphi 0, %s37
      %p34 = scmp.ge.s32.totalorder %s33, 4
      %s43 = sphi 0, %s45
      %s46 = sphi 0, %s43
      %s47 = sphi 0, %s46
      %s63 = sphi 0, %s47
      %s69 = sphi 0, %s71
      %s72 = sphi 0, %s69
      %s73 = sphi 0, %s72
      %s89 = sphi 0, %s73
      %s95 = sphi 0, %s97
      %s98 = sphi 0, %s95
      %s99 = sphi 0, %s98
      %s115 = sphi 0, %s99
      %s121 = sphi 0, %s123
      %s124 = sphi 0, %s121
      %s125 = sphi 0, %s124
      %s141 = sphi 0, %s125
      %s145 = sphi 0, %s145
      %s147 = sphi 0, %s145
      %s148 = sphi 0, %s147
      %s162 = sphi 0, %s148
      %s166 = sphi 0, %s166
      %s168 = sphi 0, %s166
      %s169 = sphi 0, %s168
      %s183 = sphi 0, %s169
      %s187 = sphi 0, %s187
      %s189 = sphi 0, %s187
      %s190 = sphi 0, %s189
      %s204 = sphi 0, %s190
      %s208 = sphi 0, %s208
      %s210 = sphi 0, %s208
      %s211 = sphi 0, %s210
      %s225 = sphi 0, %s211
      %s229 = sphi 0, %s229
      %s231 = sphi 0, %s229
      %s232 = sphi 0, %s231
      %s246 = sphi 0, %s232
      %s250 = sphi 0, %s250
      %s252 = sphi 0, %s250
      %s253 = sphi 0, %s252
      %s267 = sphi 0, %s253
      %s271 = sphi 0, %s271
      %s273 = sphi 0, %s271
      %s274 = sphi 0, %s273
      %s288 = sphi 0, %s274
      %s292 = sphi 0, %s292
      %s294 = sphi 0, %s292
      %s295 = sphi 0, %s294
      %s309 = sphi 0, %s295
      %s313 = sphi 0, %s313
      %s315 = sphi 0, %s313
      %s316 = sphi 0, %s315
      %s330 = sphi 0, %s316
      %s334 = sphi 0, %s334
      %s336 = sphi 0, %s334
      %s337 = sphi 0, %s336
      %s351 = sphi 0, %s337
      %s355 = sphi 0, %s355
      %s357 = sphi 0, %s355
      %s358 = sphi 0, %s357
      %s372 = sphi 0, %s358
      %s376 = sphi 0, %s376
      %s378 = sphi 0, %s376
      %s379 = sphi 0, %s378
      %s393 = sphi 0, %s379
      %s397 = sphi 0, %s397
      %s399 = sphi 0, %s397
      %s400 = sphi 0, %s399
      %s414 = sphi 0, %s400
      %s418 = sphi 0, %s418
      %s420 = sphi 0, %s418
      %s421 = sphi 0, %s420
      %s435 = sphi 0, %s421
      %s439 = sphi 0, %s439
      %s441 = sphi 0, %s439
      %s442 = sphi 0, %s441
      %s456 = sphi 0, %s442
      %s460 = sphi 0, %s460
      %s462 = sphi 0, %s460
      %s463 = sphi 0, %s462
      %s477 = sphi 0, %s463
    $region4: #{lenet300_100_bbb_forward.1} parent=1 // loop_header_branch
      %36 = sbr.rel (%p34) target = $region8
    $region5: #{lenet300_100_bbb_forward.1} parent=1 // loop_body
      %s38 = ssub.s32 %s33, 1
      %s39 = ssub.s32 %s33, 2
      %s40 = sadd.s32 %s33, 1
      %s41 = ssub.s32 %s33, %s40
      %p42 = scmp.eq.s32.totalorder %s41, 0
      %s44 = sadd.s32 %s43, 1
      %s45 = scalar_select %p42, %s43, %s44
      %p48 = pneg %p42
      %p49 = scmp.eq.s32.totalorder %s33, 1
      %p50 = por %p48, %p49
      %p51 = scmp.ne.s32.totalorder %s43, %s46
      %p52 = scmp.eq.s32.totalorder %s33, 0
      %p53 = por %p51, %p52
      %p54 = scmp.ne.s32.totalorder %s43, %s46
      %p55 = scmp.eq.s32.totalorder %s38, 1
      %p56 = por %p54, %p55
      %p57 = scmp.ne.s32.totalorder %s46, %s47
      %p58 = scmp.eq.s32.totalorder %s38, 0
      %p59 = por %p57, %p58
      %p60 = scmp.ne.s32.totalorder %s46, %s47
      %p61 = scmp.eq.s32.totalorder %s39, 1
      %p62 = por %p60, %p61
      %p64 = scmp.ne.s32.totalorder %s47, %s63
      %p65 = scmp.eq.s32.totalorder %s39, 0
      %p66 = por %p64, %p65
      %s67 = ssub.s32 %s33, %s40
      %p68 = scmp.eq.s32.totalorder %s67, 0
      %s70 = sadd.s32 %s69, 1
      %s71 = scalar_select %p68, %s69, %s70
      %p74 = pneg %p68
      %p75 = scmp.eq.s32.totalorder %s33, 1
      %p76 = por %p74, %p75
      %p77 = scmp.ne.s32.totalorder %s69, %s72
      %p78 = scmp.eq.s32.totalorder %s33, 0
      %p79 = por %p77, %p78
      %p80 = scmp.ne.s32.totalorder %s69, %s72
      %p81 = scmp.eq.s32.totalorder %s38, 1
      %p82 = por %p80, %p81
      %p83 = scmp.ne.s32.totalorder %s72, %s73
      %p84 = scmp.eq.s32.totalorder %s38, 0
      %p85 = por %p83, %p84
      %p86 = scmp.ne.s32.totalorder %s72, %s73
      %p87 = scmp.eq.s32.totalorder %s39, 1
      %p88 = por %p86, %p87
      %p90 = scmp.ne.s32.totalorder %s73, %s89
      %p91 = scmp.eq.s32.totalorder %s39, 0
      %p92 = por %p90, %p91
      %s93 = ssub.s32 %s33, %s40
      %p94 = scmp.eq.s32.totalorder %s93, 0
      %s96 = sadd.s32 %s95, 1
      %s97 = scalar_select %p94, %s95, %s96
      %p100 = pneg %p94
      %p101 = scmp.eq.s32.totalorder %s33, 1
      %p102 = por %p100, %p101
      %p103 = scmp.ne.s32.totalorder %s95, %s98
      %p104 = scmp.eq.s32.totalorder %s33, 0
      %p105 = por %p103, %p104
      %p106 = scmp.ne.s32.totalorder %s95, %s98
      %p107 = scmp.eq.s32.totalorder %s38, 1
      %p108 = por %p106, %p107
      %p109 = scmp.ne.s32.totalorder %s98, %s99
      %p110 = scmp.eq.s32.totalorder %s38, 0
      %p111 = por %p109, %p110
      %p112 = scmp.ne.s32.totalorder %s98, %s99
      %p113 = scmp.eq.s32.totalorder %s39, 1
      %p114 = por %p112, %p113
      %p116 = scmp.ne.s32.totalorder %s99, %s115
      %p117 = scmp.eq.s32.totalorder %s39, 0
      %p118 = por %p116, %p117
      %s119 = ssub.s32 %s33, %s40
      %p120 = scmp.eq.s32.totalorder %s119, 0
      %s122 = sadd.s32 %s121, 1
      %s123 = scalar_select %p120, %s121, %s122
      %p126 = pneg %p120
      %p127 = scmp.eq.s32.totalorder %s33, 1
      %p128 = por %p126, %p127
      %p129 = scmp.ne.s32.totalorder %s121, %s124
      %p130 = scmp.eq.s32.totalorder %s33, 0
      %p131 = por %p129, %p130
      %p132 = scmp.ne.s32.totalorder %s121, %s124
      %p133 = scmp.eq.s32.totalorder %s38, 1
      %p134 = por %p132, %p133
      %p135 = scmp.ne.s32.totalorder %s124, %s125
      %p136 = scmp.eq.s32.totalorder %s38, 0
      %p137 = por %p135, %p136
      %p138 = scmp.ne.s32.totalorder %s124, %s125
      %p139 = scmp.eq.s32.totalorder %s39, 1
      %p140 = por %p138, %p139
      %p142 = scmp.ne.s32.totalorder %s125, %s141
      %p143 = scmp.eq.s32.totalorder %s39, 0
      %p144 = por %p142, %p143
      %s146 = sadd.s32 %s145, 1
      %p149 = scmp.eq.s32.totalorder %s33, 1
      %p150 = scmp.ne.s32.totalorder %s145, %s147
      %p151 = scmp.eq.s32.totalorder %s33, 0
      %p152 = por %p150, %p151
      %p153 = scmp.ne.s32.totalorder %s145, %s147
      %p154 = scmp.eq.s32.totalorder %s38, 1
      %p155 = por %p153, %p154
      %p156 = scmp.ne.s32.totalorder %s147, %s148
      %p157 = scmp.eq.s32.totalorder %s38, 0
      %p158 = por %p156, %p157
      %p159 = scmp.ne.s32.totalorder %s147, %s148
      %p160 = scmp.eq.s32.totalorder %s39, 1
      %p161 = por %p159, %p160
      %p163 = scmp.ne.s32.totalorder %s148, %s162
      %p164 = scmp.eq.s32.totalorder %s39, 0
      %p165 = por %p163, %p164
      %s167 = sadd.s32 %s166, 1
      %p170 = scmp.eq.s32.totalorder %s33, 1
      %p171 = scmp.ne.s32.totalorder %s166, %s168
      %p172 = scmp.eq.s32.totalorder %s33, 0
      %p173 = por %p171, %p172
      %p174 = scmp.ne.s32.totalorder %s166, %s168
      %p175 = scmp.eq.s32.totalorder %s38, 1
      %p176 = por %p174, %p175
      %p177 = scmp.ne.s32.totalorder %s168, %s169
      %p178 = scmp.eq.s32.totalorder %s38, 0
      %p179 = por %p177, %p178
      %p180 = scmp.ne.s32.totalorder %s168, %s169
      %p181 = scmp.eq.s32.totalorder %s39, 1
      %p182 = por %p180, %p181
      %p184 = scmp.ne.s32.totalorder %s169, %s183
      %p185 = scmp.eq.s32.totalorder %s39, 0
      %p186 = por %p184, %p185
      %s188 = sadd.s32 %s187, 1
      %p191 = scmp.eq.s32.totalorder %s33, 1
      %p192 = scmp.ne.s32.totalorder %s187, %s189
      %p193 = scmp.eq.s32.totalorder %s33, 0
      %p194 = por %p192, %p193
      %p195 = scmp.ne.s32.totalorder %s187, %s189
      %p196 = scmp.eq.s32.totalorder %s38, 1
      %p197 = por %p195, %p196
      %p198 = scmp.ne.s32.totalorder %s189, %s190
      %p199 = scmp.eq.s32.totalorder %s38, 0
      %p200 = por %p198, %p199
      %p201 = scmp.ne.s32.totalorder %s189, %s190
      %p202 = scmp.eq.s32.totalorder %s39, 1
      %p203 = por %p201, %p202
      %p205 = scmp.ne.s32.totalorder %s190, %s204
      %p206 = scmp.eq.s32.totalorder %s39, 0
      %p207 = por %p205, %p206
      %s209 = sadd.s32 %s208, 1
      %p212 = scmp.eq.s32.totalorder %s33, 1
      %p213 = scmp.ne.s32.totalorder %s208, %s210
      %p214 = scmp.eq.s32.totalorder %s33, 0
      %p215 = por %p213, %p214
      %p216 = scmp.ne.s32.totalorder %s208, %s210
      %p217 = scmp.eq.s32.totalorder %s38, 1
      %p218 = por %p216, %p217
      %p219 = scmp.ne.s32.totalorder %s210, %s211
      %p220 = scmp.eq.s32.totalorder %s38, 0
      %p221 = por %p219, %p220
      %p222 = scmp.ne.s32.totalorder %s210, %s211
      %p223 = scmp.eq.s32.totalorder %s39, 1
      %p224 = por %p222, %p223
      %p226 = scmp.ne.s32.totalorder %s211, %s225
      %p227 = scmp.eq.s32.totalorder %s39, 0
      %p228 = por %p226, %p227
      %s230 = sadd.s32 %s229, 1
      %p233 = scmp.eq.s32.totalorder %s33, 1
      %p234 = scmp.ne.s32.totalorder %s229, %s231
      %p235 = scmp.eq.s32.totalorder %s33, 0
      %p236 = por %p234, %p235
      %p237 = scmp.ne.s32.totalorder %s229, %s231
      %p238 = scmp.eq.s32.totalorder %s38, 1
      %p239 = por %p237, %p238
      %p240 = scmp.ne.s32.totalorder %s231, %s232
      %p241 = scmp.eq.s32.totalorder %s38, 0
      %p242 = por %p240, %p241
      %p243 = scmp.ne.s32.totalorder %s231, %s232
      %p244 = scmp.eq.s32.totalorder %s39, 1
      %p245 = por %p243, %p244
      %p247 = scmp.ne.s32.totalorder %s232, %s246
      %p248 = scmp.eq.s32.totalorder %s39, 0
      %p249 = por %p247, %p248
      %s251 = sadd.s32 %s250, 1
      %p254 = scmp.eq.s32.totalorder %s33, 1
      %p255 = scmp.ne.s32.totalorder %s250, %s252
      %p256 = scmp.eq.s32.totalorder %s33, 0
      %p257 = por %p255, %p256
      %p258 = scmp.ne.s32.totalorder %s250, %s252
      %p259 = scmp.eq.s32.totalorder %s38, 1
      %p260 = por %p258, %p259
      %p261 = scmp.ne.s32.totalorder %s252, %s253
      %p262 = scmp.eq.s32.totalorder %s38, 0
      %p263 = por %p261, %p262
      %p264 = scmp.ne.s32.totalorder %s252, %s253
      %p265 = scmp.eq.s32.totalorder %s39, 1
      %p266 = por %p264, %p265
      %p268 = scmp.ne.s32.totalorder %s253, %s267
      %p269 = scmp.eq.s32.totalorder %s39, 0
      %p270 = por %p268, %p269
      %s272 = sadd.s32 %s271, 1
      %p275 = scmp.eq.s32.totalorder %s33, 1
      %p276 = scmp.ne.s32.totalorder %s271, %s273
      %p277 = scmp.eq.s32.totalorder %s33, 0
      %p278 = por %p276, %p277
      %p279 = scmp.ne.s32.totalorder %s271, %s273
      %p280 = scmp.eq.s32.totalorder %s38, 1
      %p281 = por %p279, %p280
      %p282 = scmp.ne.s32.totalorder %s273, %s274
      %p283 = scmp.eq.s32.totalorder %s38, 0
      %p284 = por %p282, %p283
      %p285 = scmp.ne.s32.totalorder %s273, %s274
      %p286 = scmp.eq.s32.totalorder %s39, 1
      %p287 = por %p285, %p286
      %p289 = scmp.ne.s32.totalorder %s274, %s288
      %p290 = scmp.eq.s32.totalorder %s39, 0
      %p291 = por %p289, %p290
      %s293 = sadd.s32 %s292, 1
      %p296 = scmp.eq.s32.totalorder %s33, 1
      %p297 = scmp.ne.s32.totalorder %s292, %s294
      %p298 = scmp.eq.s32.totalorder %s33, 0
      %p299 = por %p297, %p298
      %p300 = scmp.ne.s32.totalorder %s292, %s294
      %p301 = scmp.eq.s32.totalorder %s38, 1
      %p302 = por %p300, %p301
      %p303 = scmp.ne.s32.totalorder %s294, %s295
      %p304 = scmp.eq.s32.totalorder %s38, 0
      %p305 = por %p303, %p304
      %p306 = scmp.ne.s32.totalorder %s294, %s295
      %p307 = scmp.eq.s32.totalorder %s39, 1
      %p308 = por %p306, %p307
      %p310 = scmp.ne.s32.totalorder %s295, %s309
      %p311 = scmp.eq.s32.totalorder %s39, 0
      %p312 = por %p310, %p311
      %s314 = sadd.s32 %s313, 1
      %p317 = scmp.eq.s32.totalorder %s33, 1
      %p318 = scmp.ne.s32.totalorder %s313, %s315
      %p319 = scmp.eq.s32.totalorder %s33, 0
      %p320 = por %p318, %p319
      %p321 = scmp.ne.s32.totalorder %s313, %s315
      %p322 = scmp.eq.s32.totalorder %s38, 1
      %p323 = por %p321, %p322
      %p324 = scmp.ne.s32.totalorder %s315, %s316
      %p325 = scmp.eq.s32.totalorder %s38, 0
      %p326 = por %p324, %p325
      %p327 = scmp.ne.s32.totalorder %s315, %s316
      %p328 = scmp.eq.s32.totalorder %s39, 1
      %p329 = por %p327, %p328
      %p331 = scmp.ne.s32.totalorder %s316, %s330
      %p332 = scmp.eq.s32.totalorder %s39, 0
      %p333 = por %p331, %p332
      %s335 = sadd.s32 %s334, 1
      %p338 = scmp.eq.s32.totalorder %s33, 1
      %p339 = scmp.ne.s32.totalorder %s334, %s336
      %p340 = scmp.eq.s32.totalorder %s33, 0
      %p341 = por %p339, %p340
      %p342 = scmp.ne.s32.totalorder %s334, %s336
      %p343 = scmp.eq.s32.totalorder %s38, 1
      %p344 = por %p342, %p343
      %p345 = scmp.ne.s32.totalorder %s336, %s337
      %p346 = scmp.eq.s32.totalorder %s38, 0
      %p347 = por %p345, %p346
      %p348 = scmp.ne.s32.totalorder %s336, %s337
      %p349 = scmp.eq.s32.totalorder %s39, 1
      %p350 = por %p348, %p349
      %p352 = scmp.ne.s32.totalorder %s337, %s351
      %p353 = scmp.eq.s32.totalorder %s39, 0
      %p354 = por %p352, %p353
      %s356 = sadd.s32 %s355, 1
      %p359 = scmp.eq.s32.totalorder %s33, 1
      %p360 = scmp.ne.s32.totalorder %s355, %s357
      %p361 = scmp.eq.s32.totalorder %s33, 0
      %p362 = por %p360, %p361
      %p363 = scmp.ne.s32.totalorder %s355, %s357
      %p364 = scmp.eq.s32.totalorder %s38, 1
      %p365 = por %p363, %p364
      %p366 = scmp.ne.s32.totalorder %s357, %s358
      %p367 = scmp.eq.s32.totalorder %s38, 0
      %p368 = por %p366, %p367
      %p369 = scmp.ne.s32.totalorder %s357, %s358
      %p370 = scmp.eq.s32.totalorder %s39, 1
      %p371 = por %p369, %p370
      %p373 = scmp.ne.s32.totalorder %s358, %s372
      %p374 = scmp.eq.s32.totalorder %s39, 0
      %p375 = por %p373, %p374
      %s377 = sadd.s32 %s376, 1
      %p380 = scmp.eq.s32.totalorder %s33, 1
      %p381 = scmp.ne.s32.totalorder %s376, %s378
      %p382 = scmp.eq.s32.totalorder %s33, 0
      %p383 = por %p381, %p382
      %p384 = scmp.ne.s32.totalorder %s376, %s378
      %p385 = scmp.eq.s32.totalorder %s38, 1
      %p386 = por %p384, %p385
      %p387 = scmp.ne.s32.totalorder %s378, %s379
      %p388 = scmp.eq.s32.totalorder %s38, 0
      %p389 = por %p387, %p388
      %p390 = scmp.ne.s32.totalorder %s378, %s379
      %p391 = scmp.eq.s32.totalorder %s39, 1
      %p392 = por %p390, %p391
      %p394 = scmp.ne.s32.totalorder %s379, %s393
      %p395 = scmp.eq.s32.totalorder %s39, 0
      %p396 = por %p394, %p395
      %s398 = sadd.s32 %s397, 1
      %p401 = scmp.eq.s32.totalorder %s33, 1
      %p402 = scmp.ne.s32.totalorder %s397, %s399
      %p403 = scmp.eq.s32.totalorder %s33, 0
      %p404 = por %p402, %p403
      %p405 = scmp.ne.s32.totalorder %s397, %s399
      %p406 = scmp.eq.s32.totalorder %s38, 1
      %p407 = por %p405, %p406
      %p408 = scmp.ne.s32.totalorder %s399, %s400
      %p409 = scmp.eq.s32.totalorder %s38, 0
      %p410 = por %p408, %p409
      %p411 = scmp.ne.s32.totalorder %s399, %s400
      %p412 = scmp.eq.s32.totalorder %s39, 1
      %p413 = por %p411, %p412
      %p415 = scmp.ne.s32.totalorder %s400, %s414
      %p416 = scmp.eq.s32.totalorder %s39, 0
      %p417 = por %p415, %p416
      %s419 = sadd.s32 %s418, 1
      %p422 = scmp.eq.s32.totalorder %s33, 1
      %p423 = scmp.ne.s32.totalorder %s418, %s420
      %p424 = scmp.eq.s32.totalorder %s33, 0
      %p425 = por %p423, %p424
      %p426 = scmp.ne.s32.totalorder %s418, %s420
      %p427 = scmp.eq.s32.totalorder %s38, 1
      %p428 = por %p426, %p427
      %p429 = scmp.ne.s32.totalorder %s420, %s421
      %p430 = scmp.eq.s32.totalorder %s38, 0
      %p431 = por %p429, %p430
      %p432 = scmp.ne.s32.totalorder %s420, %s421
      %p433 = scmp.eq.s32.totalorder %s39, 1
      %p434 = por %p432, %p433
      %p436 = scmp.ne.s32.totalorder %s421, %s435
      %p437 = scmp.eq.s32.totalorder %s39, 0
      %p438 = por %p436, %p437
      %s440 = sadd.s32 %s439, 1
      %p443 = scmp.eq.s32.totalorder %s33, 1
      %p444 = scmp.ne.s32.totalorder %s439, %s441
      %p445 = scmp.eq.s32.totalorder %s33, 0
      %p446 = por %p444, %p445
      %p447 = scmp.ne.s32.totalorder %s439, %s441
      %p448 = scmp.eq.s32.totalorder %s38, 1
      %p449 = por %p447, %p448
      %p450 = scmp.ne.s32.totalorder %s441, %s442
      %p451 = scmp.eq.s32.totalorder %s38, 0
      %p452 = por %p450, %p451
      %p453 = scmp.ne.s32.totalorder %s441, %s442
      %p454 = scmp.eq.s32.totalorder %s39, 1
      %p455 = por %p453, %p454
      %p457 = scmp.ne.s32.totalorder %s442, %s456
      %p458 = scmp.eq.s32.totalorder %s39, 0
      %p459 = por %p457, %p458
      %s461 = sadd.s32 %s460, 1
      %p464 = scmp.eq.s32.totalorder %s33, 1
      %p465 = scmp.ne.s32.totalorder %s460, %s462
      %p466 = scmp.eq.s32.totalorder %s33, 0
      %p467 = por %p465, %p466
      %p468 = scmp.ne.s32.totalorder %s460, %s462
      %p469 = scmp.eq.s32.totalorder %s38, 1
      %p470 = por %p468, %p469
      %p471 = scmp.ne.s32.totalorder %s462, %s463
      %p472 = scmp.eq.s32.totalorder %s38, 0
      %p473 = por %p471, %p472
      %p474 = scmp.ne.s32.totalorder %s462, %s463
      %p475 = scmp.eq.s32.totalorder %s39, 1
      %p476 = por %p474, %p475
      %p478 = scmp.ne.s32.totalorder %s463, %s477
      %p479 = scmp.eq.s32.totalorder %s39, 0
      %p480 = por %p478, %p479
      %p481 = scmp.le.s32.totalorder 1, %s33
      %p482 = scmp.lt.s32.totalorder %s33, 3
      %p483 = pnand %p481, %p482
      %p484 = pneg %p483
      // Predicated region
      $region9: #{lenet300_100_bbb_forward.1} parent=5 // pred_check
        _
      $region10: #{lenet300_100_bbb_forward.1} parent=5 // pred_check_branch
        %486 = sbr.rel (%p483) target = $region12
      $region11: #{lenet300_100_bbb_forward.1} parent=5 // pred_region
        %s487 = ssub.s32 %s33, 1
        // Predicated region
        $region13: #{lenet300_100_bbb_forward.1} parent=11 // pred_check
          %p488 = pneg %p158
        $region14: #{lenet300_100_bbb_forward.1} parent=11 // pred_check_branch
          %490 = sbr.rel (%p488) target = $region16
        $region15: #{lenet300_100_bbb_forward.1} parent=11 // pred_region
          _
        $region16: #{lenet300_100_bbb_forward.1} parent=11 // pred_fallthru
          _
        // Predicated region
        $region17: #{lenet300_100_bbb_forward.1} parent=11 // pred_check
          %p491 = pneg %p179
        $region18: #{lenet300_100_bbb_forward.1} parent=11 // pred_check_branch
          %493 = sbr.rel (%p491) target = $region20
        $region19: #{lenet300_100_bbb_forward.1} parent=11 // pred_region
          _
        $region20: #{lenet300_100_bbb_forward.1} parent=11 // pred_fallthru
          _
        // Predicated region
        $region21: #{lenet300_100_bbb_forward.1} parent=11 // pred_check
          %p494 = pneg %p200
        $region22: #{lenet300_100_bbb_forward.1} parent=11 // pred_check_branch
          %496 = sbr.rel (%p494) target = $region24
        $region23: #{lenet300_100_bbb_forward.1} parent=11 // pred_region
          _
        $region24: #{lenet300_100_bbb_forward.1} parent=11 // pred_fallthru
          _
        // Predicated region
        $region25: #{lenet300_100_bbb_forward.1} parent=11 // pred_check
          %p497 = pneg %p221
        $region26: #{lenet300_100_bbb_forward.1} parent=11 // pred_check_branch
          %499 = sbr.rel (%p497) target = $region28
        $region27: #{lenet300_100_bbb_forward.1} parent=11 // pred_region
          _
        $region28: #{lenet300_100_bbb_forward.1} parent=11 // pred_fallthru
          _
        // Predicated region
        $region29: #{lenet300_100_bbb_forward.1} parent=11 // pred_check
          %p500 = pneg %p242
        $region30: #{lenet300_100_bbb_forward.1} parent=11 // pred_check_branch
          %502 = sbr.rel (%p500) target = $region32
        $region31: #{lenet300_100_bbb_forward.1} parent=11 // pred_region
          %s504 = ssub.s32 3072, 3072
          %505 = vsyncadd [#allocation9], %s504
          %s506 = sshll.u32 [#allocation8], 4
          %s507 = int_to_ptr.vmem [resolvable:$true] %s506
          %512 = dma.hbm_to_vmem [thread:$0]  %s8, 3072, %s507, [#allocation9], 64, 64, 4
        $region32: #{lenet300_100_bbb_forward.1} parent=11 // pred_fallthru
          _
        // Predicated region
        $region33: #{lenet300_100_bbb_forward.1} parent=11 // pred_check
          %p513 = pneg %p263
        $region34: #{lenet300_100_bbb_forward.1} parent=11 // pred_check_branch
          %515 = sbr.rel (%p513) target = $region36
        $region35: #{lenet300_100_bbb_forward.1} parent=11 // pred_region
          %s517 = ssub.s32 3072, 3072
          %518 = vsyncadd [#allocation9], %s517
          %s519 = sshll.u32 [#allocation10], 4
          %s520 = int_to_ptr.vmem [resolvable:$true] %s519
          %525 = dma.hbm_to_vmem [thread:$0]  %s9, 3072, %s520, [#allocation9], 64, 64, 4
        $region36: #{lenet300_100_bbb_forward.1} parent=11 // pred_fallthru
          _
        // Predicated region
        $region37: #{lenet300_100_bbb_forward.1} parent=11 // pred_check
          %p526 = pneg %p284
        $region38: #{lenet300_100_bbb_forward.1} parent=11 // pred_check_branch
          %528 = sbr.rel (%p526) target = $region40
        $region39: #{lenet300_100_bbb_forward.1} parent=11 // pred_region
          _
        $region40: #{lenet300_100_bbb_forward.1} parent=11 // pred_fallthru
          _
        // Predicated region
        $region41: #{lenet300_100_bbb_forward.1} parent=11 // pred_check
          %p529 = pneg %p305
        $region42: #{lenet300_100_bbb_forward.1} parent=11 // pred_check_branch
          %531 = sbr.rel (%p529) target = $region44
        $region43: #{lenet300_100_bbb_forward.1} parent=11 // pred_region
          _
        $region44: #{lenet300_100_bbb_forward.1} parent=11 // pred_fallthru
          _
        // Predicated region
        $region45: #{lenet300_100_bbb_forward.1} parent=11 // pred_check
          %p532 = pneg %p326
        $region46: #{lenet300_100_bbb_forward.1} parent=11 // pred_check_branch
          %534 = sbr.rel (%p532) target = $region48
        $region47: #{lenet300_100_bbb_forward.1} parent=11 // pred_region
          _
        $region48: #{lenet300_100_bbb_forward.1} parent=11 // pred_fallthru
          _
        // Predicated region
        $region49: #{lenet300_100_bbb_forward.1} parent=11 // pred_check
          %p535 = pneg %p347
        $region50: #{lenet300_100_bbb_forward.1} parent=11 // pred_check_branch
          %537 = sbr.rel (%p535) target = $region52
        $region51: #{lenet300_100_bbb_forward.1} parent=11 // pred_region
          _
        $region52: #{lenet300_100_bbb_forward.1} parent=11 // pred_fallthru
          _
        // Predicated region
        $region53: #{lenet300_100_bbb_forward.1} parent=11 // pred_check
          %p538 = pneg %p368
        $region54: #{lenet300_100_bbb_forward.1} parent=11 // pred_check_branch
          %540 = sbr.rel (%p538) target = $region56
        $region55: #{lenet300_100_bbb_forward.1} parent=11 // pred_region
          %s542 = ssub.s32 1024, 1024
          %543 = vsyncadd [#allocation12], %s542
          %s544 = sshll.u32 [#allocation11], 4
          %s545 = int_to_ptr.vmem [resolvable:$true] %s544
          %550 = dma.hbm_to_vmem [thread:$0]  %s14, 1024, %s545, [#allocation12], 64, 64, 4
        $region56: #{lenet300_100_bbb_forward.1} parent=11 // pred_fallthru
          _
        // Predicated region
        $region57: #{lenet300_100_bbb_forward.1} parent=11 // pred_check
          %p551 = pneg %p389
        $region58: #{lenet300_100_bbb_forward.1} parent=11 // pred_check_branch
          %553 = sbr.rel (%p551) target = $region60
        $region59: #{lenet300_100_bbb_forward.1} parent=11 // pred_region
          %s555 = ssub.s32 1024, 1024
          %556 = vsyncadd [#allocation12], %s555
          %s557 = sshll.u32 [#allocation13], 4
          %s558 = int_to_ptr.vmem [resolvable:$true] %s557
          %563 = dma.hbm_to_vmem [thread:$0]  %s15, 1024, %s558, [#allocation12], 64, 64, 4
        $region60: #{lenet300_100_bbb_forward.1} parent=11 // pred_fallthru
          _
        // Predicated region
        $region61: #{lenet300_100_bbb_forward.1} parent=11 // pred_check
          %p564 = pneg %p410
        $region62: #{lenet300_100_bbb_forward.1} parent=11 // pred_check_branch
          %566 = sbr.rel (%p564) target = $region64
        $region63: #{lenet300_100_bbb_forward.1} parent=11 // pred_region
          _
        $region64: #{lenet300_100_bbb_forward.1} parent=11 // pred_fallthru
          _
        // Predicated region
        $region65: #{lenet300_100_bbb_forward.1} parent=11 // pred_check
          %p567 = pneg %p431
        $region66: #{lenet300_100_bbb_forward.1} parent=11 // pred_check_branch
          %569 = sbr.rel (%p567) target = $region68
        $region67: #{lenet300_100_bbb_forward.1} parent=11 // pred_region
          _
        $region68: #{lenet300_100_bbb_forward.1} parent=11 // pred_fallthru
          _
        // Predicated region
        $region69: #{lenet300_100_bbb_forward.1} parent=11 // pred_check
          %p570 = pneg %p452
        $region70: #{lenet300_100_bbb_forward.1} parent=11 // pred_check_branch
          %572 = sbr.rel (%p570) target = $region72
        $region71: #{lenet300_100_bbb_forward.1} parent=11 // pred_region
          _
        $region72: #{lenet300_100_bbb_forward.1} parent=11 // pred_fallthru
          _
      $region12: #{lenet300_100_bbb_forward.1} parent=5 // pred_fallthru
        _
      %p573 = scmp.lt.s32.totalorder %s33, 2
      // Predicated region
      $region73: #{lenet300_100_bbb_forward.1} parent=5 // pred_check
        %p574 = pneg %p573
      $region74: #{lenet300_100_bbb_forward.1} parent=5 // pred_check_branch
        %576 = sbr.rel (%p574) target = $region76
      $region75: #{lenet300_100_bbb_forward.1} parent=5 // pred_region
        // Predicated region
        $region77: #{lenet300_100_bbb_forward.1} parent=75 // pred_check
          %p577 = pneg %p53
        $region78: #{lenet300_100_bbb_forward.1} parent=75 // pred_check_branch
          %579 = sbr.rel (%p577) target = $region80
        $region79: #{lenet300_100_bbb_forward.1} parent=75 // pred_region
          %s580 = smul.u32 4, %s33
          %p581 = scmp.lt.s32.totalorder %s580, 7
          %s582 = scalar_select %p581, %s580, 7
          %s583 = smul.addr %s582, 8
          %s584 = scalar_lea.vmem %s0, %s583
          %s585 = smul.u32 4, %s33
        $region80: #{lenet300_100_bbb_forward.1} parent=75 // pred_fallthru
          _
        // Predicated region
        $region81: #{lenet300_100_bbb_forward.1} parent=75 // pred_check
          %p586 = pneg %p79
        $region82: #{lenet300_100_bbb_forward.1} parent=75 // pred_check_branch
          %588 = sbr.rel (%p586) target = $region84
        $region83: #{lenet300_100_bbb_forward.1} parent=75 // pred_region
          %s589 = sand.u32 %s69, 1
          %s590 = scalar_lea.sflag [#allocation4], %s589
          %s591 = sand.u32 %s69, 1
          %s592 = smul.addr %s591, 768
          %s593 = scalar_lea.vmem [#allocation3], %s592
          %s594 = smul.u32 64, %s33
          %s596 = ssub.s32 12288, 12288
          %597 = vsyncadd %s590, %s596
          %s598 = smul.addr %s594, 3
          %s599 = smul.addr %s598, 64
          %s600 = scalar_lea.hbm %s1, %s599
          %s601 = sshll.u32 %s593, 4
          %s602 = int_to_ptr.vmem [resolvable:$true] %s601
          %607 = dma.hbm_to_vmem [thread:$0]  %s600, 12288, %s602, %s590, 192, 192, 12
        $region84: #{lenet300_100_bbb_forward.1} parent=75 // pred_fallthru
          _
        // Predicated region
        $region85: #{lenet300_100_bbb_forward.1} parent=75 // pred_check
          %p608 = pneg %p105
        $region86: #{lenet300_100_bbb_forward.1} parent=75 // pred_check_branch
          %610 = sbr.rel (%p608) target = $region88
        $region87: #{lenet300_100_bbb_forward.1} parent=75 // pred_region
          %s611 = sand.u32 %s33, 1
          %s612 = scalar_lea.sflag [#allocation6], %s611
          %s613 = sand.u32 %s95, 1
          %s614 = smul.addr %s613, 768
          %s615 = scalar_lea.vmem [#allocation5], %s614
          %s616 = smul.u32 64, %s33
          %s618 = ssub.s32 12288, 12288
          %619 = vsyncadd %s612, %s618
          %s620 = smul.addr %s616, 3
          %s621 = smul.addr %s620, 64
          %s622 = scalar_lea.hbm %s2, %s621
          %s623 = sshll.u32 %s615, 4
          %s624 = int_to_ptr.vmem [resolvable:$true] %s623
          %629 = dma.hbm_to_vmem [thread:$0]  %s622, 12288, %s624, %s612, 192, 192, 12
        $region88: #{lenet300_100_bbb_forward.1} parent=75 // pred_fallthru
          _
        // Predicated region
        $region89: #{lenet300_100_bbb_forward.1} parent=75 // pred_check
          %p630 = pneg %p131
        $region90: #{lenet300_100_bbb_forward.1} parent=75 // pred_check_branch
          %632 = sbr.rel (%p630) target = $region92
        $region91: #{lenet300_100_bbb_forward.1} parent=75 // pred_region
          %s633 = sand.u32 %s33, 1
          %s634 = scalar_lea.sflag [#allocation6], %s633
          %s635 = sand.u32 %s121, 1
          %s636 = smul.addr %s635, 768
          %s637 = scalar_lea.vmem [#allocation7], %s636
          %s638 = smul.u32 64, %s33
          %s640 = ssub.s32 12288, 12288
          %641 = vsyncadd %s634, %s640
          %s642 = smul.addr %s638, 3
          %s643 = smul.addr %s642, 64
          %s644 = scalar_lea.hbm %s3, %s643
          %s645 = sshll.u32 %s637, 4
          %s646 = int_to_ptr.vmem [resolvable:$true] %s645
          %651 = dma.hbm_to_vmem [thread:$0]  %s644, 12288, %s646, %s634, 192, 192, 12
        $region92: #{lenet300_100_bbb_forward.1} parent=75 // pred_fallthru
          _
      $region76: #{lenet300_100_bbb_forward.1} parent=5 // pred_fallthru
        _
      %p652 = scmp.le.s32.totalorder 1, %s33
      %p653 = scmp.lt.s32.totalorder %s33, 3
      %p654 = pnand %p652, %p653
      %p655 = pneg %p654
      // Predicated region
      $region93: #{lenet300_100_bbb_forward.1} parent=5 // pred_check
        _
      $region94: #{lenet300_100_bbb_forward.1} parent=5 // pred_check_branch
        %657 = sbr.rel (%p654) target = $region96
      $region95: #{lenet300_100_bbb_forward.1} parent=5 // pred_region
        %s658 = ssub.s32 %s33, 1
        %s659 = sand.u32 %s72, 1
        %s660 = scalar_lea.sflag [#allocation4], %s659
        %s661 = sand.u32 %s72, 1
        %s662 = smul.addr %s661, 768
        %s663 = scalar_lea.vmem [#allocation3], %s662
        // Predicated region
        $region97: #{lenet300_100_bbb_forward.1} parent=95 // pred_check
          %p664 = pneg %p85
        $region98: #{lenet300_100_bbb_forward.1} parent=95 // pred_check_branch
          %666 = sbr.rel (%p664) target = $region100
        $region99: #{lenet300_100_bbb_forward.1} parent=95 // pred_region
          %667 = dma.done %s660, 12288
        $region100: #{lenet300_100_bbb_forward.1} parent=95 // pred_fallthru
          _
        %s668 = sand.u32 %s38, 1
        %s669 = scalar_lea.sflag [#allocation6], %s668
        %s670 = sand.u32 %s98, 1
        %s671 = smul.addr %s670, 768
        %s672 = scalar_lea.vmem [#allocation5], %s671
        // Predicated region
        $region101: #{lenet300_100_bbb_forward.1} parent=95 // pred_check
          %p673 = pneg %p111
        $region102: #{lenet300_100_bbb_forward.1} parent=95 // pred_check_branch
          %675 = sbr.rel (%p673) target = $region104
        $region103: #{lenet300_100_bbb_forward.1} parent=95 // pred_region
          %676 = dma.done %s669, 12288
        $region104: #{lenet300_100_bbb_forward.1} parent=95 // pred_fallthru
          _
        %s677 = sand.u32 %s38, 1
        %s678 = scalar_lea.sflag [#allocation6], %s677
        %s679 = sand.u32 %s124, 1
        %s680 = smul.addr %s679, 768
        %s681 = scalar_lea.vmem [#allocation7], %s680
        // Predicated region
        $region105: #{lenet300_100_bbb_forward.1} parent=95 // pred_check
          %p682 = pneg %p137
        $region106: #{lenet300_100_bbb_forward.1} parent=95 // pred_check_branch
          %684 = sbr.rel (%p682) target = $region108
        $region107: #{lenet300_100_bbb_forward.1} parent=95 // pred_region
          %685 = dma.done %s678, 12288
        $region108: #{lenet300_100_bbb_forward.1} parent=95 // pred_fallthru
          _
        // Predicated region
        $region109: #{lenet300_100_bbb_forward.1} parent=95 // pred_check
          %p686 = pneg %p242
        $region110: #{lenet300_100_bbb_forward.1} parent=95 // pred_check_branch
          %688 = sbr.rel (%p686) target = $region112
        $region111: #{lenet300_100_bbb_forward.1} parent=95 // pred_region
          %689 = dma.done [#allocation9], 3072
        $region112: #{lenet300_100_bbb_forward.1} parent=95 // pred_fallthru
          _
        // Predicated region
        $region113: #{lenet300_100_bbb_forward.1} parent=95 // pred_check
          %p690 = pneg %p263
        $region114: #{lenet300_100_bbb_forward.1} parent=95 // pred_check_branch
          %692 = sbr.rel (%p690) target = $region116
        $region115: #{lenet300_100_bbb_forward.1} parent=95 // pred_region
          %693 = dma.done [#allocation9], 3072
        $region116: #{lenet300_100_bbb_forward.1} parent=95 // pred_fallthru
          _
        // Predicated region
        $region117: #{lenet300_100_bbb_forward.1} parent=95 // pred_check
          %p694 = pneg %p368
        $region118: #{lenet300_100_bbb_forward.1} parent=95 // pred_check_branch
          %696 = sbr.rel (%p694) target = $region120
        $region119: #{lenet300_100_bbb_forward.1} parent=95 // pred_region
          %697 = dma.done [#allocation12], 1024
        $region120: #{lenet300_100_bbb_forward.1} parent=95 // pred_fallthru
          _
        // Predicated region
        $region121: #{lenet300_100_bbb_forward.1} parent=95 // pred_check
          %p698 = pneg %p389
        $region122: #{lenet300_100_bbb_forward.1} parent=95 // pred_check_branch
          %700 = sbr.rel (%p698) target = $region124
        $region123: #{lenet300_100_bbb_forward.1} parent=95 // pred_region
          %701 = dma.done [#allocation12], 1024
        $region124: #{lenet300_100_bbb_forward.1} parent=95 // pred_fallthru
          _
        %s702 = smul.u32 4, %s38
        %p703 = scmp.lt.s32.totalorder %s702, 7
        %s704 = scalar_select %p703, %s702, 7
        %s705 = smul.addr %s704, 8
        %s706 = scalar_lea.vmem %s0, %s705
        %p707 = pneg %p59
        %p708 = pneg %p56
        %s709 = sand.u32 %s72, 1
        %s710 = scalar_lea.sflag [#allocation4], %s709
        %s711 = sand.u32 %s72, 1
        %s712 = smul.addr %s711, 768
        %s713 = scalar_lea.vmem [#allocation3], %s712
        %p714 = pneg %p85
        %p715 = pneg %p82
        %s716 = sand.u32 %s38, 1
        %s717 = scalar_lea.sflag [#allocation6], %s716
        %s718 = sand.u32 %s98, 1
        %s719 = smul.addr %s718, 768
        %s720 = scalar_lea.vmem [#allocation5], %s719
        %p721 = pneg %p111
        %p722 = pneg %p108
        %s723 = sand.u32 %s38, 1
        %s724 = scalar_lea.sflag [#allocation6], %s723
        %s725 = sand.u32 %s124, 1
        %s726 = smul.addr %s725, 768
        %s727 = scalar_lea.vmem [#allocation7], %s726
        %p728 = pneg %p137
        %p729 = pneg %p134
        %p730 = pneg %p158
        %p731 = pneg %p155
        %p732 = pneg %p179
        %p733 = pneg %p176
        %p734 = pneg %p200
        %p735 = pneg %p197
        %p736 = pneg %p221
        %p737 = pneg %p218
        %p738 = pneg %p242
        %p739 = pneg %p239
        %p740 = pneg %p263
        %p741 = pneg %p260
        %p742 = pneg %p284
        %p743 = pneg %p281
        %p744 = pneg %p305
        %p745 = pneg %p302
        %p746 = pneg %p326
        %p747 = pneg %p323
        %p748 = pneg %p347
        %p749 = pneg %p344
        %p750 = pneg %p368
        %p751 = pneg %p365
        %p752 = pneg %p389
        %p753 = pneg %p386
        %p754 = pneg %p410
        %p755 = pneg %p407
        %p756 = pneg %p431
        %p757 = pneg %p428
        %p758 = pneg %p452
        %p759 = pneg %p449
        %p760 = pneg %p473
        %p761 = pneg %p470
        %s762 = smul.u32 4, %s38
        %p763 = scmp.lt.s32.totalorder %s762, 7
        %s764 = scalar_select %p763, %s762, 7
        %s765 = smul.addr %s764, 8
        %s766 = scalar_lea.vmem %s0, %s765
        %s767 = smul.u32 4, %s38
        %s768 = smul.u32 64, %s38
        %s769 = smul.u32 64, %s38
        %s770 = smul.u32 64, %s38
        %p771 = scmp.eq.s32.totalorder %s38, 0
        // Predicated region
        $region125: #{lenet300_100_bbb_forward.1} parent=95 // pred_check
          %p772 = pneg %p771
        $region126: #{lenet300_100_bbb_forward.1} parent=95 // pred_check_branch
          %774 = sbr.rel (%p772) target = $region128
        $region127: #{lenet300_100_bbb_forward.1} parent=95 // pred_region
          %775 = vst [vmem:[#allocation2] sm:$0xff] 0.0
          %776 = vst [vmem:[#allocation2 + $0x8] sm:$0xff] 0.0
          %777 = vst [vmem:[#allocation2 + $0x10] sm:$0xff] 0.0
        $region128: #{lenet300_100_bbb_forward.1} parent=95 // pred_fallthru
          _
        %v778 = vld [vmem:[%s663] sm:$0xff]
        %v779 = vld [vmem:[%s663 + $0x8] sm:$0xf]
        %v780 = vld [vmem:[%s663 + $0xc] sm:$0xff]
        %v781 = vld [vmem:[%s663 + $0x14] sm:$0xf]
        %v782 = vld [vmem:[%s663 + $0x18] sm:$0xff]
        %v783 = vld [vmem:[%s663 + $0x20] sm:$0xf]
        %v784 = vld [vmem:[%s663 + $0x24] sm:$0xff]
        %v785 = vld [vmem:[%s663 + $0x2c] sm:$0xf]
        %v786 = vld [vmem:[%s663 + $0x30] sm:$0xff]
        %v787 = vld [vmem:[%s663 + $0x38] sm:$0xf]
        %v788 = vld [vmem:[%s663 + $0x3c] sm:$0xff]
        %v789 = vld [vmem:[%s663 + $0x44] sm:$0xf]
        %v790 = vld [vmem:[%s663 + $0x48] sm:$0xff]
        %v791 = vld [vmem:[%s663 + $0x50] sm:$0xf]
        %v792 = vld [vmem:[%s663 + $0x54] sm:$0xff]
        %v793 = vld [vmem:[%s663 + $0x5c] sm:$0xf]
        %v794 = vld [vmem:[%s663 + $0x60] sm:$0xff]
        %v795 = vld [vmem:[%s663 + $0x68] sm:$0xf]
        %v796 = vld [vmem:[%s663 + $0x6c] sm:$0xff]
        %v797 = vld [vmem:[%s663 + $0x74] sm:$0xf]
        %v798 = vld [vmem:[%s663 + $0x78] sm:$0xff]
        %v799 = vld [vmem:[%s663 + $0x80] sm:$0xf]
        %v800 = vld [vmem:[%s663 + $0x84] sm:$0xff]
        %v801 = vld [vmem:[%s663 + $0x8c] sm:$0xf]
        %v802 = vld [vmem:[%s663 + $0x90] sm:$0xff]
        %v803 = vld [vmem:[%s663 + $0x98] sm:$0xf]
        %v804 = vld [vmem:[%s663 + $0x9c] sm:$0xff]
        %v805 = vld [vmem:[%s663 + $0xa4] sm:$0xf]
        %v806 = vld [vmem:[%s663 + $0xa8] sm:$0xff]
        %v807 = vld [vmem:[%s663 + $0xb0] sm:$0xf]
        %v808 = vld [vmem:[%s663 + $0xb4] sm:$0xff]
        %v809 = vld [vmem:[%s663 + $0xbc] sm:$0xf]
        %v810 = vld [vmem:[%s663 + $0xc0] sm:$0xff]
        %v811 = vld [vmem:[%s663 + $0xc8] sm:$0xf]
        %v812 = vld [vmem:[%s663 + $0xcc] sm:$0xff]
        %v813 = vld [vmem:[%s663 + $0xd4] sm:$0xf]
        %v814 = vld [vmem:[%s663 + $0xd8] sm:$0xff]
        %v815 = vld [vmem:[%s663 + $0xe0] sm:$0xf]
        %v816 = vld [vmem:[%s663 + $0xe4] sm:$0xff]
        %v817 = vld [vmem:[%s663 + $0xec] sm:$0xf]
        %v818 = vld [vmem:[%s663 + $0xf0] sm:$0xff]
        %v819 = vld [vmem:[%s663 + $0xf8] sm:$0xf]
        %v820 = vld [vmem:[%s663 + $0xfc] sm:$0xff]
        %v821 = vld [vmem:[%s663 + $0x104] sm:$0xf]
        %v822 = vld [vmem:[%s663 + $0x108] sm:$0xff]
        %v823 = vld [vmem:[%s663 + $0x110] sm:$0xf]
        %v824 = vld [vmem:[%s663 + $0x114] sm:$0xff]
        %v825 = vld [vmem:[%s663 + $0x11c] sm:$0xf]
        %v826 = vld [vmem:[%s663 + $0x120] sm:$0xff]
        %v827 = vld [vmem:[%s663 + $0x128] sm:$0xf]
        %v828 = vld [vmem:[%s663 + $0x12c] sm:$0xff]
        %v829 = vld [vmem:[%s663 + $0x134] sm:$0xf]
        %v830 = vld [vmem:[%s663 + $0x138] sm:$0xff]
        %v831 = vld [vmem:[%s663 + $0x140] sm:$0xf]
        %v832 = vld [vmem:[%s663 + $0x144] sm:$0xff]
        %v833 = vld [vmem:[%s663 + $0x14c] sm:$0xf]
        %v834 = vld [vmem:[%s663 + $0x150] sm:$0xff]
        %v835 = vld [vmem:[%s663 + $0x158] sm:$0xf]
        %v836 = vld [vmem:[%s663 + $0x15c] sm:$0xff]
        %v837 = vld [vmem:[%s663 + $0x164] sm:$0xf]
        %v838 = vld [vmem:[%s663 + $0x168] sm:$0xff]
        %v839 = vld [vmem:[%s663 + $0x170] sm:$0xf]
        %v840 = vld [vmem:[%s663 + $0x174] sm:$0xff]
        %v841 = vld [vmem:[%s663 + $0x17c] sm:$0xf]
        %v842 = vld [vmem:[%s663 + $0x180] sm:$0xff]
        %v843 = vld [vmem:[%s663 + $0x188] sm:$0xf]
        %v844 = vld [vmem:[%s663 + $0x18c] sm:$0xff]
        %v845 = vld [vmem:[%s663 + $0x194] sm:$0xf]
        %v846 = vld [vmem:[%s663 + $0x198] sm:$0xff]
        %v847 = vld [vmem:[%s663 + $0x1a0] sm:$0xf]
        %v848 = vld [vmem:[%s663 + $0x1a4] sm:$0xff]
        %v849 = vld [vmem:[%s663 + $0x1ac] sm:$0xf]
        %v850 = vld [vmem:[%s663 + $0x1b0] sm:$0xff]
        %v851 = vld [vmem:[%s663 + $0x1b8] sm:$0xf]
        %v852 = vld [vmem:[%s663 + $0x1bc] sm:$0xff]
        %v853 = vld [vmem:[%s663 + $0x1c4] sm:$0xf]
        %v854 = vld [vmem:[%s663 + $0x1c8] sm:$0xff]
        %v855 = vld [vmem:[%s663 + $0x1d0] sm:$0xf]
        %v856 = vld [vmem:[%s663 + $0x1d4] sm:$0xff]
        %v857 = vld [vmem:[%s663 + $0x1dc] sm:$0xf]
        %v858 = vld [vmem:[%s663 + $0x1e0] sm:$0xff]
        %v859 = vld [vmem:[%s663 + $0x1e8] sm:$0xf]
        %v860 = vld [vmem:[%s663 + $0x1ec] sm:$0xff]
        %v861 = vld [vmem:[%s663 + $0x1f4] sm:$0xf]
        %v862 = vld [vmem:[%s663 + $0x1f8] sm:$0xff]
        %v863 = vld [vmem:[%s663 + $0x200] sm:$0xf]
        %v864 = vld [vmem:[%s663 + $0x204] sm:$0xff]
        %v865 = vld [vmem:[%s663 + $0x20c] sm:$0xf]
        %v866 = vld [vmem:[%s663 + $0x210] sm:$0xff]
        %v867 = vld [vmem:[%s663 + $0x218] sm:$0xf]
        %v868 = vld [vmem:[%s663 + $0x21c] sm:$0xff]
        %v869 = vld [vmem:[%s663 + $0x224] sm:$0xf]
        %v870 = vld [vmem:[%s663 + $0x228] sm:$0xff]
        %v871 = vld [vmem:[%s663 + $0x230] sm:$0xf]
        %v872 = vld [vmem:[%s663 + $0x234] sm:$0xff]
        %v873 = vld [vmem:[%s663 + $0x23c] sm:$0xf]
        %v874 = vld [vmem:[%s663 + $0x240] sm:$0xff]
        %v875 = vld [vmem:[%s663 + $0x248] sm:$0xf]
        %v876 = vld [vmem:[%s663 + $0x24c] sm:$0xff]
        %v877 = vld [vmem:[%s663 + $0x254] sm:$0xf]
        %v878 = vld [vmem:[%s663 + $0x258] sm:$0xff]
        %v879 = vld [vmem:[%s663 + $0x260] sm:$0xf]
        %v880 = vld [vmem:[%s663 + $0x264] sm:$0xff]
        %v881 = vld [vmem:[%s663 + $0x26c] sm:$0xf]
        %v882 = vld [vmem:[%s663 + $0x270] sm:$0xff]
        %v883 = vld [vmem:[%s663 + $0x278] sm:$0xf]
        %v884 = vld [vmem:[%s663 + $0x27c] sm:$0xff]
        %v885 = vld [vmem:[%s663 + $0x284] sm:$0xf]
        %v886 = vld [vmem:[%s663 + $0x288] sm:$0xff]
        %v887 = vld [vmem:[%s663 + $0x290] sm:$0xf]
        %v888 = vld [vmem:[%s663 + $0x294] sm:$0xff]
        %v889 = vld [vmem:[%s663 + $0x29c] sm:$0xf]
        %v890 = vld [vmem:[%s663 + $0x2a0] sm:$0xff]
        %v891 = vld [vmem:[%s663 + $0x2a8] sm:$0xf]
        %v892 = vld [vmem:[%s663 + $0x2ac] sm:$0xff]
        %v893 = vld [vmem:[%s663 + $0x2b4] sm:$0xf]
        %v894 = vld [vmem:[%s663 + $0x2b8] sm:$0xff]
        %v895 = vld [vmem:[%s663 + $0x2c0] sm:$0xf]
        %v896 = vld [vmem:[%s663 + $0x2c4] sm:$0xff]
        %v897 = vld [vmem:[%s663 + $0x2cc] sm:$0xf]
        %v898 = vld [vmem:[%s663 + $0x2d0] sm:$0xff]
        %v899 = vld [vmem:[%s663 + $0x2d8] sm:$0xf]
        %v900 = vld [vmem:[%s663 + $0x2dc] sm:$0xff]
        %v901 = vld [vmem:[%s663 + $0x2e4] sm:$0xf]
        %v902 = vld [vmem:[%s663 + $0x2e8] sm:$0xff]
        %v903 = vld [vmem:[%s663 + $0x2f0] sm:$0xf]
        %v904 = vld [vmem:[%s663 + $0x2f4] sm:$0xff]
        %v905 = vld [vmem:[%s663 + $0x2fc] sm:$0xf]
        %v906 = vunpack.c.l.bf16 %v778
        %v907 = vunpack.c.h.bf16 %v778
        %v908 = vunpack.c.l.bf16 %v779
        %v909 = vunpack.c.l.bf16 %v780
        %v910 = vunpack.c.h.bf16 %v780
        %v911 = vunpack.c.l.bf16 %v781
        %v912 = vunpack.c.l.bf16 %v782
        %v913 = vunpack.c.h.bf16 %v782
        %v914 = vunpack.c.l.bf16 %v783
        %v915 = vunpack.c.l.bf16 %v784
        %v916 = vunpack.c.h.bf16 %v784
        %v917 = vunpack.c.l.bf16 %v785
        %v918 = vunpack.c.l.bf16 %v786
        %v919 = vunpack.c.h.bf16 %v786
        %v920 = vunpack.c.l.bf16 %v787
        %v921 = vunpack.c.l.bf16 %v788
        %v922 = vunpack.c.h.bf16 %v788
        %v923 = vunpack.c.l.bf16 %v789
        %v924 = vunpack.c.l.bf16 %v790
        %v925 = vunpack.c.h.bf16 %v790
        %v926 = vunpack.c.l.bf16 %v791
        %v927 = vunpack.c.l.bf16 %v792
        %v928 = vunpack.c.h.bf16 %v792
        %v929 = vunpack.c.l.bf16 %v793
        %v930 = vunpack.c.l.bf16 %v794
        %v931 = vunpack.c.h.bf16 %v794
        %v932 = vunpack.c.l.bf16 %v795
        %v933 = vunpack.c.l.bf16 %v796
        %v934 = vunpack.c.h.bf16 %v796
        %v935 = vunpack.c.l.bf16 %v797
        %v936 = vunpack.c.l.bf16 %v798
        %v937 = vunpack.c.h.bf16 %v798
        %v938 = vunpack.c.l.bf16 %v799
        %v939 = vunpack.c.l.bf16 %v800
        %v940 = vunpack.c.h.bf16 %v800
        %v941 = vunpack.c.l.bf16 %v801
        %v942 = vunpack.c.l.bf16 %v802
        %v943 = vunpack.c.h.bf16 %v802
        %v944 = vunpack.c.l.bf16 %v803
        %v945 = vunpack.c.l.bf16 %v804
        %v946 = vunpack.c.h.bf16 %v804
        %v947 = vunpack.c.l.bf16 %v805
        %v948 = vunpack.c.l.bf16 %v806
        %v949 = vunpack.c.h.bf16 %v806
        %v950 = vunpack.c.l.bf16 %v807
        %v951 = vunpack.c.l.bf16 %v808
        %v952 = vunpack.c.h.bf16 %v808
        %v953 = vunpack.c.l.bf16 %v809
        %v954 = vunpack.c.l.bf16 %v810
        %v955 = vunpack.c.h.bf16 %v810
        %v956 = vunpack.c.l.bf16 %v811
        %v957 = vunpack.c.l.bf16 %v812
        %v958 = vunpack.c.h.bf16 %v812
        %v959 = vunpack.c.l.bf16 %v813
        %v960 = vunpack.c.l.bf16 %v814
        %v961 = vunpack.c.h.bf16 %v814
        %v962 = vunpack.c.l.bf16 %v815
        %v963 = vunpack.c.l.bf16 %v816
        %v964 = vunpack.c.h.bf16 %v816
        %v965 = vunpack.c.l.bf16 %v817
        %v966 = vunpack.c.l.bf16 %v818
        %v967 = vunpack.c.h.bf16 %v818
        %v968 = vunpack.c.l.bf16 %v819
        %v969 = vunpack.c.l.bf16 %v820
        %v970 = vunpack.c.h.bf16 %v820
        %v971 = vunpack.c.l.bf16 %v821
        %v972 = vunpack.c.l.bf16 %v822
        %v973 = vunpack.c.h.bf16 %v822
        %v974 = vunpack.c.l.bf16 %v823
        %v975 = vunpack.c.l.bf16 %v824
        %v976 = vunpack.c.h.bf16 %v824
        %v977 = vunpack.c.l.bf16 %v825
        %v978 = vunpack.c.l.bf16 %v826
        %v979 = vunpack.c.h.bf16 %v826
        %v980 = vunpack.c.l.bf16 %v827
        %v981 = vunpack.c.l.bf16 %v828
        %v982 = vunpack.c.h.bf16 %v828
        %v983 = vunpack.c.l.bf16 %v829
        %v984 = vunpack.c.l.bf16 %v830
        %v985 = vunpack.c.h.bf16 %v830
        %v986 = vunpack.c.l.bf16 %v831
        %v987 = vunpack.c.l.bf16 %v832
        %v988 = vunpack.c.h.bf16 %v832
        %v989 = vunpack.c.l.bf16 %v833
        %v990 = vunpack.c.l.bf16 %v834
        %v991 = vunpack.c.h.bf16 %v834
        %v992 = vunpack.c.l.bf16 %v835
        %v993 = vunpack.c.l.bf16 %v836
        %v994 = vunpack.c.h.bf16 %v836
        %v995 = vunpack.c.l.bf16 %v837
        %v996 = vunpack.c.l.bf16 %v838
        %v997 = vunpack.c.h.bf16 %v838
        %v998 = vunpack.c.l.bf16 %v839
        %v999 = vunpack.c.l.bf16 %v840
        %v1000 = vunpack.c.h.bf16 %v840
        %v1001 = vunpack.c.l.bf16 %v841
        %v1002 = vunpack.c.l.bf16 %v842
        %v1003 = vunpack.c.h.bf16 %v842
        %v1004 = vunpack.c.l.bf16 %v843
        %v1005 = vunpack.c.l.bf16 %v844
        %v1006 = vunpack.c.h.bf16 %v844
        %v1007 = vunpack.c.l.bf16 %v845
        %v1008 = vunpack.c.l.bf16 %v846
        %v1009 = vunpack.c.h.bf16 %v846
        %v1010 = vunpack.c.l.bf16 %v847
        %v1011 = vunpack.c.l.bf16 %v848
        %v1012 = vunpack.c.h.bf16 %v848
        %v1013 = vunpack.c.l.bf16 %v849
        %v1014 = vunpack.c.l.bf16 %v850
        %v1015 = vunpack.c.h.bf16 %v850
        %v1016 = vunpack.c.l.bf16 %v851
        %v1017 = vunpack.c.l.bf16 %v852
        %v1018 = vunpack.c.h.bf16 %v852
        %v1019 = vunpack.c.l.bf16 %v853
        %v1020 = vunpack.c.l.bf16 %v854
        %v1021 = vunpack.c.h.bf16 %v854
        %v1022 = vunpack.c.l.bf16 %v855
        %v1023 = vunpack.c.l.bf16 %v856
        %v1024 = vunpack.c.h.bf16 %v856
        %v1025 = vunpack.c.l.bf16 %v857
        %v1026 = vunpack.c.l.bf16 %v858
        %v1027 = vunpack.c.h.bf16 %v858
        %v1028 = vunpack.c.l.bf16 %v859
        %v1029 = vunpack.c.l.bf16 %v860
        %v1030 = vunpack.c.h.bf16 %v860
        %v1031 = vunpack.c.l.bf16 %v861
        %v1032 = vunpack.c.l.bf16 %v862
        %v1033 = vunpack.c.h.bf16 %v862
        %v1034 = vunpack.c.l.bf16 %v863
        %v1035 = vunpack.c.l.bf16 %v864
        %v1036 = vunpack.c.h.bf16 %v864
        %v1037 = vunpack.c.l.bf16 %v865
        %v1038 = vunpack.c.l.bf16 %v866
        %v1039 = vunpack.c.h.bf16 %v866
        %v1040 = vunpack.c.l.bf16 %v867
        %v1041 = vunpack.c.l.bf16 %v868
        %v1042 = vunpack.c.h.bf16 %v868
        %v1043 = vunpack.c.l.bf16 %v869
        %v1044 = vunpack.c.l.bf16 %v870
        %v1045 = vunpack.c.h.bf16 %v870
        %v1046 = vunpack.c.l.bf16 %v871
        %v1047 = vunpack.c.l.bf16 %v872
        %v1048 = vunpack.c.h.bf16 %v872
        %v1049 = vunpack.c.l.bf16 %v873
        %v1050 = vunpack.c.l.bf16 %v874
        %v1051 = vunpack.c.h.bf16 %v874
        %v1052 = vunpack.c.l.bf16 %v875
        %v1053 = vunpack.c.l.bf16 %v876
        %v1054 = vunpack.c.h.bf16 %v876
        %v1055 = vunpack.c.l.bf16 %v877
        %v1056 = vunpack.c.l.bf16 %v878
        %v1057 = vunpack.c.h.bf16 %v878
        %v1058 = vunpack.c.l.bf16 %v879
        %v1059 = vunpack.c.l.bf16 %v880
        %v1060 = vunpack.c.h.bf16 %v880
        %v1061 = vunpack.c.l.bf16 %v881
        %v1062 = vunpack.c.l.bf16 %v882
        %v1063 = vunpack.c.h.bf16 %v882
        %v1064 = vunpack.c.l.bf16 %v883
        %v1065 = vunpack.c.l.bf16 %v884
        %v1066 = vunpack.c.h.bf16 %v884
        %v1067 = vunpack.c.l.bf16 %v885
        %v1068 = vunpack.c.l.bf16 %v886
        %v1069 = vunpack.c.h.bf16 %v886
        %v1070 = vunpack.c.l.bf16 %v887
        %v1071 = vunpack.c.l.bf16 %v888
        %v1072 = vunpack.c.h.bf16 %v888
        %v1073 = vunpack.c.l.bf16 %v889
        %v1074 = vunpack.c.l.bf16 %v890
        %v1075 = vunpack.c.h.bf16 %v890
        %v1076 = vunpack.c.l.bf16 %v891
        %v1077 = vunpack.c.l.bf16 %v892
        %v1078 = vunpack.c.h.bf16 %v892
        %v1079 = vunpack.c.l.bf16 %v893
        %v1080 = vunpack.c.l.bf16 %v894
        %v1081 = vunpack.c.h.bf16 %v894
        %v1082 = vunpack.c.l.bf16 %v895
        %v1083 = vunpack.c.l.bf16 %v896
        %v1084 = vunpack.c.h.bf16 %v896
        %v1085 = vunpack.c.l.bf16 %v897
        %v1086 = vunpack.c.l.bf16 %v898
        %v1087 = vunpack.c.h.bf16 %v898
        %v1088 = vunpack.c.l.bf16 %v899
        %v1089 = vunpack.c.l.bf16 %v900
        %v1090 = vunpack.c.h.bf16 %v900
        %v1091 = vunpack.c.l.bf16 %v901
        %v1092 = vunpack.c.l.bf16 %v902
        %v1093 = vunpack.c.h.bf16 %v902
        %v1094 = vunpack.c.l.bf16 %v903
        %v1095 = vunpack.c.l.bf16 %v904
        %v1096 = vunpack.c.h.bf16 %v904
        %v1097 = vunpack.c.l.bf16 %v905
        %v1098 = vld [vmem:[%s672] sm:$0xff]
        %v1099 = vld [vmem:[%s672 + $0x8] sm:$0xf]
        %v1100 = vld [vmem:[%s672 + $0xc] sm:$0xff]
        %v1101 = vld [vmem:[%s672 + $0x14] sm:$0xf]
        %v1102 = vld [vmem:[%s672 + $0x18] sm:$0xff]
        %v1103 = vld [vmem:[%s672 + $0x20] sm:$0xf]
        %v1104 = vld [vmem:[%s672 + $0x24] sm:$0xff]
        %v1105 = vld [vmem:[%s672 + $0x2c] sm:$0xf]
        %v1106 = vld [vmem:[%s672 + $0x30] sm:$0xff]
        %v1107 = vld [vmem:[%s672 + $0x38] sm:$0xf]
        %v1108 = vld [vmem:[%s672 + $0x3c] sm:$0xff]
        %v1109 = vld [vmem:[%s672 + $0x44] sm:$0xf]
        %v1110 = vld [vmem:[%s672 + $0x48] sm:$0xff]
        %v1111 = vld [vmem:[%s672 + $0x50] sm:$0xf]
        %v1112 = vld [vmem:[%s672 + $0x54] sm:$0xff]
        %v1113 = vld [vmem:[%s672 + $0x5c] sm:$0xf]
        %v1114 = vld [vmem:[%s672 + $0x60] sm:$0xff]
        %v1115 = vld [vmem:[%s672 + $0x68] sm:$0xf]
        %v1116 = vld [vmem:[%s672 + $0x6c] sm:$0xff]
        %v1117 = vld [vmem:[%s672 + $0x74] sm:$0xf]
        %v1118 = vld [vmem:[%s672 + $0x78] sm:$0xff]
        %v1119 = vld [vmem:[%s672 + $0x80] sm:$0xf]
        %v1120 = vld [vmem:[%s672 + $0x84] sm:$0xff]
        %v1121 = vld [vmem:[%s672 + $0x8c] sm:$0xf]
        %v1122 = vld [vmem:[%s672 + $0x90] sm:$0xff]
        %v1123 = vld [vmem:[%s672 + $0x98] sm:$0xf]
        %v1124 = vld [vmem:[%s672 + $0x9c] sm:$0xff]
        %v1125 = vld [vmem:[%s672 + $0xa4] sm:$0xf]
        %v1126 = vld [vmem:[%s672 + $0xa8] sm:$0xff]
        %v1127 = vld [vmem:[%s672 + $0xb0] sm:$0xf]
        %v1128 = vld [vmem:[%s672 + $0xb4] sm:$0xff]
        %v1129 = vld [vmem:[%s672 + $0xbc] sm:$0xf]
        %v1130 = vld [vmem:[%s672 + $0xc0] sm:$0xff]
        %v1131 = vld [vmem:[%s672 + $0xc8] sm:$0xf]
        %v1132 = vld [vmem:[%s672 + $0xcc] sm:$0xff]
        %v1133 = vld [vmem:[%s672 + $0xd4] sm:$0xf]
        %v1134 = vld [vmem:[%s672 + $0xd8] sm:$0xff]
        %v1135 = vld [vmem:[%s672 + $0xe0] sm:$0xf]
        %v1136 = vld [vmem:[%s672 + $0xe4] sm:$0xff]
        %v1137 = vld [vmem:[%s672 + $0xec] sm:$0xf]
        %v1138 = vld [vmem:[%s672 + $0xf0] sm:$0xff]
        %v1139 = vld [vmem:[%s672 + $0xf8] sm:$0xf]
        %v1140 = vld [vmem:[%s672 + $0xfc] sm:$0xff]
        %v1141 = vld [vmem:[%s672 + $0x104] sm:$0xf]
        %v1142 = vld [vmem:[%s672 + $0x108] sm:$0xff]
        %v1143 = vld [vmem:[%s672 + $0x110] sm:$0xf]
        %v1144 = vld [vmem:[%s672 + $0x114] sm:$0xff]
        %v1145 = vld [vmem:[%s672 + $0x11c] sm:$0xf]
        %v1146 = vld [vmem:[%s672 + $0x120] sm:$0xff]
        %v1147 = vld [vmem:[%s672 + $0x128] sm:$0xf]
        %v1148 = vld [vmem:[%s672 + $0x12c] sm:$0xff]
        %v1149 = vld [vmem:[%s672 + $0x134] sm:$0xf]
        %v1150 = vld [vmem:[%s672 + $0x138] sm:$0xff]
        %v1151 = vld [vmem:[%s672 + $0x140] sm:$0xf]
        %v1152 = vld [vmem:[%s672 + $0x144] sm:$0xff]
        %v1153 = vld [vmem:[%s672 + $0x14c] sm:$0xf]
        %v1154 = vld [vmem:[%s672 + $0x150] sm:$0xff]
        %v1155 = vld [vmem:[%s672 + $0x158] sm:$0xf]
        %v1156 = vld [vmem:[%s672 + $0x15c] sm:$0xff]
        %v1157 = vld [vmem:[%s672 + $0x164] sm:$0xf]
        %v1158 = vld [vmem:[%s672 + $0x168] sm:$0xff]
        %v1159 = vld [vmem:[%s672 + $0x170] sm:$0xf]
        %v1160 = vld [vmem:[%s672 + $0x174] sm:$0xff]
        %v1161 = vld [vmem:[%s672 + $0x17c] sm:$0xf]
        %v1162 = vld [vmem:[%s672 + $0x180] sm:$0xff]
        %v1163 = vld [vmem:[%s672 + $0x188] sm:$0xf]
        %v1164 = vld [vmem:[%s672 + $0x18c] sm:$0xff]
        %v1165 = vld [vmem:[%s672 + $0x194] sm:$0xf]
        %v1166 = vld [vmem:[%s672 + $0x198] sm:$0xff]
        %v1167 = vld [vmem:[%s672 + $0x1a0] sm:$0xf]
        %v1168 = vld [vmem:[%s672 + $0x1a4] sm:$0xff]
        %v1169 = vld [vmem:[%s672 + $0x1ac] sm:$0xf]
        %v1170 = vld [vmem:[%s672 + $0x1b0] sm:$0xff]
        %v1171 = vld [vmem:[%s672 + $0x1b8] sm:$0xf]
        %v1172 = vld [vmem:[%s672 + $0x1bc] sm:$0xff]
        %v1173 = vld [vmem:[%s672 + $0x1c4] sm:$0xf]
        %v1174 = vld [vmem:[%s672 + $0x1c8] sm:$0xff]
        %v1175 = vld [vmem:[%s672 + $0x1d0] sm:$0xf]
        %v1176 = vld [vmem:[%s672 + $0x1d4] sm:$0xff]
        %v1177 = vld [vmem:[%s672 + $0x1dc] sm:$0xf]
        %v1178 = vld [vmem:[%s672 + $0x1e0] sm:$0xff]
        %v1179 = vld [vmem:[%s672 + $0x1e8] sm:$0xf]
        %v1180 = vld [vmem:[%s672 + $0x1ec] sm:$0xff]
        %v1181 = vld [vmem:[%s672 + $0x1f4] sm:$0xf]
        %v1182 = vld [vmem:[%s672 + $0x1f8] sm:$0xff]
        %v1183 = vld [vmem:[%s672 + $0x200] sm:$0xf]
        %v1184 = vld [vmem:[%s672 + $0x204] sm:$0xff]
        %v1185 = vld [vmem:[%s672 + $0x20c] sm:$0xf]
        %v1186 = vld [vmem:[%s672 + $0x210] sm:$0xff]
        %v1187 = vld [vmem:[%s672 + $0x218] sm:$0xf]
        %v1188 = vld [vmem:[%s672 + $0x21c] sm:$0xff]
        %v1189 = vld [vmem:[%s672 + $0x224] sm:$0xf]
        %v1190 = vld [vmem:[%s672 + $0x228] sm:$0xff]
        %v1191 = vld [vmem:[%s672 + $0x230] sm:$0xf]
        %v1192 = vld [vmem:[%s672 + $0x234] sm:$0xff]
        %v1193 = vld [vmem:[%s672 + $0x23c] sm:$0xf]
        %v1194 = vld [vmem:[%s672 + $0x240] sm:$0xff]
        %v1195 = vld [vmem:[%s672 + $0x248] sm:$0xf]
        %v1196 = vld [vmem:[%s672 + $0x24c] sm:$0xff]
        %v1197 = vld [vmem:[%s672 + $0x254] sm:$0xf]
        %v1198 = vld [vmem:[%s672 + $0x258] sm:$0xff]
        %v1199 = vld [vmem:[%s672 + $0x260] sm:$0xf]
        %v1200 = vld [vmem:[%s672 + $0x264] sm:$0xff]
        %v1201 = vld [vmem:[%s672 + $0x26c] sm:$0xf]
        %v1202 = vld [vmem:[%s672 + $0x270] sm:$0xff]
        %v1203 = vld [vmem:[%s672 + $0x278] sm:$0xf]
        %v1204 = vld [vmem:[%s672 + $0x27c] sm:$0xff]
        %v1205 = vld [vmem:[%s672 + $0x284] sm:$0xf]
        %v1206 = vld [vmem:[%s672 + $0x288] sm:$0xff]
        %v1207 = vld [vmem:[%s672 + $0x290] sm:$0xf]
        %v1208 = vld [vmem:[%s672 + $0x294] sm:$0xff]
        %v1209 = vld [vmem:[%s672 + $0x29c] sm:$0xf]
        %v1210 = vld [vmem:[%s672 + $0x2a0] sm:$0xff]
        %v1211 = vld [vmem:[%s672 + $0x2a8] sm:$0xf]
        %v1212 = vld [vmem:[%s672 + $0x2ac] sm:$0xff]
        %v1213 = vld [vmem:[%s672 + $0x2b4] sm:$0xf]
        %v1214 = vld [vmem:[%s672 + $0x2b8] sm:$0xff]
        %v1215 = vld [vmem:[%s672 + $0x2c0] sm:$0xf]
        %v1216 = vld [vmem:[%s672 + $0x2c4] sm:$0xff]
        %v1217 = vld [vmem:[%s672 + $0x2cc] sm:$0xf]
        %v1218 = vld [vmem:[%s672 + $0x2d0] sm:$0xff]
        %v1219 = vld [vmem:[%s672 + $0x2d8] sm:$0xf]
        %v1220 = vld [vmem:[%s672 + $0x2dc] sm:$0xff]
        %v1221 = vld [vmem:[%s672 + $0x2e4] sm:$0xf]
        %v1222 = vld [vmem:[%s672 + $0x2e8] sm:$0xff]
        %v1223 = vld [vmem:[%s672 + $0x2f0] sm:$0xf]
        %v1224 = vld [vmem:[%s672 + $0x2f4] sm:$0xff]
        %v1225 = vld [vmem:[%s672 + $0x2fc] sm:$0xf]
        %v1226 = vunpack.c.l.bf16 %v1098
        %v1227 = vunpack.c.h.bf16 %v1098
        %v1228 = vunpack.c.l.bf16 %v1099
        %v1229 = vunpack.c.l.bf16 %v1100
        %v1230 = vunpack.c.h.bf16 %v1100
        %v1231 = vunpack.c.l.bf16 %v1101
        %v1232 = vunpack.c.l.bf16 %v1102
        %v1233 = vunpack.c.h.bf16 %v1102
        %v1234 = vunpack.c.l.bf16 %v1103
        %v1235 = vunpack.c.l.bf16 %v1104
        %v1236 = vunpack.c.h.bf16 %v1104
        %v1237 = vunpack.c.l.bf16 %v1105
        %v1238 = vunpack.c.l.bf16 %v1106
        %v1239 = vunpack.c.h.bf16 %v1106
        %v1240 = vunpack.c.l.bf16 %v1107
        %v1241 = vunpack.c.l.bf16 %v1108
        %v1242 = vunpack.c.h.bf16 %v1108
        %v1243 = vunpack.c.l.bf16 %v1109
        %v1244 = vunpack.c.l.bf16 %v1110
        %v1245 = vunpack.c.h.bf16 %v1110
        %v1246 = vunpack.c.l.bf16 %v1111
        %v1247 = vunpack.c.l.bf16 %v1112
        %v1248 = vunpack.c.h.bf16 %v1112
        %v1249 = vunpack.c.l.bf16 %v1113
        %v1250 = vunpack.c.l.bf16 %v1114
        %v1251 = vunpack.c.h.bf16 %v1114
        %v1252 = vunpack.c.l.bf16 %v1115
        %v1253 = vunpack.c.l.bf16 %v1116
        %v1254 = vunpack.c.h.bf16 %v1116
        %v1255 = vunpack.c.l.bf16 %v1117
        %v1256 = vunpack.c.l.bf16 %v1118
        %v1257 = vunpack.c.h.bf16 %v1118
        %v1258 = vunpack.c.l.bf16 %v1119
        %v1259 = vunpack.c.l.bf16 %v1120
        %v1260 = vunpack.c.h.bf16 %v1120
        %v1261 = vunpack.c.l.bf16 %v1121
        %v1262 = vunpack.c.l.bf16 %v1122
        %v1263 = vunpack.c.h.bf16 %v1122
        %v1264 = vunpack.c.l.bf16 %v1123
        %v1265 = vunpack.c.l.bf16 %v1124
        %v1266 = vunpack.c.h.bf16 %v1124
        %v1267 = vunpack.c.l.bf16 %v1125
        %v1268 = vunpack.c.l.bf16 %v1126
        %v1269 = vunpack.c.h.bf16 %v1126
        %v1270 = vunpack.c.l.bf16 %v1127
        %v1271 = vunpack.c.l.bf16 %v1128
        %v1272 = vunpack.c.h.bf16 %v1128
        %v1273 = vunpack.c.l.bf16 %v1129
        %v1274 = vunpack.c.l.bf16 %v1130
        %v1275 = vunpack.c.h.bf16 %v1130
        %v1276 = vunpack.c.l.bf16 %v1131
        %v1277 = vunpack.c.l.bf16 %v1132
        %v1278 = vunpack.c.h.bf16 %v1132
        %v1279 = vunpack.c.l.bf16 %v1133
        %v1280 = vunpack.c.l.bf16 %v1134
        %v1281 = vunpack.c.h.bf16 %v1134
        %v1282 = vunpack.c.l.bf16 %v1135
        %v1283 = vunpack.c.l.bf16 %v1136
        %v1284 = vunpack.c.h.bf16 %v1136
        %v1285 = vunpack.c.l.bf16 %v1137
        %v1286 = vunpack.c.l.bf16 %v1138
        %v1287 = vunpack.c.h.bf16 %v1138
        %v1288 = vunpack.c.l.bf16 %v1139
        %v1289 = vunpack.c.l.bf16 %v1140
        %v1290 = vunpack.c.h.bf16 %v1140
        %v1291 = vunpack.c.l.bf16 %v1141
        %v1292 = vunpack.c.l.bf16 %v1142
        %v1293 = vunpack.c.h.bf16 %v1142
        %v1294 = vunpack.c.l.bf16 %v1143
        %v1295 = vunpack.c.l.bf16 %v1144
        %v1296 = vunpack.c.h.bf16 %v1144
        %v1297 = vunpack.c.l.bf16 %v1145
        %v1298 = vunpack.c.l.bf16 %v1146
        %v1299 = vunpack.c.h.bf16 %v1146
        %v1300 = vunpack.c.l.bf16 %v1147
        %v1301 = vunpack.c.l.bf16 %v1148
        %v1302 = vunpack.c.h.bf16 %v1148
        %v1303 = vunpack.c.l.bf16 %v1149
        %v1304 = vunpack.c.l.bf16 %v1150
        %v1305 = vunpack.c.h.bf16 %v1150
        %v1306 = vunpack.c.l.bf16 %v1151
        %v1307 = vunpack.c.l.bf16 %v1152
        %v1308 = vunpack.c.h.bf16 %v1152
        %v1309 = vunpack.c.l.bf16 %v1153
        %v1310 = vunpack.c.l.bf16 %v1154
        %v1311 = vunpack.c.h.bf16 %v1154
        %v1312 = vunpack.c.l.bf16 %v1155
        %v1313 = vunpack.c.l.bf16 %v1156
        %v1314 = vunpack.c.h.bf16 %v1156
        %v1315 = vunpack.c.l.bf16 %v1157
        %v1316 = vunpack.c.l.bf16 %v1158
        %v1317 = vunpack.c.h.bf16 %v1158
        %v1318 = vunpack.c.l.bf16 %v1159
        %v1319 = vunpack.c.l.bf16 %v1160
        %v1320 = vunpack.c.h.bf16 %v1160
        %v1321 = vunpack.c.l.bf16 %v1161
        %v1322 = vunpack.c.l.bf16 %v1162
        %v1323 = vunpack.c.h.bf16 %v1162
        %v1324 = vunpack.c.l.bf16 %v1163
        %v1325 = vunpack.c.l.bf16 %v1164
        %v1326 = vunpack.c.h.bf16 %v1164
        %v1327 = vunpack.c.l.bf16 %v1165
        %v1328 = vunpack.c.l.bf16 %v1166
        %v1329 = vunpack.c.h.bf16 %v1166
        %v1330 = vunpack.c.l.bf16 %v1167
        %v1331 = vunpack.c.l.bf16 %v1168
        %v1332 = vunpack.c.h.bf16 %v1168
        %v1333 = vunpack.c.l.bf16 %v1169
        %v1334 = vunpack.c.l.bf16 %v1170
        %v1335 = vunpack.c.h.bf16 %v1170
        %v1336 = vunpack.c.l.bf16 %v1171
        %v1337 = vunpack.c.l.bf16 %v1172
        %v1338 = vunpack.c.h.bf16 %v1172
        %v1339 = vunpack.c.l.bf16 %v1173
        %v1340 = vunpack.c.l.bf16 %v1174
        %v1341 = vunpack.c.h.bf16 %v1174
        %v1342 = vunpack.c.l.bf16 %v1175
        %v1343 = vunpack.c.l.bf16 %v1176
        %v1344 = vunpack.c.h.bf16 %v1176
        %v1345 = vunpack.c.l.bf16 %v1177
        %v1346 = vunpack.c.l.bf16 %v1178
        %v1347 = vunpack.c.h.bf16 %v1178
        %v1348 = vunpack.c.l.bf16 %v1179
        %v1349 = vunpack.c.l.bf16 %v1180
        %v1350 = vunpack.c.h.bf16 %v1180
        %v1351 = vunpack.c.l.bf16 %v1181
        %v1352 = vunpack.c.l.bf16 %v1182
        %v1353 = vunpack.c.h.bf16 %v1182
        %v1354 = vunpack.c.l.bf16 %v1183
        %v1355 = vunpack.c.l.bf16 %v1184
        %v1356 = vunpack.c.h.bf16 %v1184
        %v1357 = vunpack.c.l.bf16 %v1185
        %v1358 = vunpack.c.l.bf16 %v1186
        %v1359 = vunpack.c.h.bf16 %v1186
        %v1360 = vunpack.c.l.bf16 %v1187
        %v1361 = vunpack.c.l.bf16 %v1188
        %v1362 = vunpack.c.h.bf16 %v1188
        %v1363 = vunpack.c.l.bf16 %v1189
        %v1364 = vunpack.c.l.bf16 %v1190
        %v1365 = vunpack.c.h.bf16 %v1190
        %v1366 = vunpack.c.l.bf16 %v1191
        %v1367 = vunpack.c.l.bf16 %v1192
        %v1368 = vunpack.c.h.bf16 %v1192
        %v1369 = vunpack.c.l.bf16 %v1193
        %v1370 = vunpack.c.l.bf16 %v1194
        %v1371 = vunpack.c.h.bf16 %v1194
        %v1372 = vunpack.c.l.bf16 %v1195
        %v1373 = vunpack.c.l.bf16 %v1196
        %v1374 = vunpack.c.h.bf16 %v1196
        %v1375 = vunpack.c.l.bf16 %v1197
        %v1376 = vunpack.c.l.bf16 %v1198
        %v1377 = vunpack.c.h.bf16 %v1198
        %v1378 = vunpack.c.l.bf16 %v1199
        %v1379 = vunpack.c.l.bf16 %v1200
        %v1380 = vunpack.c.h.bf16 %v1200
        %v1381 = vunpack.c.l.bf16 %v1201
        %v1382 = vunpack.c.l.bf16 %v1202
        %v1383 = vunpack.c.h.bf16 %v1202
        %v1384 = vunpack.c.l.bf16 %v1203
        %v1385 = vunpack.c.l.bf16 %v1204
        %v1386 = vunpack.c.h.bf16 %v1204
        %v1387 = vunpack.c.l.bf16 %v1205
        %v1388 = vunpack.c.l.bf16 %v1206
        %v1389 = vunpack.c.h.bf16 %v1206
        %v1390 = vunpack.c.l.bf16 %v1207
        %v1391 = vunpack.c.l.bf16 %v1208
        %v1392 = vunpack.c.h.bf16 %v1208
        %v1393 = vunpack.c.l.bf16 %v1209
        %v1394 = vunpack.c.l.bf16 %v1210
        %v1395 = vunpack.c.h.bf16 %v1210
        %v1396 = vunpack.c.l.bf16 %v1211
        %v1397 = vunpack.c.l.bf16 %v1212
        %v1398 = vunpack.c.h.bf16 %v1212
        %v1399 = vunpack.c.l.bf16 %v1213
        %v1400 = vunpack.c.l.bf16 %v1214
        %v1401 = vunpack.c.h.bf16 %v1214
        %v1402 = vunpack.c.l.bf16 %v1215
        %v1403 = vunpack.c.l.bf16 %v1216
        %v1404 = vunpack.c.h.bf16 %v1216
        %v1405 = vunpack.c.l.bf16 %v1217
        %v1406 = vunpack.c.l.bf16 %v1218
        %v1407 = vunpack.c.h.bf16 %v1218
        %v1408 = vunpack.c.l.bf16 %v1219
        %v1409 = vunpack.c.l.bf16 %v1220
        %v1410 = vunpack.c.h.bf16 %v1220
        %v1411 = vunpack.c.l.bf16 %v1221
        %v1412 = vunpack.c.l.bf16 %v1222
        %v1413 = vunpack.c.h.bf16 %v1222
        %v1414 = vunpack.c.l.bf16 %v1223
        %v1415 = vunpack.c.l.bf16 %v1224
        %v1416 = vunpack.c.h.bf16 %v1224
        %v1417 = vunpack.c.l.bf16 %v1225
        %v1418 = vld [vmem:[%s681] sm:$0xff]
        %v1419 = vld [vmem:[%s681 + $0x8] sm:$0xf]
        %v1420 = vld [vmem:[%s681 + $0xc] sm:$0xff]
        %v1421 = vld [vmem:[%s681 + $0x14] sm:$0xf]
        %v1422 = vld [vmem:[%s681 + $0x18] sm:$0xff]
        %v1423 = vld [vmem:[%s681 + $0x20] sm:$0xf]
        %v1424 = vld [vmem:[%s681 + $0x24] sm:$0xff]
        %v1425 = vld [vmem:[%s681 + $0x2c] sm:$0xf]
        %v1426 = vld [vmem:[%s681 + $0x30] sm:$0xff]
        %v1427 = vld [vmem:[%s681 + $0x38] sm:$0xf]
        %v1428 = vld [vmem:[%s681 + $0x3c] sm:$0xff]
        %v1429 = vld [vmem:[%s681 + $0x44] sm:$0xf]
        %v1430 = vld [vmem:[%s681 + $0x48] sm:$0xff]
        %v1431 = vld [vmem:[%s681 + $0x50] sm:$0xf]
        %v1432 = vld [vmem:[%s681 + $0x54] sm:$0xff]
        %v1433 = vld [vmem:[%s681 + $0x5c] sm:$0xf]
        %v1434 = vld [vmem:[%s681 + $0x60] sm:$0xff]
        %v1435 = vld [vmem:[%s681 + $0x68] sm:$0xf]
        %v1436 = vld [vmem:[%s681 + $0x6c] sm:$0xff]
        %v1437 = vld [vmem:[%s681 + $0x74] sm:$0xf]
        %v1438 = vld [vmem:[%s681 + $0x78] sm:$0xff]
        %v1439 = vld [vmem:[%s681 + $0x80] sm:$0xf]
        %v1440 = vld [vmem:[%s681 + $0x84] sm:$0xff]
        %v1441 = vld [vmem:[%s681 + $0x8c] sm:$0xf]
        %v1442 = vld [vmem:[%s681 + $0x90] sm:$0xff]
        %v1443 = vld [vmem:[%s681 + $0x98] sm:$0xf]
        %v1444 = vld [vmem:[%s681 + $0x9c] sm:$0xff]
        %v1445 = vld [vmem:[%s681 + $0xa4] sm:$0xf]
        %v1446 = vld [vmem:[%s681 + $0xa8] sm:$0xff]
        %v1447 = vld [vmem:[%s681 + $0xb0] sm:$0xf]
        %v1448 = vld [vmem:[%s681 + $0xb4] sm:$0xff]
        %v1449 = vld [vmem:[%s681 + $0xbc] sm:$0xf]
        %v1450 = vld [vmem:[%s681 + $0xc0] sm:$0xff]
        %v1451 = vld [vmem:[%s681 + $0xc8] sm:$0xf]
        %v1452 = vld [vmem:[%s681 + $0xcc] sm:$0xff]
        %v1453 = vld [vmem:[%s681 + $0xd4] sm:$0xf]
        %v1454 = vld [vmem:[%s681 + $0xd8] sm:$0xff]
        %v1455 = vld [vmem:[%s681 + $0xe0] sm:$0xf]
        %v1456 = vld [vmem:[%s681 + $0xe4] sm:$0xff]
        %v1457 = vld [vmem:[%s681 + $0xec] sm:$0xf]
        %v1458 = vld [vmem:[%s681 + $0xf0] sm:$0xff]
        %v1459 = vld [vmem:[%s681 + $0xf8] sm:$0xf]
        %v1460 = vld [vmem:[%s681 + $0xfc] sm:$0xff]
        %v1461 = vld [vmem:[%s681 + $0x104] sm:$0xf]
        %v1462 = vld [vmem:[%s681 + $0x108] sm:$0xff]
        %v1463 = vld [vmem:[%s681 + $0x110] sm:$0xf]
        %v1464 = vld [vmem:[%s681 + $0x114] sm:$0xff]
        %v1465 = vld [vmem:[%s681 + $0x11c] sm:$0xf]
        %v1466 = vld [vmem:[%s681 + $0x120] sm:$0xff]
        %v1467 = vld [vmem:[%s681 + $0x128] sm:$0xf]
        %v1468 = vld [vmem:[%s681 + $0x12c] sm:$0xff]
        %v1469 = vld [vmem:[%s681 + $0x134] sm:$0xf]
        %v1470 = vld [vmem:[%s681 + $0x138] sm:$0xff]
        %v1471 = vld [vmem:[%s681 + $0x140] sm:$0xf]
        %v1472 = vld [vmem:[%s681 + $0x144] sm:$0xff]
        %v1473 = vld [vmem:[%s681 + $0x14c] sm:$0xf]
        %v1474 = vld [vmem:[%s681 + $0x150] sm:$0xff]
        %v1475 = vld [vmem:[%s681 + $0x158] sm:$0xf]
        %v1476 = vld [vmem:[%s681 + $0x15c] sm:$0xff]
        %v1477 = vld [vmem:[%s681 + $0x164] sm:$0xf]
        %v1478 = vld [vmem:[%s681 + $0x168] sm:$0xff]
        %v1479 = vld [vmem:[%s681 + $0x170] sm:$0xf]
        %v1480 = vld [vmem:[%s681 + $0x174] sm:$0xff]
        %v1481 = vld [vmem:[%s681 + $0x17c] sm:$0xf]
        %v1482 = vld [vmem:[%s681 + $0x180] sm:$0xff]
        %v1483 = vld [vmem:[%s681 + $0x188] sm:$0xf]
        %v1484 = vld [vmem:[%s681 + $0x18c] sm:$0xff]
        %v1485 = vld [vmem:[%s681 + $0x194] sm:$0xf]
        %v1486 = vld [vmem:[%s681 + $0x198] sm:$0xff]
        %v1487 = vld [vmem:[%s681 + $0x1a0] sm:$0xf]
        %v1488 = vld [vmem:[%s681 + $0x1a4] sm:$0xff]
        %v1489 = vld [vmem:[%s681 + $0x1ac] sm:$0xf]
        %v1490 = vld [vmem:[%s681 + $0x1b0] sm:$0xff]
        %v1491 = vld [vmem:[%s681 + $0x1b8] sm:$0xf]
        %v1492 = vld [vmem:[%s681 + $0x1bc] sm:$0xff]
        %v1493 = vld [vmem:[%s681 + $0x1c4] sm:$0xf]
        %v1494 = vld [vmem:[%s681 + $0x1c8] sm:$0xff]
        %v1495 = vld [vmem:[%s681 + $0x1d0] sm:$0xf]
        %v1496 = vld [vmem:[%s681 + $0x1d4] sm:$0xff]
        %v1497 = vld [vmem:[%s681 + $0x1dc] sm:$0xf]
        %v1498 = vld [vmem:[%s681 + $0x1e0] sm:$0xff]
        %v1499 = vld [vmem:[%s681 + $0x1e8] sm:$0xf]
        %v1500 = vld [vmem:[%s681 + $0x1ec] sm:$0xff]
        %v1501 = vld [vmem:[%s681 + $0x1f4] sm:$0xf]
        %v1502 = vld [vmem:[%s681 + $0x1f8] sm:$0xff]
        %v1503 = vld [vmem:[%s681 + $0x200] sm:$0xf]
        %v1504 = vld [vmem:[%s681 + $0x204] sm:$0xff]
        %v1505 = vld [vmem:[%s681 + $0x20c] sm:$0xf]
        %v1506 = vld [vmem:[%s681 + $0x210] sm:$0xff]
        %v1507 = vld [vmem:[%s681 + $0x218] sm:$0xf]
        %v1508 = vld [vmem:[%s681 + $0x21c] sm:$0xff]
        %v1509 = vld [vmem:[%s681 + $0x224] sm:$0xf]
        %v1510 = vld [vmem:[%s681 + $0x228] sm:$0xff]
        %v1511 = vld [vmem:[%s681 + $0x230] sm:$0xf]
        %v1512 = vld [vmem:[%s681 + $0x234] sm:$0xff]
        %v1513 = vld [vmem:[%s681 + $0x23c] sm:$0xf]
        %v1514 = vld [vmem:[%s681 + $0x240] sm:$0xff]
        %v1515 = vld [vmem:[%s681 + $0x248] sm:$0xf]
        %v1516 = vld [vmem:[%s681 + $0x24c] sm:$0xff]
        %v1517 = vld [vmem:[%s681 + $0x254] sm:$0xf]
        %v1518 = vld [vmem:[%s681 + $0x258] sm:$0xff]
        %v1519 = vld [vmem:[%s681 + $0x260] sm:$0xf]
        %v1520 = vld [vmem:[%s681 + $0x264] sm:$0xff]
        %v1521 = vld [vmem:[%s681 + $0x26c] sm:$0xf]
        %v1522 = vld [vmem:[%s681 + $0x270] sm:$0xff]
        %v1523 = vld [vmem:[%s681 + $0x278] sm:$0xf]
        %v1524 = vld [vmem:[%s681 + $0x27c] sm:$0xff]
        %v1525 = vld [vmem:[%s681 + $0x284] sm:$0xf]
        %v1526 = vld [vmem:[%s681 + $0x288] sm:$0xff]
        %v1527 = vld [vmem:[%s681 + $0x290] sm:$0xf]
        %v1528 = vld [vmem:[%s681 + $0x294] sm:$0xff]
        %v1529 = vld [vmem:[%s681 + $0x29c] sm:$0xf]
        %v1530 = vld [vmem:[%s681 + $0x2a0] sm:$0xff]
        %v1531 = vld [vmem:[%s681 + $0x2a8] sm:$0xf]
        %v1532 = vld [vmem:[%s681 + $0x2ac] sm:$0xff]
        %v1533 = vld [vmem:[%s681 + $0x2b4] sm:$0xf]
        %v1534 = vld [vmem:[%s681 + $0x2b8] sm:$0xff]
        %v1535 = vld [vmem:[%s681 + $0x2c0] sm:$0xf]
        %v1536 = vld [vmem:[%s681 + $0x2c4] sm:$0xff]
        %v1537 = vld [vmem:[%s681 + $0x2cc] sm:$0xf]
        %v1538 = vld [vmem:[%s681 + $0x2d0] sm:$0xff]
        %v1539 = vld [vmem:[%s681 + $0x2d8] sm:$0xf]
        %v1540 = vld [vmem:[%s681 + $0x2dc] sm:$0xff]
        %v1541 = vld [vmem:[%s681 + $0x2e4] sm:$0xf]
        %v1542 = vld [vmem:[%s681 + $0x2e8] sm:$0xff]
        %v1543 = vld [vmem:[%s681 + $0x2f0] sm:$0xf]
        %v1544 = vld [vmem:[%s681 + $0x2f4] sm:$0xff]
        %v1545 = vld [vmem:[%s681 + $0x2fc] sm:$0xf]
        %v1546 = vunpack.c.l.bf16 %v1418
        %v1547 = vunpack.c.h.bf16 %v1418
        %v1548 = vunpack.c.l.bf16 %v1419
        %v1549 = vunpack.c.l.bf16 %v1420
        %v1550 = vunpack.c.h.bf16 %v1420
        %v1551 = vunpack.c.l.bf16 %v1421
        %v1552 = vunpack.c.l.bf16 %v1422
        %v1553 = vunpack.c.h.bf16 %v1422
        %v1554 = vunpack.c.l.bf16 %v1423
        %v1555 = vunpack.c.l.bf16 %v1424
        %v1556 = vunpack.c.h.bf16 %v1424
        %v1557 = vunpack.c.l.bf16 %v1425
        %v1558 = vunpack.c.l.bf16 %v1426
        %v1559 = vunpack.c.h.bf16 %v1426
        %v1560 = vunpack.c.l.bf16 %v1427
        %v1561 = vunpack.c.l.bf16 %v1428
        %v1562 = vunpack.c.h.bf16 %v1428
        %v1563 = vunpack.c.l.bf16 %v1429
        %v1564 = vunpack.c.l.bf16 %v1430
        %v1565 = vunpack.c.h.bf16 %v1430
        %v1566 = vunpack.c.l.bf16 %v1431
        %v1567 = vunpack.c.l.bf16 %v1432
        %v1568 = vunpack.c.h.bf16 %v1432
        %v1569 = vunpack.c.l.bf16 %v1433
        %v1570 = vunpack.c.l.bf16 %v1434
        %v1571 = vunpack.c.h.bf16 %v1434
        %v1572 = vunpack.c.l.bf16 %v1435
        %v1573 = vunpack.c.l.bf16 %v1436
        %v1574 = vunpack.c.h.bf16 %v1436
        %v1575 = vunpack.c.l.bf16 %v1437
        %v1576 = vunpack.c.l.bf16 %v1438
        %v1577 = vunpack.c.h.bf16 %v1438
        %v1578 = vunpack.c.l.bf16 %v1439
        %v1579 = vunpack.c.l.bf16 %v1440
        %v1580 = vunpack.c.h.bf16 %v1440
        %v1581 = vunpack.c.l.bf16 %v1441
        %v1582 = vunpack.c.l.bf16 %v1442
        %v1583 = vunpack.c.h.bf16 %v1442
        %v1584 = vunpack.c.l.bf16 %v1443
        %v1585 = vunpack.c.l.bf16 %v1444
        %v1586 = vunpack.c.h.bf16 %v1444
        %v1587 = vunpack.c.l.bf16 %v1445
        %v1588 = vunpack.c.l.bf16 %v1446
        %v1589 = vunpack.c.h.bf16 %v1446
        %v1590 = vunpack.c.l.bf16 %v1447
        %v1591 = vunpack.c.l.bf16 %v1448
        %v1592 = vunpack.c.h.bf16 %v1448
        %v1593 = vunpack.c.l.bf16 %v1449
        %v1594 = vunpack.c.l.bf16 %v1450
        %v1595 = vunpack.c.h.bf16 %v1450
        %v1596 = vunpack.c.l.bf16 %v1451
        %v1597 = vunpack.c.l.bf16 %v1452
        %v1598 = vunpack.c.h.bf16 %v1452
        %v1599 = vunpack.c.l.bf16 %v1453
        %v1600 = vunpack.c.l.bf16 %v1454
        %v1601 = vunpack.c.h.bf16 %v1454
        %v1602 = vunpack.c.l.bf16 %v1455
        %v1603 = vunpack.c.l.bf16 %v1456
        %v1604 = vunpack.c.h.bf16 %v1456
        %v1605 = vunpack.c.l.bf16 %v1457
        %v1606 = vunpack.c.l.bf16 %v1458
        %v1607 = vunpack.c.h.bf16 %v1458
        %v1608 = vunpack.c.l.bf16 %v1459
        %v1609 = vunpack.c.l.bf16 %v1460
        %v1610 = vunpack.c.h.bf16 %v1460
        %v1611 = vunpack.c.l.bf16 %v1461
        %v1612 = vunpack.c.l.bf16 %v1462
        %v1613 = vunpack.c.h.bf16 %v1462
        %v1614 = vunpack.c.l.bf16 %v1463
        %v1615 = vunpack.c.l.bf16 %v1464
        %v1616 = vunpack.c.h.bf16 %v1464
        %v1617 = vunpack.c.l.bf16 %v1465
        %v1618 = vunpack.c.l.bf16 %v1466
        %v1619 = vunpack.c.h.bf16 %v1466
        %v1620 = vunpack.c.l.bf16 %v1467
        %v1621 = vunpack.c.l.bf16 %v1468
        %v1622 = vunpack.c.h.bf16 %v1468
        %v1623 = vunpack.c.l.bf16 %v1469
        %v1624 = vunpack.c.l.bf16 %v1470
        %v1625 = vunpack.c.h.bf16 %v1470
        %v1626 = vunpack.c.l.bf16 %v1471
        %v1627 = vunpack.c.l.bf16 %v1472
        %v1628 = vunpack.c.h.bf16 %v1472
        %v1629 = vunpack.c.l.bf16 %v1473
        %v1630 = vunpack.c.l.bf16 %v1474
        %v1631 = vunpack.c.h.bf16 %v1474
        %v1632 = vunpack.c.l.bf16 %v1475
        %v1633 = vunpack.c.l.bf16 %v1476
        %v1634 = vunpack.c.h.bf16 %v1476
        %v1635 = vunpack.c.l.bf16 %v1477
        %v1636 = vunpack.c.l.bf16 %v1478
        %v1637 = vunpack.c.h.bf16 %v1478
        %v1638 = vunpack.c.l.bf16 %v1479
        %v1639 = vunpack.c.l.bf16 %v1480
        %v1640 = vunpack.c.h.bf16 %v1480
        %v1641 = vunpack.c.l.bf16 %v1481
        %v1642 = vunpack.c.l.bf16 %v1482
        %v1643 = vunpack.c.h.bf16 %v1482
        %v1644 = vunpack.c.l.bf16 %v1483
        %v1645 = vunpack.c.l.bf16 %v1484
        %v1646 = vunpack.c.h.bf16 %v1484
        %v1647 = vunpack.c.l.bf16 %v1485
        %v1648 = vunpack.c.l.bf16 %v1486
        %v1649 = vunpack.c.h.bf16 %v1486
        %v1650 = vunpack.c.l.bf16 %v1487
        %v1651 = vunpack.c.l.bf16 %v1488
        %v1652 = vunpack.c.h.bf16 %v1488
        %v1653 = vunpack.c.l.bf16 %v1489
        %v1654 = vunpack.c.l.bf16 %v1490
        %v1655 = vunpack.c.h.bf16 %v1490
        %v1656 = vunpack.c.l.bf16 %v1491
        %v1657 = vunpack.c.l.bf16 %v1492
        %v1658 = vunpack.c.h.bf16 %v1492
        %v1659 = vunpack.c.l.bf16 %v1493
        %v1660 = vunpack.c.l.bf16 %v1494
        %v1661 = vunpack.c.h.bf16 %v1494
        %v1662 = vunpack.c.l.bf16 %v1495
        %v1663 = vunpack.c.l.bf16 %v1496
        %v1664 = vunpack.c.h.bf16 %v1496
        %v1665 = vunpack.c.l.bf16 %v1497
        %v1666 = vunpack.c.l.bf16 %v1498
        %v1667 = vunpack.c.h.bf16 %v1498
        %v1668 = vunpack.c.l.bf16 %v1499
        %v1669 = vunpack.c.l.bf16 %v1500
        %v1670 = vunpack.c.h.bf16 %v1500
        %v1671 = vunpack.c.l.bf16 %v1501
        %v1672 = vunpack.c.l.bf16 %v1502
        %v1673 = vunpack.c.h.bf16 %v1502
        %v1674 = vunpack.c.l.bf16 %v1503
        %v1675 = vunpack.c.l.bf16 %v1504
        %v1676 = vunpack.c.h.bf16 %v1504
        %v1677 = vunpack.c.l.bf16 %v1505
        %v1678 = vunpack.c.l.bf16 %v1506
        %v1679 = vunpack.c.h.bf16 %v1506
        %v1680 = vunpack.c.l.bf16 %v1507
        %v1681 = vunpack.c.l.bf16 %v1508
        %v1682 = vunpack.c.h.bf16 %v1508
        %v1683 = vunpack.c.l.bf16 %v1509
        %v1684 = vunpack.c.l.bf16 %v1510
        %v1685 = vunpack.c.h.bf16 %v1510
        %v1686 = vunpack.c.l.bf16 %v1511
        %v1687 = vunpack.c.l.bf16 %v1512
        %v1688 = vunpack.c.h.bf16 %v1512
        %v1689 = vunpack.c.l.bf16 %v1513
        %v1690 = vunpack.c.l.bf16 %v1514
        %v1691 = vunpack.c.h.bf16 %v1514
        %v1692 = vunpack.c.l.bf16 %v1515
        %v1693 = vunpack.c.l.bf16 %v1516
        %v1694 = vunpack.c.h.bf16 %v1516
        %v1695 = vunpack.c.l.bf16 %v1517
        %v1696 = vunpack.c.l.bf16 %v1518
        %v1697 = vunpack.c.h.bf16 %v1518
        %v1698 = vunpack.c.l.bf16 %v1519
        %v1699 = vunpack.c.l.bf16 %v1520
        %v1700 = vunpack.c.h.bf16 %v1520
        %v1701 = vunpack.c.l.bf16 %v1521
        %v1702 = vunpack.c.l.bf16 %v1522
        %v1703 = vunpack.c.h.bf16 %v1522
        %v1704 = vunpack.c.l.bf16 %v1523
        %v1705 = vunpack.c.l.bf16 %v1524
        %v1706 = vunpack.c.h.bf16 %v1524
        %v1707 = vunpack.c.l.bf16 %v1525
        %v1708 = vunpack.c.l.bf16 %v1526
        %v1709 = vunpack.c.h.bf16 %v1526
        %v1710 = vunpack.c.l.bf16 %v1527
        %v1711 = vunpack.c.l.bf16 %v1528
        %v1712 = vunpack.c.h.bf16 %v1528
        %v1713 = vunpack.c.l.bf16 %v1529
        %v1714 = vunpack.c.l.bf16 %v1530
        %v1715 = vunpack.c.h.bf16 %v1530
        %v1716 = vunpack.c.l.bf16 %v1531
        %v1717 = vunpack.c.l.bf16 %v1532
        %v1718 = vunpack.c.h.bf16 %v1532
        %v1719 = vunpack.c.l.bf16 %v1533
        %v1720 = vunpack.c.l.bf16 %v1534
        %v1721 = vunpack.c.h.bf16 %v1534
        %v1722 = vunpack.c.l.bf16 %v1535
        %v1723 = vunpack.c.l.bf16 %v1536
        %v1724 = vunpack.c.h.bf16 %v1536
        %v1725 = vunpack.c.l.bf16 %v1537
        %v1726 = vunpack.c.l.bf16 %v1538
        %v1727 = vunpack.c.h.bf16 %v1538
        %v1728 = vunpack.c.l.bf16 %v1539
        %v1729 = vunpack.c.l.bf16 %v1540
        %v1730 = vunpack.c.h.bf16 %v1540
        %v1731 = vunpack.c.l.bf16 %v1541
        %v1732 = vunpack.c.l.bf16 %v1542
        %v1733 = vunpack.c.h.bf16 %v1542
        %v1734 = vunpack.c.l.bf16 %v1543
        %v1735 = vunpack.c.l.bf16 %v1544
        %v1736 = vunpack.c.h.bf16 %v1544
        %v1737 = vunpack.c.l.bf16 %v1545
        %v1738 = vmul.f32 %v1226, %v1546
        %v1739 = vmul.f32 %v1227, %v1547
        %v1740 = vmul.f32 %v1228, %v1548
        %v1741 = vmul.f32 %v1229, %v1549
        %v1742 = vmul.f32 %v1230, %v1550
        %v1743 = vmul.f32 %v1231, %v1551
        %v1744 = vmul.f32 %v1232, %v1552
        %v1745 = vmul.f32 %v1233, %v1553
        %v1746 = vmul.f32 %v1234, %v1554
        %v1747 = vmul.f32 %v1235, %v1555
        %v1748 = vmul.f32 %v1236, %v1556
        %v1749 = vmul.f32 %v1237, %v1557
        %v1750 = vmul.f32 %v1238, %v1558
        %v1751 = vmul.f32 %v1239, %v1559
        %v1752 = vmul.f32 %v1240, %v1560
        %v1753 = vmul.f32 %v1241, %v1561
        %v1754 = vmul.f32 %v1242, %v1562
        %v1755 = vmul.f32 %v1243, %v1563
        %v1756 = vmul.f32 %v1244, %v1564
        %v1757 = vmul.f32 %v1245, %v1565
        %v1758 = vmul.f32 %v1246, %v1566
        %v1759 = vmul.f32 %v1247, %v1567
        %v1760 = vmul.f32 %v1248, %v1568
        %v1761 = vmul.f32 %v1249, %v1569
        %v1762 = vmul.f32 %v1250, %v1570
        %v1763 = vmul.f32 %v1251, %v1571
        %v1764 = vmul.f32 %v1252, %v1572
        %v1765 = vmul.f32 %v1253, %v1573
        %v1766 = vmul.f32 %v1254, %v1574
        %v1767 = vmul.f32 %v1255, %v1575
        %v1768 = vmul.f32 %v1256, %v1576
        %v1769 = vmul.f32 %v1257, %v1577
        %v1770 = vmul.f32 %v1258, %v1578
        %v1771 = vmul.f32 %v1259, %v1579
        %v1772 = vmul.f32 %v1260, %v1580
        %v1773 = vmul.f32 %v1261, %v1581
        %v1774 = vmul.f32 %v1262, %v1582
        %v1775 = vmul.f32 %v1263, %v1583
        %v1776 = vmul.f32 %v1264, %v1584
        %v1777 = vmul.f32 %v1265, %v1585
        %v1778 = vmul.f32 %v1266, %v1586
        %v1779 = vmul.f32 %v1267, %v1587
        %v1780 = vmul.f32 %v1268, %v1588
        %v1781 = vmul.f32 %v1269, %v1589
        %v1782 = vmul.f32 %v1270, %v1590
        %v1783 = vmul.f32 %v1271, %v1591
        %v1784 = vmul.f32 %v1272, %v1592
        %v1785 = vmul.f32 %v1273, %v1593
        %v1786 = vmul.f32 %v1274, %v1594
        %v1787 = vmul.f32 %v1275, %v1595
        %v1788 = vmul.f32 %v1276, %v1596
        %v1789 = vmul.f32 %v1277, %v1597
        %v1790 = vmul.f32 %v1278, %v1598
        %v1791 = vmul.f32 %v1279, %v1599
        %v1792 = vmul.f32 %v1280, %v1600
        %v1793 = vmul.f32 %v1281, %v1601
        %v1794 = vmul.f32 %v1282, %v1602
        %v1795 = vmul.f32 %v1283, %v1603
        %v1796 = vmul.f32 %v1284, %v1604
        %v1797 = vmul.f32 %v1285, %v1605
        %v1798 = vmul.f32 %v1286, %v1606
        %v1799 = vmul.f32 %v1287, %v1607
        %v1800 = vmul.f32 %v1288, %v1608
        %v1801 = vmul.f32 %v1289, %v1609
        %v1802 = vmul.f32 %v1290, %v1610
        %v1803 = vmul.f32 %v1291, %v1611
        %v1804 = vmul.f32 %v1292, %v1612
        %v1805 = vmul.f32 %v1293, %v1613
        %v1806 = vmul.f32 %v1294, %v1614
        %v1807 = vmul.f32 %v1295, %v1615
        %v1808 = vmul.f32 %v1296, %v1616
        %v1809 = vmul.f32 %v1297, %v1617
        %v1810 = vmul.f32 %v1298, %v1618
        %v1811 = vmul.f32 %v1299, %v1619
        %v1812 = vmul.f32 %v1300, %v1620
        %v1813 = vmul.f32 %v1301, %v1621
        %v1814 = vmul.f32 %v1302, %v1622
        %v1815 = vmul.f32 %v1303, %v1623
        %v1816 = vmul.f32 %v1304, %v1624
        %v1817 = vmul.f32 %v1305, %v1625
        %v1818 = vmul.f32 %v1306, %v1626
        %v1819 = vmul.f32 %v1307, %v1627
        %v1820 = vmul.f32 %v1308, %v1628
        %v1821 = vmul.f32 %v1309, %v1629
        %v1822 = vmul.f32 %v1310, %v1630
        %v1823 = vmul.f32 %v1311, %v1631
        %v1824 = vmul.f32 %v1312, %v1632
        %v1825 = vmul.f32 %v1313, %v1633
        %v1826 = vmul.f32 %v1314, %v1634
        %v1827 = vmul.f32 %v1315, %v1635
        %v1828 = vmul.f32 %v1316, %v1636
        %v1829 = vmul.f32 %v1317, %v1637
        %v1830 = vmul.f32 %v1318, %v1638
        %v1831 = vmul.f32 %v1319, %v1639
        %v1832 = vmul.f32 %v1320, %v1640
        %v1833 = vmul.f32 %v1321, %v1641
        %v1834 = vmul.f32 %v1322, %v1642
        %v1835 = vmul.f32 %v1323, %v1643
        %v1836 = vmul.f32 %v1324, %v1644
        %v1837 = vmul.f32 %v1325, %v1645
        %v1838 = vmul.f32 %v1326, %v1646
        %v1839 = vmul.f32 %v1327, %v1647
        %v1840 = vmul.f32 %v1328, %v1648
        %v1841 = vmul.f32 %v1329, %v1649
        %v1842 = vmul.f32 %v1330, %v1650
        %v1843 = vmul.f32 %v1331, %v1651
        %v1844 = vmul.f32 %v1332, %v1652
        %v1845 = vmul.f32 %v1333, %v1653
        %v1846 = vmul.f32 %v1334, %v1654
        %v1847 = vmul.f32 %v1335, %v1655
        %v1848 = vmul.f32 %v1336, %v1656
        %v1849 = vmul.f32 %v1337, %v1657
        %v1850 = vmul.f32 %v1338, %v1658
        %v1851 = vmul.f32 %v1339, %v1659
        %v1852 = vmul.f32 %v1340, %v1660
        %v1853 = vmul.f32 %v1341, %v1661
        %v1854 = vmul.f32 %v1342, %v1662
        %v1855 = vmul.f32 %v1343, %v1663
        %v1856 = vmul.f32 %v1344, %v1664
        %v1857 = vmul.f32 %v1345, %v1665
        %v1858 = vmul.f32 %v1346, %v1666
        %v1859 = vmul.f32 %v1347, %v1667
        %v1860 = vmul.f32 %v1348, %v1668
        %v1861 = vmul.f32 %v1349, %v1669
        %v1862 = vmul.f32 %v1350, %v1670
        %v1863 = vmul.f32 %v1351, %v1671
        %v1864 = vmul.f32 %v1352, %v1672
        %v1865 = vmul.f32 %v1353, %v1673
        %v1866 = vmul.f32 %v1354, %v1674
        %v1867 = vmul.f32 %v1355, %v1675
        %v1868 = vmul.f32 %v1356, %v1676
        %v1869 = vmul.f32 %v1357, %v1677
        %v1870 = vmul.f32 %v1358, %v1678
        %v1871 = vmul.f32 %v1359, %v1679
        %v1872 = vmul.f32 %v1360, %v1680
        %v1873 = vmul.f32 %v1361, %v1681
        %v1874 = vmul.f32 %v1362, %v1682
        %v1875 = vmul.f32 %v1363, %v1683
        %v1876 = vmul.f32 %v1364, %v1684
        %v1877 = vmul.f32 %v1365, %v1685
        %v1878 = vmul.f32 %v1366, %v1686
        %v1879 = vmul.f32 %v1367, %v1687
        %v1880 = vmul.f32 %v1368, %v1688
        %v1881 = vmul.f32 %v1369, %v1689
        %v1882 = vmul.f32 %v1370, %v1690
        %v1883 = vmul.f32 %v1371, %v1691
        %v1884 = vmul.f32 %v1372, %v1692
        %v1885 = vmul.f32 %v1373, %v1693
        %v1886 = vmul.f32 %v1374, %v1694
        %v1887 = vmul.f32 %v1375, %v1695
        %v1888 = vmul.f32 %v1376, %v1696
        %v1889 = vmul.f32 %v1377, %v1697
        %v1890 = vmul.f32 %v1378, %v1698
        %v1891 = vmul.f32 %v1379, %v1699
        %v1892 = vmul.f32 %v1380, %v1700
        %v1893 = vmul.f32 %v1381, %v1701
        %v1894 = vmul.f32 %v1382, %v1702
        %v1895 = vmul.f32 %v1383, %v1703
        %v1896 = vmul.f32 %v1384, %v1704
        %v1897 = vmul.f32 %v1385, %v1705
        %v1898 = vmul.f32 %v1386, %v1706
        %v1899 = vmul.f32 %v1387, %v1707
        %v1900 = vmul.f32 %v1388, %v1708
        %v1901 = vmul.f32 %v1389, %v1709
        %v1902 = vmul.f32 %v1390, %v1710
        %v1903 = vmul.f32 %v1391, %v1711
        %v1904 = vmul.f32 %v1392, %v1712
        %v1905 = vmul.f32 %v1393, %v1713
        %v1906 = vmul.f32 %v1394, %v1714
        %v1907 = vmul.f32 %v1395, %v1715
        %v1908 = vmul.f32 %v1396, %v1716
        %v1909 = vmul.f32 %v1397, %v1717
        %v1910 = vmul.f32 %v1398, %v1718
        %v1911 = vmul.f32 %v1399, %v1719
        %v1912 = vmul.f32 %v1400, %v1720
        %v1913 = vmul.f32 %v1401, %v1721
        %v1914 = vmul.f32 %v1402, %v1722
        %v1915 = vmul.f32 %v1403, %v1723
        %v1916 = vmul.f32 %v1404, %v1724
        %v1917 = vmul.f32 %v1405, %v1725
        %v1918 = vmul.f32 %v1406, %v1726
        %v1919 = vmul.f32 %v1407, %v1727
        %v1920 = vmul.f32 %v1408, %v1728
        %v1921 = vmul.f32 %v1409, %v1729
        %v1922 = vmul.f32 %v1410, %v1730
        %v1923 = vmul.f32 %v1411, %v1731
        %v1924 = vmul.f32 %v1412, %v1732
        %v1925 = vmul.f32 %v1413, %v1733
        %v1926 = vmul.f32 %v1414, %v1734
        %v1927 = vmul.f32 %v1415, %v1735
        %v1928 = vmul.f32 %v1416, %v1736
        %v1929 = vmul.f32 %v1417, %v1737
        %v1930 = vadd.f32 %v906, %v1738
        %v1931 = vadd.f32 %v907, %v1739
        %v1932 = vadd.f32 %v908, %v1740
        %v1933 = vadd.f32 %v909, %v1741
        %v1934 = vadd.f32 %v910, %v1742
        %v1935 = vadd.f32 %v911, %v1743
        %v1936 = vadd.f32 %v912, %v1744
        %v1937 = vadd.f32 %v913, %v1745
        %v1938 = vadd.f32 %v914, %v1746
        %v1939 = vadd.f32 %v915, %v1747
        %v1940 = vadd.f32 %v916, %v1748
        %v1941 = vadd.f32 %v917, %v1749
        %v1942 = vadd.f32 %v918, %v1750
        %v1943 = vadd.f32 %v919, %v1751
        %v1944 = vadd.f32 %v920, %v1752
        %v1945 = vadd.f32 %v921, %v1753
        %v1946 = vadd.f32 %v922, %v1754
        %v1947 = vadd.f32 %v923, %v1755
        %v1948 = vadd.f32 %v924, %v1756
        %v1949 = vadd.f32 %v925, %v1757
        %v1950 = vadd.f32 %v926, %v1758
        %v1951 = vadd.f32 %v927, %v1759
        %v1952 = vadd.f32 %v928, %v1760
        %v1953 = vadd.f32 %v929, %v1761
        %v1954 = vadd.f32 %v930, %v1762
        %v1955 = vadd.f32 %v931, %v1763
        %v1956 = vadd.f32 %v932, %v1764
        %v1957 = vadd.f32 %v933, %v1765
        %v1958 = vadd.f32 %v934, %v1766
        %v1959 = vadd.f32 %v935, %v1767
        %v1960 = vadd.f32 %v936, %v1768
        %v1961 = vadd.f32 %v937, %v1769
        %v1962 = vadd.f32 %v938, %v1770
        %v1963 = vadd.f32 %v939, %v1771
        %v1964 = vadd.f32 %v940, %v1772
        %v1965 = vadd.f32 %v941, %v1773
        %v1966 = vadd.f32 %v942, %v1774
        %v1967 = vadd.f32 %v943, %v1775
        %v1968 = vadd.f32 %v944, %v1776
        %v1969 = vadd.f32 %v945, %v1777
        %v1970 = vadd.f32 %v946, %v1778
        %v1971 = vadd.f32 %v947, %v1779
        %v1972 = vadd.f32 %v948, %v1780
        %v1973 = vadd.f32 %v949, %v1781
        %v1974 = vadd.f32 %v950, %v1782
        %v1975 = vadd.f32 %v951, %v1783
        %v1976 = vadd.f32 %v952, %v1784
        %v1977 = vadd.f32 %v953, %v1785
        %v1978 = vadd.f32 %v954, %v1786
        %v1979 = vadd.f32 %v955, %v1787
        %v1980 = vadd.f32 %v956, %v1788
        %v1981 = vadd.f32 %v957, %v1789
        %v1982 = vadd.f32 %v958, %v1790
        %v1983 = vadd.f32 %v959, %v1791
        %v1984 = vadd.f32 %v960, %v1792
        %v1985 = vadd.f32 %v961, %v1793
        %v1986 = vadd.f32 %v962, %v1794
        %v1987 = vadd.f32 %v963, %v1795
        %v1988 = vadd.f32 %v964, %v1796
        %v1989 = vadd.f32 %v965, %v1797
        %v1990 = vadd.f32 %v966, %v1798
        %v1991 = vadd.f32 %v967, %v1799
        %v1992 = vadd.f32 %v968, %v1800
        %v1993 = vadd.f32 %v969, %v1801
        %v1994 = vadd.f32 %v970, %v1802
        %v1995 = vadd.f32 %v971, %v1803
        %v1996 = vadd.f32 %v972, %v1804
        %v1997 = vadd.f32 %v973, %v1805
        %v1998 = vadd.f32 %v974, %v1806
        %v1999 = vadd.f32 %v975, %v1807
        %v2000 = vadd.f32 %v976, %v1808
        %v2001 = vadd.f32 %v977, %v1809
        %v2002 = vadd.f32 %v978, %v1810
        %v2003 = vadd.f32 %v979, %v1811
        %v2004 = vadd.f32 %v980, %v1812
        %v2005 = vadd.f32 %v981, %v1813
        %v2006 = vadd.f32 %v982, %v1814
        %v2007 = vadd.f32 %v983, %v1815
        %v2008 = vadd.f32 %v984, %v1816
        %v2009 = vadd.f32 %v985, %v1817
        %v2010 = vadd.f32 %v986, %v1818
        %v2011 = vadd.f32 %v987, %v1819
        %v2012 = vadd.f32 %v988, %v1820
        %v2013 = vadd.f32 %v989, %v1821
        %v2014 = vadd.f32 %v990, %v1822
        %v2015 = vadd.f32 %v991, %v1823
        %v2016 = vadd.f32 %v992, %v1824
        %v2017 = vadd.f32 %v993, %v1825
        %v2018 = vadd.f32 %v994, %v1826
        %v2019 = vadd.f32 %v995, %v1827
        %v2020 = vadd.f32 %v996, %v1828
        %v2021 = vadd.f32 %v997, %v1829
        %v2022 = vadd.f32 %v998, %v1830
        %v2023 = vadd.f32 %v999, %v1831
        %v2024 = vadd.f32 %v1000, %v1832
        %v2025 = vadd.f32 %v1001, %v1833
        %v2026 = vadd.f32 %v1002, %v1834
        %v2027 = vadd.f32 %v1003, %v1835
        %v2028 = vadd.f32 %v1004, %v1836
        %v2029 = vadd.f32 %v1005, %v1837
        %v2030 = vadd.f32 %v1006, %v1838
        %v2031 = vadd.f32 %v1007, %v1839
        %v2032 = vadd.f32 %v1008, %v1840
        %v2033 = vadd.f32 %v1009, %v1841
        %v2034 = vadd.f32 %v1010, %v1842
        %v2035 = vadd.f32 %v1011, %v1843
        %v2036 = vadd.f32 %v1012, %v1844
        %v2037 = vadd.f32 %v1013, %v1845
        %v2038 = vadd.f32 %v1014, %v1846
        %v2039 = vadd.f32 %v1015, %v1847
        %v2040 = vadd.f32 %v1016, %v1848
        %v2041 = vadd.f32 %v1017, %v1849
        %v2042 = vadd.f32 %v1018, %v1850
        %v2043 = vadd.f32 %v1019, %v1851
        %v2044 = vadd.f32 %v1020, %v1852
        %v2045 = vadd.f32 %v1021, %v1853
        %v2046 = vadd.f32 %v1022, %v1854
        %v2047 = vadd.f32 %v1023, %v1855
        %v2048 = vadd.f32 %v1024, %v1856
        %v2049 = vadd.f32 %v1025, %v1857
        %v2050 = vadd.f32 %v1026, %v1858
        %v2051 = vadd.f32 %v1027, %v1859
        %v2052 = vadd.f32 %v1028, %v1860
        %v2053 = vadd.f32 %v1029, %v1861
        %v2054 = vadd.f32 %v1030, %v1862
        %v2055 = vadd.f32 %v1031, %v1863
        %v2056 = vadd.f32 %v1032, %v1864
        %v2057 = vadd.f32 %v1033, %v1865
        %v2058 = vadd.f32 %v1034, %v1866
        %v2059 = vadd.f32 %v1035, %v1867
        %v2060 = vadd.f32 %v1036, %v1868
        %v2061 = vadd.f32 %v1037, %v1869
        %v2062 = vadd.f32 %v1038, %v1870
        %v2063 = vadd.f32 %v1039, %v1871
        %v2064 = vadd.f32 %v1040, %v1872
        %v2065 = vadd.f32 %v1041, %v1873
        %v2066 = vadd.f32 %v1042, %v1874
        %v2067 = vadd.f32 %v1043, %v1875
        %v2068 = vadd.f32 %v1044, %v1876
        %v2069 = vadd.f32 %v1045, %v1877
        %v2070 = vadd.f32 %v1046, %v1878
        %v2071 = vadd.f32 %v1047, %v1879
        %v2072 = vadd.f32 %v1048, %v1880
        %v2073 = vadd.f32 %v1049, %v1881
        %v2074 = vadd.f32 %v1050, %v1882
        %v2075 = vadd.f32 %v1051, %v1883
        %v2076 = vadd.f32 %v1052, %v1884
        %v2077 = vadd.f32 %v1053, %v1885
        %v2078 = vadd.f32 %v1054, %v1886
        %v2079 = vadd.f32 %v1055, %v1887
        %v2080 = vadd.f32 %v1056, %v1888
        %v2081 = vadd.f32 %v1057, %v1889
        %v2082 = vadd.f32 %v1058, %v1890
        %v2083 = vadd.f32 %v1059, %v1891
        %v2084 = vadd.f32 %v1060, %v1892
        %v2085 = vadd.f32 %v1061, %v1893
        %v2086 = vadd.f32 %v1062, %v1894
        %v2087 = vadd.f32 %v1063, %v1895
        %v2088 = vadd.f32 %v1064, %v1896
        %v2089 = vadd.f32 %v1065, %v1897
        %v2090 = vadd.f32 %v1066, %v1898
        %v2091 = vadd.f32 %v1067, %v1899
        %v2092 = vadd.f32 %v1068, %v1900
        %v2093 = vadd.f32 %v1069, %v1901
        %v2094 = vadd.f32 %v1070, %v1902
        %v2095 = vadd.f32 %v1071, %v1903
        %v2096 = vadd.f32 %v1072, %v1904
        %v2097 = vadd.f32 %v1073, %v1905
        %v2098 = vadd.f32 %v1074, %v1906
        %v2099 = vadd.f32 %v1075, %v1907
        %v2100 = vadd.f32 %v1076, %v1908
        %v2101 = vadd.f32 %v1077, %v1909
        %v2102 = vadd.f32 %v1078, %v1910
        %v2103 = vadd.f32 %v1079, %v1911
        %v2104 = vadd.f32 %v1080, %v1912
        %v2105 = vadd.f32 %v1081, %v1913
        %v2106 = vadd.f32 %v1082, %v1914
        %v2107 = vadd.f32 %v1083, %v1915
        %v2108 = vadd.f32 %v1084, %v1916
        %v2109 = vadd.f32 %v1085, %v1917
        %v2110 = vadd.f32 %v1086, %v1918
        %v2111 = vadd.f32 %v1087, %v1919
        %v2112 = vadd.f32 %v1088, %v1920
        %v2113 = vadd.f32 %v1089, %v1921
        %v2114 = vadd.f32 %v1090, %v1922
        %v2115 = vadd.f32 %v1091, %v1923
        %v2116 = vadd.f32 %v1092, %v1924
        %v2117 = vadd.f32 %v1093, %v1925
        %v2118 = vadd.f32 %v1094, %v1926
        %v2119 = vadd.f32 %v1095, %v1927
        %v2120 = vadd.f32 %v1096, %v1928
        %v2121 = vadd.f32 %v1097, %v1929
        %v2122 = vld [vmem:[#allocation2] sm:$0xff]
        %v2123 = vld [vmem:[#allocation2 + $0x8] sm:$0xff]
        %v2124 = vld [vmem:[#allocation2 + $0x10] sm:$0xff]
        %v2125 = vld [vmem:[%s766] sm:$0xff]
        %v2126 = vld [vmem:[%s766 + $0x8] sm:$0xff]
        %v2127 = vld [vmem:[%s766 + $0x10] sm:$0xff]
        %v2128 = vld [vmem:[%s766 + $0x18] sm:$0xff]
        %2129 = vmatprep.subr.mxu0 %v1976
        %2130 = vmatpush1.msra.mxu0 %v1975
        %2131 = vmatprep.subr.mxu0 %v1973
        %2132 = vmatpush1.msra.mxu0 %v1972
        %2133 = vmatprep.subr.mxu0 %v1970
        %2134 = vmatpush1.msra.mxu0 %v1969
        %2135 = vmatprep.subr.mxu0 %v1967
        %2136 = vmatpush1.msra.mxu0 %v1966
        %2137 = vmatprep.subr.mxu0 %v1964
        %2138 = vmatpush1.msra.mxu0 %v1963
        %2139 = vmatprep.subr.mxu0 %v1961
        %2140 = vmatpush1.msra.mxu0 %v1960
        %2141 = vmatprep.subr.mxu0 %v1958
        %2142 = vmatpush1.msra.mxu0 %v1957
        %2143 = vmatprep.subr.mxu0 %v1955
        %2144 = vmatpush1.msra.mxu0 %v1954
        %2145 = vmatprep.subr.mxu0 %v1952
        %2146 = vmatpush1.msra.mxu0 %v1951
        %2147 = vmatprep.subr.mxu0 %v1949
        %2148 = vmatpush1.msra.mxu0 %v1948
        %2149 = vmatprep.subr.mxu0 %v1946
        %2150 = vmatpush1.msra.mxu0 %v1945
        %2151 = vmatprep.subr.mxu0 %v1943
        %2152 = vmatpush1.msra.mxu0 %v1942
        %2153 = vmatprep.subr.mxu0 %v1940
        %2154 = vmatpush1.msra.mxu0 %v1939
        %2155 = vmatprep.subr.mxu0 %v1937
        %2156 = vmatpush1.msra.mxu0 %v1936
        %2157 = vmatprep.subr.mxu0 %v1934
        %2158 = vmatpush1.msra.mxu0 %v1933
        %2159 = vmatprep.subr.mxu0 %v1931
        %2160 = vmatpush1.msra.mxu0 %v1930
        %2161 = vmatprep.subr.mxu0 %v2024
        %2162 = vmatpush2.msra.mxu0 %v2023
        %2163 = vmatprep.subr.mxu0 %v2021
        %2164 = vmatpush2.msra.mxu0 %v2020
        %2165 = vmatprep.subr.mxu0 %v2018
        %2166 = vmatpush2.msra.mxu0 %v2017
        %2167 = vmatprep.subr.mxu0 %v2015
        %2168 = vmatpush2.msra.mxu0 %v2014
        %2169 = vmatprep.subr.mxu0 %v2012
        %2170 = vmatpush2.msra.mxu0 %v2011
        %2171 = vmatprep.subr.mxu0 %v2009
        %2172 = vmatpush2.msra.mxu0 %v2008
        %2173 = vmatprep.subr.mxu0 %v2006
        %2174 = vmatpush2.msra.mxu0 %v2005
        %2175 = vmatprep.subr.mxu0 %v2003
        %2176 = vmatpush2.msra.mxu0 %v2002
        %2177 = vmatprep.subr.mxu0 %v2000
        %2178 = vmatpush2.msra.mxu0 %v1999
        %2179 = vmatprep.subr.mxu0 %v1997
        %2180 = vmatpush2.msra.mxu0 %v1996
        %2181 = vmatprep.subr.mxu0 %v1994
        %2182 = vmatpush2.msra.mxu0 %v1993
        %2183 = vmatprep.subr.mxu0 %v1991
        %2184 = vmatpush2.msra.mxu0 %v1990
        %2185 = vmatprep.subr.mxu0 %v1988
        %2186 = vmatpush2.msra.mxu0 %v1987
        %2187 = vmatprep.subr.mxu0 %v1985
        %2188 = vmatpush2.msra.mxu0 %v1984
        %2189 = vmatprep.subr.mxu0 %v1982
        %2190 = vmatpush2.msra.mxu0 %v1981
        %2191 = vmatprep.subr.mxu0 %v1979
        %2192 = vmatpush2.msra.mxu0 %v1978
        %2193 = vmatprep.mubr.f32.mxu0 %v2126
        %2194 = vmatmul.mubr.f32.gmra.mxu0 %v2125
        %v2195 = vpop.f32.mrf.mxu0
        %v2196 = vadd.f32 0.0, %v2195
        %v2197 = vpop.f32.mrf.mxu0
        %v2198 = vadd.f32 0.0, %v2197
        %2199 = vdwg.mxu0
        %2200 = vmatprep.subr.mxu0 %v2072
        %2201 = vmatpush1.msra.mxu0 %v2071
        %2202 = vmatprep.subr.mxu0 %v2069
        %2203 = vmatpush1.msra.mxu0 %v2068
        %2204 = vmatprep.subr.mxu0 %v2066
        %2205 = vmatpush1.msra.mxu0 %v2065
        %2206 = vmatprep.subr.mxu0 %v2063
        %2207 = vmatpush1.msra.mxu0 %v2062
        %2208 = vmatprep.subr.mxu0 %v2060
        %2209 = vmatpush1.msra.mxu0 %v2059
        %2210 = vmatprep.subr.mxu0 %v2057
        %2211 = vmatpush1.msra.mxu0 %v2056
        %2212 = vmatprep.subr.mxu0 %v2054
        %2213 = vmatpush1.msra.mxu0 %v2053
        %2214 = vmatprep.subr.mxu0 %v2051
        %2215 = vmatpush1.msra.mxu0 %v2050
        %2216 = vmatprep.subr.mxu0 %v2048
        %2217 = vmatpush1.msra.mxu0 %v2047
        %2218 = vmatprep.subr.mxu0 %v2045
        %2219 = vmatpush1.msra.mxu0 %v2044
        %2220 = vmatprep.subr.mxu0 %v2042
        %2221 = vmatpush1.msra.mxu0 %v2041
        %2222 = vmatprep.subr.mxu0 %v2039
        %2223 = vmatpush1.msra.mxu0 %v2038
        %2224 = vmatprep.subr.mxu0 %v2036
        %2225 = vmatpush1.msra.mxu0 %v2035
        %2226 = vmatprep.subr.mxu0 %v2033
        %2227 = vmatpush1.msra.mxu0 %v2032
        %2228 = vmatprep.subr.mxu0 %v2030
        %2229 = vmatpush1.msra.mxu0 %v2029
        %2230 = vmatprep.subr.mxu0 %v2027
        %2231 = vmatpush1.msra.mxu0 %v2026
        %2232 = vmatprep.subr.mxu0 %v2120
        %2233 = vmatpush2.msra.mxu0 %v2119
        %2234 = vmatprep.subr.mxu0 %v2117
        %2235 = vmatpush2.msra.mxu0 %v2116
        %2236 = vmatprep.subr.mxu0 %v2114
        %2237 = vmatpush2.msra.mxu0 %v2113
        %2238 = vmatprep.subr.mxu0 %v2111
        %2239 = vmatpush2.msra.mxu0 %v2110
        %2240 = vmatprep.subr.mxu0 %v2108
        %2241 = vmatpush2.msra.mxu0 %v2107
        %2242 = vmatprep.subr.mxu0 %v2105
        %2243 = vmatpush2.msra.mxu0 %v2104
        %2244 = vmatprep.subr.mxu0 %v2102
        %2245 = vmatpush2.msra.mxu0 %v2101
        %2246 = vmatprep.subr.mxu0 %v2099
        %2247 = vmatpush2.msra.mxu0 %v2098
        %2248 = vmatprep.subr.mxu0 %v2096
        %2249 = vmatpush2.msra.mxu0 %v2095
        %2250 = vmatprep.subr.mxu0 %v2093
        %2251 = vmatpush2.msra.mxu0 %v2092
        %2252 = vmatprep.subr.mxu0 %v2090
        %2253 = vmatpush2.msra.mxu0 %v2089
        %2254 = vmatprep.subr.mxu0 %v2087
        %2255 = vmatpush2.msra.mxu0 %v2086
        %2256 = vmatprep.subr.mxu0 %v2084
        %2257 = vmatpush2.msra.mxu0 %v2083
        %2258 = vmatprep.subr.mxu0 %v2081
        %2259 = vmatpush2.msra.mxu0 %v2080
        %2260 = vmatprep.subr.mxu0 %v2078
        %2261 = vmatpush2.msra.mxu0 %v2077
        %2262 = vmatprep.subr.mxu0 %v2075
        %2263 = vmatpush2.msra.mxu0 %v2074
        %2264 = vmatprep.mubr.f32.mxu0 %v2128
        %2265 = vmatmul.mubr.f32.gmra.mxu0 %v2127
        %v2266 = vpop.f32.mrf.mxu0
        %v2267 = vadd.f32 %v2196, %v2266
        %v2268 = vpop.f32.mrf.mxu0
        %v2269 = vadd.f32 %v2198, %v2268
        %2270 = vdwg.mxu0
        %2271 = vmatprep.subr.mxu0 0.0
        %2272 = vmatpush1.msra.mxu0 %v1977
        %2273 = vmatprep.subr.mxu0 0.0
        %2274 = vmatpush1.msra.mxu0 %v1974
        %2275 = vmatprep.subr.mxu0 0.0
        %2276 = vmatpush1.msra.mxu0 %v1971
        %2277 = vmatprep.subr.mxu0 0.0
        %2278 = vmatpush1.msra.mxu0 %v1968
        %2279 = vmatprep.subr.mxu0 0.0
        %2280 = vmatpush1.msra.mxu0 %v1965
        %2281 = vmatprep.subr.mxu0 0.0
        %2282 = vmatpush1.msra.mxu0 %v1962
        %2283 = vmatprep.subr.mxu0 0.0
        %2284 = vmatpush1.msra.mxu0 %v1959
        %2285 = vmatprep.subr.mxu0 0.0
        %2286 = vmatpush1.msra.mxu0 %v1956
        %2287 = vmatprep.subr.mxu0 0.0
        %2288 = vmatpush1.msra.mxu0 %v1953
        %2289 = vmatprep.subr.mxu0 0.0
        %2290 = vmatpush1.msra.mxu0 %v1950
        %2291 = vmatprep.subr.mxu0 0.0
        %2292 = vmatpush1.msra.mxu0 %v1947
        %2293 = vmatprep.subr.mxu0 0.0
        %2294 = vmatpush1.msra.mxu0 %v1944
        %2295 = vmatprep.subr.mxu0 0.0
        %2296 = vmatpush1.msra.mxu0 %v1941
        %2297 = vmatprep.subr.mxu0 0.0
        %2298 = vmatpush1.msra.mxu0 %v1938
        %2299 = vmatprep.subr.mxu0 0.0
        %2300 = vmatpush1.msra.mxu0 %v1935
        %2301 = vmatprep.subr.mxu0 0.0
        %2302 = vmatpush1.msra.mxu0 %v1932
        %2303 = vmatprep.subr.mxu0 0.0
        %2304 = vmatpush2.msra.mxu0 %v2025
        %2305 = vmatprep.subr.mxu0 0.0
        %2306 = vmatpush2.msra.mxu0 %v2022
        %2307 = vmatprep.subr.mxu0 0.0
        %2308 = vmatpush2.msra.mxu0 %v2019
        %2309 = vmatprep.subr.mxu0 0.0
        %2310 = vmatpush2.msra.mxu0 %v2016
        %2311 = vmatprep.subr.mxu0 0.0
        %2312 = vmatpush2.msra.mxu0 %v2013
        %2313 = vmatprep.subr.mxu0 0.0
        %2314 = vmatpush2.msra.mxu0 %v2010
        %2315 = vmatprep.subr.mxu0 0.0
        %2316 = vmatpush2.msra.mxu0 %v2007
        %2317 = vmatprep.subr.mxu0 0.0
        %2318 = vmatpush2.msra.mxu0 %v2004
        %2319 = vmatprep.subr.mxu0 0.0
        %2320 = vmatpush2.msra.mxu0 %v2001
        %2321 = vmatprep.subr.mxu0 0.0
        %2322 = vmatpush2.msra.mxu0 %v1998
        %2323 = vmatprep.subr.mxu0 0.0
        %2324 = vmatpush2.msra.mxu0 %v1995
        %2325 = vmatprep.subr.mxu0 0.0
        %2326 = vmatpush2.msra.mxu0 %v1992
        %2327 = vmatprep.subr.mxu0 0.0
        %2328 = vmatpush2.msra.mxu0 %v1989
        %2329 = vmatprep.subr.mxu0 0.0
        %2330 = vmatpush2.msra.mxu0 %v1986
        %2331 = vmatprep.subr.mxu0 0.0
        %2332 = vmatpush2.msra.mxu0 %v1983
        %2333 = vmatprep.subr.mxu0 0.0
        %2334 = vmatpush2.msra.mxu0 %v1980
        %2335 = vmatprep.mubr.f32.mxu0 %v2126
        %2336 = vmatmul.mubr.f32.gmra.mxu0 %v2125
        %v2337 = vpop.f32.mrf.mxu0
        %v2338 = vadd.f32 0.0, %v2337
        %v2339 = vpop.f32.mrf.mxu0
        %2340 = vdwg.mxu0
        %2341 = vmatprep.subr.mxu0 0.0
        %2342 = vmatpush1.msra.mxu0 %v2073
        %2343 = vmatprep.subr.mxu0 0.0
        %2344 = vmatpush1.msra.mxu0 %v2070
        %2345 = vmatprep.subr.mxu0 0.0
        %2346 = vmatpush1.msra.mxu0 %v2067
        %2347 = vmatprep.subr.mxu0 0.0
        %2348 = vmatpush1.msra.mxu0 %v2064
        %2349 = vmatprep.subr.mxu0 0.0
        %2350 = vmatpush1.msra.mxu0 %v2061
        %2351 = vmatprep.subr.mxu0 0.0
        %2352 = vmatpush1.msra.mxu0 %v2058
        %2353 = vmatprep.subr.mxu0 0.0
        %2354 = vmatpush1.msra.mxu0 %v2055
        %2355 = vmatprep.subr.mxu0 0.0
        %2356 = vmatpush1.msra.mxu0 %v2052
        %2357 = vmatprep.subr.mxu0 0.0
        %2358 = vmatpush1.msra.mxu0 %v2049
        %2359 = vmatprep.subr.mxu0 0.0
        %2360 = vmatpush1.msra.mxu0 %v2046
        %2361 = vmatprep.subr.mxu0 0.0
        %2362 = vmatpush1.msra.mxu0 %v2043
        %2363 = vmatprep.subr.mxu0 0.0
        %2364 = vmatpush1.msra.mxu0 %v2040
        %2365 = vmatprep.subr.mxu0 0.0
        %2366 = vmatpush1.msra.mxu0 %v2037
        %2367 = vmatprep.subr.mxu0 0.0
        %2368 = vmatpush1.msra.mxu0 %v2034
        %2369 = vmatprep.subr.mxu0 0.0
        %2370 = vmatpush1.msra.mxu0 %v2031
        %2371 = vmatprep.subr.mxu0 0.0
        %2372 = vmatpush1.msra.mxu0 %v2028
        %2373 = vmatprep.subr.mxu0 0.0
        %2374 = vmatpush2.msra.mxu0 %v2121
        %2375 = vmatprep.subr.mxu0 0.0
        %2376 = vmatpush2.msra.mxu0 %v2118
        %2377 = vmatprep.subr.mxu0 0.0
        %2378 = vmatpush2.msra.mxu0 %v2115
        %2379 = vmatprep.subr.mxu0 0.0
        %2380 = vmatpush2.msra.mxu0 %v2112
        %2381 = vmatprep.subr.mxu0 0.0
        %2382 = vmatpush2.msra.mxu0 %v2109
        %2383 = vmatprep.subr.mxu0 0.0
        %2384 = vmatpush2.msra.mxu0 %v2106
        %2385 = vmatprep.subr.mxu0 0.0
        %2386 = vmatpush2.msra.mxu0 %v2103
        %2387 = vmatprep.subr.mxu0 0.0
        %2388 = vmatpush2.msra.mxu0 %v2100
        %2389 = vmatprep.subr.mxu0 0.0
        %2390 = vmatpush2.msra.mxu0 %v2097
        %2391 = vmatprep.subr.mxu0 0.0
        %2392 = vmatpush2.msra.mxu0 %v2094
        %2393 = vmatprep.subr.mxu0 0.0
        %2394 = vmatpush2.msra.mxu0 %v2091
        %2395 = vmatprep.subr.mxu0 0.0
        %2396 = vmatpush2.msra.mxu0 %v2088
        %2397 = vmatprep.subr.mxu0 0.0
        %2398 = vmatpush2.msra.mxu0 %v2085
        %2399 = vmatprep.subr.mxu0 0.0
        %2400 = vmatpush2.msra.mxu0 %v2082
        %2401 = vmatprep.subr.mxu0 0.0
        %2402 = vmatpush2.msra.mxu0 %v2079
        %2403 = vmatprep.subr.mxu0 0.0
        %2404 = vmatpush2.msra.mxu0 %v2076
        %2405 = vmatprep.mubr.f32.mxu0 %v2128
        %2406 = vmatmul.mubr.f32.gmra.mxu0 %v2127
        %v2407 = vpop.f32.mrf.mxu0
        %v2408 = vadd.f32 %v2338, %v2407
        %v2409 = vpop.f32.mrf.mxu0
        %2410 = vdwg.mxu0
        %v2411 = vadd.f32 %v2122, %v2267
        %v2412 = vadd.f32 %v2123, %v2269
        %v2413 = vadd.f32 %v2124, %v2408
        %2414 = vst [vmem:[#allocation2] sm:$0xff] %v2411
        %2415 = vst [vmem:[#allocation2 + $0x8] sm:$0xff] %v2412
        %2416 = vst [vmem:[#allocation2 + $0x10] sm:$0xff] %v2413
        %p2417 = scmp.eq.s32.totalorder %s38, 1
        // Predicated region
        $region129: #{lenet300_100_bbb_forward.1} parent=95 // pred_check
          %p2418 = pneg %p2417
        $region130: #{lenet300_100_bbb_forward.1} parent=95 // pred_check_branch
          %2420 = sbr.rel (%p2418) target = $region132
        $region131: #{lenet300_100_bbb_forward.1} parent=95 // pred_region
          %v2421 = vld [vmem:[%s4] sm:$0x7]
          %v2422 = vunpack.c.l.bf16 %v2421
          %v2423 = vld [vmem:[%s5] sm:$0x7]
          %v2424 = vunpack.c.l.bf16 %v2423
          %v2425 = vld [vmem:[%s6] sm:$0x7]
          %v2426 = vunpack.c.l.bf16 %v2425
          %v2427 = vmul.f32 %v2424, %v2426
          %v2428 = vadd.f32 %v2422, %v2427
          %v2429 = vld [vmem:[#allocation2] sm:$0xff]
          %v2430 = vld [vmem:[#allocation2 + $0x8] sm:$0xff]
          %v2431 = vld [vmem:[#allocation2 + $0x10] sm:$0xff]
          %v2433 = vlaneseq
          %v2434 = vshrl.u32 %v2433, 7
          %v2435 = vsub.s32 0, %v2434
          %v2436 = vrot.slane %v2428, %v2435
          %v2437 = vlaneseq
          %v2438 = vshrl.u32 %v2437, 7
          %v2439 = vsub.s32 2, %v2438
          %v2440 = vrot.slane %v2428, %v2439
          %v2441 = vlaneseq
          %v2442 = vshrl.u32 %v2441, 7
          %v2443 = vsub.s32 4, %v2442
          %v2444 = vrot.slane %v2428, %v2443
          %v2448 = vlaneseq
          %v2449 = vshrl.u32 %v2448, 7
          %v2450 = vsub.s32 0, %v2449
          %v2451 = vrot.slane %v2436, %v2450
          %v2452 = vlaneseq
          %v2453 = vshrl.u32 %v2452, 7
          %v2454 = vsub.s32 0, %v2453
          %v2455 = vrot.slane %v2440, %v2454
          %v2456 = vlaneseq
          %v2457 = vshrl.u32 %v2456, 7
          %v2458 = vsub.s32 0, %v2457
          %v2459 = vrot.slane %v2444, %v2458
          %v2460 = vadd.f32 %v2429, %v2451
          %v2461 = vadd.f32 %v2430, %v2455
          %v2462 = vadd.f32 %v2431, %v2459
          %v2463 = vmax.f32 %v2460, 0.0
          %v2464 = vmax.f32 %v2461, 0.0
          %v2465 = vmax.f32 %v2462, 0.0
          %v2466 = vld [vmem:[%s7] sm:$0xf]
          %v2467 = vld [vmem:[%s7 + $0x4] sm:$0xf]
          %v2468 = vld [vmem:[%s7 + $0x8] sm:$0xf]
          %v2469 = vld [vmem:[%s7 + $0xc] sm:$0xf]
          %v2470 = vld [vmem:[%s7 + $0x10] sm:$0xf]
          %v2471 = vld [vmem:[%s7 + $0x14] sm:$0xf]
          %v2472 = vld [vmem:[%s7 + $0x18] sm:$0xf]
          %v2473 = vld [vmem:[%s7 + $0x1c] sm:$0xf]
          %v2474 = vld [vmem:[%s7 + $0x20] sm:$0xf]
          %v2475 = vld [vmem:[%s7 + $0x24] sm:$0xf]
          %v2476 = vld [vmem:[%s7 + $0x28] sm:$0xf]
          %v2477 = vld [vmem:[%s7 + $0x2c] sm:$0xf]
          %v2478 = vld [vmem:[%s7 + $0x30] sm:$0xf]
          %v2479 = vld [vmem:[%s7 + $0x34] sm:$0xf]
          %v2480 = vld [vmem:[%s7 + $0x38] sm:$0xf]
          %v2481 = vld [vmem:[%s7 + $0x3c] sm:$0xf]
          %v2482 = vld [vmem:[%s7 + $0x40] sm:$0xf]
          %v2483 = vld [vmem:[%s7 + $0x44] sm:$0xf]
          %v2484 = vld [vmem:[%s7 + $0x48] sm:$0xf]
          %v2485 = vld [vmem:[%s7 + $0x4c] sm:$0xf]
          %v2486 = vld [vmem:[%s7 + $0x50] sm:$0xf]
          %v2487 = vld [vmem:[%s7 + $0x54] sm:$0xf]
          %v2488 = vld [vmem:[%s7 + $0x58] sm:$0xf]
          %v2489 = vld [vmem:[%s7 + $0x5c] sm:$0xf]
          %v2490 = vld [vmem:[%s7 + $0x60] sm:$0xf]
          %v2491 = vld [vmem:[%s7 + $0x64] sm:$0xf]
          %v2492 = vld [vmem:[%s7 + $0x68] sm:$0xf]
          %v2493 = vld [vmem:[%s7 + $0x6c] sm:$0xf]
          %v2494 = vld [vmem:[%s7 + $0x70] sm:$0xf]
          %v2495 = vld [vmem:[%s7 + $0x74] sm:$0xf]
          %v2496 = vld [vmem:[%s7 + $0x78] sm:$0xf]
          %v2497 = vld [vmem:[%s7 + $0x7c] sm:$0xf]
          %v2498 = vld [vmem:[%s7 + $0x80] sm:$0xf]
          %v2499 = vld [vmem:[%s7 + $0x84] sm:$0xf]
          %v2500 = vld [vmem:[%s7 + $0x88] sm:$0xf]
          %v2501 = vld [vmem:[%s7 + $0x8c] sm:$0xf]
          %v2502 = vld [vmem:[%s7 + $0x90] sm:$0xf]
          %v2503 = vld [vmem:[%s7 + $0x94] sm:$0xf]
          %v2504 = vld [vmem:[%s7 + $0x98] sm:$0xf]
          %v2505 = vld [vmem:[%s7 + $0x9c] sm:$0xf]
          %v2506 = vld [vmem:[%s7 + $0xa0] sm:$0xf]
          %v2507 = vld [vmem:[%s7 + $0xa4] sm:$0xf]
          %v2508 = vld [vmem:[%s7 + $0xa8] sm:$0xf]
          %v2509 = vld [vmem:[%s7 + $0xac] sm:$0xf]
          %v2510 = vld [vmem:[%s7 + $0xb0] sm:$0xf]
          %v2511 = vld [vmem:[%s7 + $0xb4] sm:$0xf]
          %v2512 = vld [vmem:[%s7 + $0xb8] sm:$0xf]
          %v2513 = vld [vmem:[%s7 + $0xbc] sm:$0xf]
          %v2514 = vunpack.c.l.bf16 %v2466
          %v2515 = vunpack.c.l.bf16 %v2467
          %v2516 = vunpack.c.l.bf16 %v2468
          %v2517 = vunpack.c.l.bf16 %v2469
          %v2518 = vunpack.c.l.bf16 %v2470
          %v2519 = vunpack.c.l.bf16 %v2471
          %v2520 = vunpack.c.l.bf16 %v2472
          %v2521 = vunpack.c.l.bf16 %v2473
          %v2522 = vunpack.c.l.bf16 %v2474
          %v2523 = vunpack.c.l.bf16 %v2475
          %v2524 = vunpack.c.l.bf16 %v2476
          %v2525 = vunpack.c.l.bf16 %v2477
          %v2526 = vunpack.c.l.bf16 %v2478
          %v2527 = vunpack.c.l.bf16 %v2479
          %v2528 = vunpack.c.l.bf16 %v2480
          %v2529 = vunpack.c.l.bf16 %v2481
          %v2530 = vunpack.c.l.bf16 %v2482
          %v2531 = vunpack.c.l.bf16 %v2483
          %v2532 = vunpack.c.l.bf16 %v2484
          %v2533 = vunpack.c.l.bf16 %v2485
          %v2534 = vunpack.c.l.bf16 %v2486
          %v2535 = vunpack.c.l.bf16 %v2487
          %v2536 = vunpack.c.l.bf16 %v2488
          %v2537 = vunpack.c.l.bf16 %v2489
          %v2538 = vunpack.c.l.bf16 %v2490
          %v2539 = vunpack.c.l.bf16 %v2491
          %v2540 = vunpack.c.l.bf16 %v2492
          %v2541 = vunpack.c.l.bf16 %v2493
          %v2542 = vunpack.c.l.bf16 %v2494
          %v2543 = vunpack.c.l.bf16 %v2495
          %v2544 = vunpack.c.l.bf16 %v2496
          %v2545 = vunpack.c.l.bf16 %v2497
          %v2546 = vunpack.c.l.bf16 %v2498
          %v2547 = vunpack.c.l.bf16 %v2499
          %v2548 = vunpack.c.l.bf16 %v2500
          %v2549 = vunpack.c.l.bf16 %v2501
          %v2550 = vunpack.c.l.bf16 %v2502
          %v2551 = vunpack.c.l.bf16 %v2503
          %v2552 = vunpack.c.l.bf16 %v2504
          %v2553 = vunpack.c.l.bf16 %v2505
          %v2554 = vunpack.c.l.bf16 %v2506
          %v2555 = vunpack.c.l.bf16 %v2507
          %v2556 = vunpack.c.l.bf16 %v2508
          %v2557 = vunpack.c.l.bf16 %v2509
          %v2558 = vunpack.c.l.bf16 %v2510
          %v2559 = vunpack.c.l.bf16 %v2511
          %v2560 = vunpack.c.l.bf16 %v2512
          %v2561 = vunpack.c.l.bf16 %v2513
          %v2562 = vld [vmem:[#allocation8] sm:$0xf]
          %v2563 = vld [vmem:[#allocation8 + $0x4] sm:$0xf]
          %v2564 = vld [vmem:[#allocation8 + $0x8] sm:$0xf]
          %v2565 = vld [vmem:[#allocation8 + $0xc] sm:$0xf]
          %v2566 = vld [vmem:[#allocation8 + $0x10] sm:$0xf]
          %v2567 = vld [vmem:[#allocation8 + $0x14] sm:$0xf]
          %v2568 = vld [vmem:[#allocation8 + $0x18] sm:$0xf]
          %v2569 = vld [vmem:[#allocation8 + $0x1c] sm:$0xf]
          %v2570 = vld [vmem:[#allocation8 + $0x20] sm:$0xf]
          %v2571 = vld [vmem:[#allocation8 + $0x24] sm:$0xf]
          %v2572 = vld [vmem:[#allocation8 + $0x28] sm:$0xf]
          %v2573 = vld [vmem:[#allocation8 + $0x2c] sm:$0xf]
          %v2574 = vld [vmem:[#allocation8 + $0x30] sm:$0xf]
          %v2575 = vld [vmem:[#allocation8 + $0x34] sm:$0xf]
          %v2576 = vld [vmem:[#allocation8 + $0x38] sm:$0xf]
          %v2577 = vld [vmem:[#allocation8 + $0x3c] sm:$0xf]
          %v2578 = vld [vmem:[#allocation8 + $0x40] sm:$0xf]
          %v2579 = vld [vmem:[#allocation8 + $0x44] sm:$0xf]
          %v2580 = vld [vmem:[#allocation8 + $0x48] sm:$0xf]
          %v2581 = vld [vmem:[#allocation8 + $0x4c] sm:$0xf]
          %v2582 = vld [vmem:[#allocation8 + $0x50] sm:$0xf]
          %v2583 = vld [vmem:[#allocation8 + $0x54] sm:$0xf]
          %v2584 = vld [vmem:[#allocation8 + $0x58] sm:$0xf]
          %v2585 = vld [vmem:[#allocation8 + $0x5c] sm:$0xf]
          %v2586 = vld [vmem:[#allocation8 + $0x60] sm:$0xf]
          %v2587 = vld [vmem:[#allocation8 + $0x64] sm:$0xf]
          %v2588 = vld [vmem:[#allocation8 + $0x68] sm:$0xf]
          %v2589 = vld [vmem:[#allocation8 + $0x6c] sm:$0xf]
          %v2590 = vld [vmem:[#allocation8 + $0x70] sm:$0xf]
          %v2591 = vld [vmem:[#allocation8 + $0x74] sm:$0xf]
          %v2592 = vld [vmem:[#allocation8 + $0x78] sm:$0xf]
          %v2593 = vld [vmem:[#allocation8 + $0x7c] sm:$0xf]
          %v2594 = vld [vmem:[#allocation8 + $0x80] sm:$0xf]
          %v2595 = vld [vmem:[#allocation8 + $0x84] sm:$0xf]
          %v2596 = vld [vmem:[#allocation8 + $0x88] sm:$0xf]
          %v2597 = vld [vmem:[#allocation8 + $0x8c] sm:$0xf]
          %v2598 = vld [vmem:[#allocation8 + $0x90] sm:$0xf]
          %v2599 = vld [vmem:[#allocation8 + $0x94] sm:$0xf]
          %v2600 = vld [vmem:[#allocation8 + $0x98] sm:$0xf]
          %v2601 = vld [vmem:[#allocation8 + $0x9c] sm:$0xf]
          %v2602 = vld [vmem:[#allocation8 + $0xa0] sm:$0xf]
          %v2603 = vld [vmem:[#allocation8 + $0xa4] sm:$0xf]
          %v2604 = vld [vmem:[#allocation8 + $0xa8] sm:$0xf]
          %v2605 = vld [vmem:[#allocation8 + $0xac] sm:$0xf]
          %v2606 = vld [vmem:[#allocation8 + $0xb0] sm:$0xf]
          %v2607 = vld [vmem:[#allocation8 + $0xb4] sm:$0xf]
          %v2608 = vld [vmem:[#allocation8 + $0xb8] sm:$0xf]
          %v2609 = vld [vmem:[#allocation8 + $0xbc] sm:$0xf]
          %v2610 = vunpack.c.l.bf16 %v2562
          %v2611 = vunpack.c.l.bf16 %v2563
          %v2612 = vunpack.c.l.bf16 %v2564
          %v2613 = vunpack.c.l.bf16 %v2565
          %v2614 = vunpack.c.l.bf16 %v2566
          %v2615 = vunpack.c.l.bf16 %v2567
          %v2616 = vunpack.c.l.bf16 %v2568
          %v2617 = vunpack.c.l.bf16 %v2569
          %v2618 = vunpack.c.l.bf16 %v2570
          %v2619 = vunpack.c.l.bf16 %v2571
          %v2620 = vunpack.c.l.bf16 %v2572
          %v2621 = vunpack.c.l.bf16 %v2573
          %v2622 = vunpack.c.l.bf16 %v2574
          %v2623 = vunpack.c.l.bf16 %v2575
          %v2624 = vunpack.c.l.bf16 %v2576
          %v2625 = vunpack.c.l.bf16 %v2577
          %v2626 = vunpack.c.l.bf16 %v2578
          %v2627 = vunpack.c.l.bf16 %v2579
          %v2628 = vunpack.c.l.bf16 %v2580
          %v2629 = vunpack.c.l.bf16 %v2581
          %v2630 = vunpack.c.l.bf16 %v2582
          %v2631 = vunpack.c.l.bf16 %v2583
          %v2632 = vunpack.c.l.bf16 %v2584
          %v2633 = vunpack.c.l.bf16 %v2585
          %v2634 = vunpack.c.l.bf16 %v2586
          %v2635 = vunpack.c.l.bf16 %v2587
          %v2636 = vunpack.c.l.bf16 %v2588
          %v2637 = vunpack.c.l.bf16 %v2589
          %v2638 = vunpack.c.l.bf16 %v2590
          %v2639 = vunpack.c.l.bf16 %v2591
          %v2640 = vunpack.c.l.bf16 %v2592
          %v2641 = vunpack.c.l.bf16 %v2593
          %v2642 = vunpack.c.l.bf16 %v2594
          %v2643 = vunpack.c.l.bf16 %v2595
          %v2644 = vunpack.c.l.bf16 %v2596
          %v2645 = vunpack.c.l.bf16 %v2597
          %v2646 = vunpack.c.l.bf16 %v2598
          %v2647 = vunpack.c.l.bf16 %v2599
          %v2648 = vunpack.c.l.bf16 %v2600
          %v2649 = vunpack.c.l.bf16 %v2601
          %v2650 = vunpack.c.l.bf16 %v2602
          %v2651 = vunpack.c.l.bf16 %v2603
          %v2652 = vunpack.c.l.bf16 %v2604
          %v2653 = vunpack.c.l.bf16 %v2605
          %v2654 = vunpack.c.l.bf16 %v2606
          %v2655 = vunpack.c.l.bf16 %v2607
          %v2656 = vunpack.c.l.bf16 %v2608
          %v2657 = vunpack.c.l.bf16 %v2609
          %v2658 = vld [vmem:[#allocation10] sm:$0xf]
          %v2659 = vld [vmem:[#allocation10 + $0x4] sm:$0xf]
          %v2660 = vld [vmem:[#allocation10 + $0x8] sm:$0xf]
          %v2661 = vld [vmem:[#allocation10 + $0xc] sm:$0xf]
          %v2662 = vld [vmem:[#allocation10 + $0x10] sm:$0xf]
          %v2663 = vld [vmem:[#allocation10 + $0x14] sm:$0xf]
          %v2664 = vld [vmem:[#allocation10 + $0x18] sm:$0xf]
          %v2665 = vld [vmem:[#allocation10 + $0x1c] sm:$0xf]
          %v2666 = vld [vmem:[#allocation10 + $0x20] sm:$0xf]
          %v2667 = vld [vmem:[#allocation10 + $0x24] sm:$0xf]
          %v2668 = vld [vmem:[#allocation10 + $0x28] sm:$0xf]
          %v2669 = vld [vmem:[#allocation10 + $0x2c] sm:$0xf]
          %v2670 = vld [vmem:[#allocation10 + $0x30] sm:$0xf]
          %v2671 = vld [vmem:[#allocation10 + $0x34] sm:$0xf]
          %v2672 = vld [vmem:[#allocation10 + $0x38] sm:$0xf]
          %v2673 = vld [vmem:[#allocation10 + $0x3c] sm:$0xf]
          %v2674 = vld [vmem:[#allocation10 + $0x40] sm:$0xf]
          %v2675 = vld [vmem:[#allocation10 + $0x44] sm:$0xf]
          %v2676 = vld [vmem:[#allocation10 + $0x48] sm:$0xf]
          %v2677 = vld [vmem:[#allocation10 + $0x4c] sm:$0xf]
          %v2678 = vld [vmem:[#allocation10 + $0x50] sm:$0xf]
          %v2679 = vld [vmem:[#allocation10 + $0x54] sm:$0xf]
          %v2680 = vld [vmem:[#allocation10 + $0x58] sm:$0xf]
          %v2681 = vld [vmem:[#allocation10 + $0x5c] sm:$0xf]
          %v2682 = vld [vmem:[#allocation10 + $0x60] sm:$0xf]
          %v2683 = vld [vmem:[#allocation10 + $0x64] sm:$0xf]
          %v2684 = vld [vmem:[#allocation10 + $0x68] sm:$0xf]
          %v2685 = vld [vmem:[#allocation10 + $0x6c] sm:$0xf]
          %v2686 = vld [vmem:[#allocation10 + $0x70] sm:$0xf]
          %v2687 = vld [vmem:[#allocation10 + $0x74] sm:$0xf]
          %v2688 = vld [vmem:[#allocation10 + $0x78] sm:$0xf]
          %v2689 = vld [vmem:[#allocation10 + $0x7c] sm:$0xf]
          %v2690 = vld [vmem:[#allocation10 + $0x80] sm:$0xf]
          %v2691 = vld [vmem:[#allocation10 + $0x84] sm:$0xf]
          %v2692 = vld [vmem:[#allocation10 + $0x88] sm:$0xf]
          %v2693 = vld [vmem:[#allocation10 + $0x8c] sm:$0xf]
          %v2694 = vld [vmem:[#allocation10 + $0x90] sm:$0xf]
          %v2695 = vld [vmem:[#allocation10 + $0x94] sm:$0xf]
          %v2696 = vld [vmem:[#allocation10 + $0x98] sm:$0xf]
          %v2697 = vld [vmem:[#allocation10 + $0x9c] sm:$0xf]
          %v2698 = vld [vmem:[#allocation10 + $0xa0] sm:$0xf]
          %v2699 = vld [vmem:[#allocation10 + $0xa4] sm:$0xf]
          %v2700 = vld [vmem:[#allocation10 + $0xa8] sm:$0xf]
          %v2701 = vld [vmem:[#allocation10 + $0xac] sm:$0xf]
          %v2702 = vld [vmem:[#allocation10 + $0xb0] sm:$0xf]
          %v2703 = vld [vmem:[#allocation10 + $0xb4] sm:$0xf]
          %v2704 = vld [vmem:[#allocation10 + $0xb8] sm:$0xf]
          %v2705 = vld [vmem:[#allocation10 + $0xbc] sm:$0xf]
          %v2706 = vunpack.c.l.bf16 %v2658
          %v2707 = vunpack.c.l.bf16 %v2659
          %v2708 = vunpack.c.l.bf16 %v2660
          %v2709 = vunpack.c.l.bf16 %v2661
          %v2710 = vunpack.c.l.bf16 %v2662
          %v2711 = vunpack.c.l.bf16 %v2663
          %v2712 = vunpack.c.l.bf16 %v2664
          %v2713 = vunpack.c.l.bf16 %v2665
          %v2714 = vunpack.c.l.bf16 %v2666
          %v2715 = vunpack.c.l.bf16 %v2667
          %v2716 = vunpack.c.l.bf16 %v2668
          %v2717 = vunpack.c.l.bf16 %v2669
          %v2718 = vunpack.c.l.bf16 %v2670
          %v2719 = vunpack.c.l.bf16 %v2671
          %v2720 = vunpack.c.l.bf16 %v2672
          %v2721 = vunpack.c.l.bf16 %v2673
          %v2722 = vunpack.c.l.bf16 %v2674
          %v2723 = vunpack.c.l.bf16 %v2675
          %v2724 = vunpack.c.l.bf16 %v2676
          %v2725 = vunpack.c.l.bf16 %v2677
          %v2726 = vunpack.c.l.bf16 %v2678
          %v2727 = vunpack.c.l.bf16 %v2679
          %v2728 = vunpack.c.l.bf16 %v2680
          %v2729 = vunpack.c.l.bf16 %v2681
          %v2730 = vunpack.c.l.bf16 %v2682
          %v2731 = vunpack.c.l.bf16 %v2683
          %v2732 = vunpack.c.l.bf16 %v2684
          %v2733 = vunpack.c.l.bf16 %v2685
          %v2734 = vunpack.c.l.bf16 %v2686
          %v2735 = vunpack.c.l.bf16 %v2687
          %v2736 = vunpack.c.l.bf16 %v2688
          %v2737 = vunpack.c.l.bf16 %v2689
          %v2738 = vunpack.c.l.bf16 %v2690
          %v2739 = vunpack.c.l.bf16 %v2691
          %v2740 = vunpack.c.l.bf16 %v2692
          %v2741 = vunpack.c.l.bf16 %v2693
          %v2742 = vunpack.c.l.bf16 %v2694
          %v2743 = vunpack.c.l.bf16 %v2695
          %v2744 = vunpack.c.l.bf16 %v2696
          %v2745 = vunpack.c.l.bf16 %v2697
          %v2746 = vunpack.c.l.bf16 %v2698
          %v2747 = vunpack.c.l.bf16 %v2699
          %v2748 = vunpack.c.l.bf16 %v2700
          %v2749 = vunpack.c.l.bf16 %v2701
          %v2750 = vunpack.c.l.bf16 %v2702
          %v2751 = vunpack.c.l.bf16 %v2703
          %v2752 = vunpack.c.l.bf16 %v2704
          %v2753 = vunpack.c.l.bf16 %v2705
          %v2754 = vmul.f32 %v2610, %v2706
          %v2755 = vmul.f32 %v2611, %v2707
          %v2756 = vmul.f32 %v2612, %v2708
          %v2757 = vmul.f32 %v2613, %v2709
          %v2758 = vmul.f32 %v2614, %v2710
          %v2759 = vmul.f32 %v2615, %v2711
          %v2760 = vmul.f32 %v2616, %v2712
          %v2761 = vmul.f32 %v2617, %v2713
          %v2762 = vmul.f32 %v2618, %v2714
          %v2763 = vmul.f32 %v2619, %v2715
          %v2764 = vmul.f32 %v2620, %v2716
          %v2765 = vmul.f32 %v2621, %v2717
          %v2766 = vmul.f32 %v2622, %v2718
          %v2767 = vmul.f32 %v2623, %v2719
          %v2768 = vmul.f32 %v2624, %v2720
          %v2769 = vmul.f32 %v2625, %v2721
          %v2770 = vmul.f32 %v2626, %v2722
          %v2771 = vmul.f32 %v2627, %v2723
          %v2772 = vmul.f32 %v2628, %v2724
          %v2773 = vmul.f32 %v2629, %v2725
          %v2774 = vmul.f32 %v2630, %v2726
          %v2775 = vmul.f32 %v2631, %v2727
          %v2776 = vmul.f32 %v2632, %v2728
          %v2777 = vmul.f32 %v2633, %v2729
          %v2778 = vmul.f32 %v2634, %v2730
          %v2779 = vmul.f32 %v2635, %v2731
          %v2780 = vmul.f32 %v2636, %v2732
          %v2781 = vmul.f32 %v2637, %v2733
          %v2782 = vmul.f32 %v2638, %v2734
          %v2783 = vmul.f32 %v2639, %v2735
          %v2784 = vmul.f32 %v2640, %v2736
          %v2785 = vmul.f32 %v2641, %v2737
          %v2786 = vmul.f32 %v2642, %v2738
          %v2787 = vmul.f32 %v2643, %v2739
          %v2788 = vmul.f32 %v2644, %v2740
          %v2789 = vmul.f32 %v2645, %v2741
          %v2790 = vmul.f32 %v2646, %v2742
          %v2791 = vmul.f32 %v2647, %v2743
          %v2792 = vmul.f32 %v2648, %v2744
          %v2793 = vmul.f32 %v2649, %v2745
          %v2794 = vmul.f32 %v2650, %v2746
          %v2795 = vmul.f32 %v2651, %v2747
          %v2796 = vmul.f32 %v2652, %v2748
          %v2797 = vmul.f32 %v2653, %v2749
          %v2798 = vmul.f32 %v2654, %v2750
          %v2799 = vmul.f32 %v2655, %v2751
          %v2800 = vmul.f32 %v2656, %v2752
          %v2801 = vmul.f32 %v2657, %v2753
          %v2802 = vadd.f32 %v2514, %v2754
          %v2803 = vadd.f32 %v2515, %v2755
          %v2804 = vadd.f32 %v2516, %v2756
          %v2805 = vadd.f32 %v2517, %v2757
          %v2806 = vadd.f32 %v2518, %v2758
          %v2807 = vadd.f32 %v2519, %v2759
          %v2808 = vadd.f32 %v2520, %v2760
          %v2809 = vadd.f32 %v2521, %v2761
          %v2810 = vadd.f32 %v2522, %v2762
          %v2811 = vadd.f32 %v2523, %v2763
          %v2812 = vadd.f32 %v2524, %v2764
          %v2813 = vadd.f32 %v2525, %v2765
          %v2814 = vadd.f32 %v2526, %v2766
          %v2815 = vadd.f32 %v2527, %v2767
          %v2816 = vadd.f32 %v2528, %v2768
          %v2817 = vadd.f32 %v2529, %v2769
          %v2818 = vadd.f32 %v2530, %v2770
          %v2819 = vadd.f32 %v2531, %v2771
          %v2820 = vadd.f32 %v2532, %v2772
          %v2821 = vadd.f32 %v2533, %v2773
          %v2822 = vadd.f32 %v2534, %v2774
          %v2823 = vadd.f32 %v2535, %v2775
          %v2824 = vadd.f32 %v2536, %v2776
          %v2825 = vadd.f32 %v2537, %v2777
          %v2826 = vadd.f32 %v2538, %v2778
          %v2827 = vadd.f32 %v2539, %v2779
          %v2828 = vadd.f32 %v2540, %v2780
          %v2829 = vadd.f32 %v2541, %v2781
          %v2830 = vadd.f32 %v2542, %v2782
          %v2831 = vadd.f32 %v2543, %v2783
          %v2832 = vadd.f32 %v2544, %v2784
          %v2833 = vadd.f32 %v2545, %v2785
          %v2834 = vadd.f32 %v2546, %v2786
          %v2835 = vadd.f32 %v2547, %v2787
          %v2836 = vadd.f32 %v2548, %v2788
          %v2837 = vadd.f32 %v2549, %v2789
          %v2838 = vadd.f32 %v2550, %v2790
          %v2839 = vadd.f32 %v2551, %v2791
          %v2840 = vadd.f32 %v2552, %v2792
          %v2841 = vadd.f32 %v2553, %v2793
          %v2842 = vadd.f32 %v2554, %v2794
          %v2843 = vadd.f32 %v2555, %v2795
          %v2844 = vadd.f32 %v2556, %v2796
          %v2845 = vadd.f32 %v2557, %v2797
          %v2846 = vadd.f32 %v2558, %v2798
          %v2847 = vadd.f32 %v2559, %v2799
          %v2848 = vadd.f32 %v2560, %v2800
          %v2849 = vadd.f32 %v2561, %v2801
          %v2850 = vld [vmem:[%s10] sm:$0x1]
          %v2851 = vunpack.c.l.bf16 %v2850
          %v2852 = vld [vmem:[%s11] sm:$0x1]
          %v2853 = vunpack.c.l.bf16 %v2852
          %v2854 = vld [vmem:[%s12] sm:$0x1]
          %v2855 = vunpack.c.l.bf16 %v2854
          %v2856 = vmul.f32 %v2853, %v2855
          %v2857 = vadd.f32 %v2851, %v2856
          %v2858 = vlaneseq
          %v2859 = vshrl.u32 %v2858, 7
          %v2860 = vsub.s32 0, %v2859
          %v2861 = vrot.slane %v2857, %v2860
          %2862 = vmatprep.subr.mxu0 0.0
          %2863 = vmatpush1.msra.mxu0 %v2817
          %2864 = vmatprep.subr.mxu0 0.0
          %2865 = vmatpush1.msra.mxu0 %v2816
          %2866 = vmatprep.subr.mxu0 0.0
          %2867 = vmatpush1.msra.mxu0 %v2815
          %2868 = vmatprep.subr.mxu0 0.0
          %2869 = vmatpush1.msra.mxu0 %v2814
          %2870 = vmatprep.subr.mxu0 0.0
          %2871 = vmatpush1.msra.mxu0 %v2813
          %2872 = vmatprep.subr.mxu0 0.0
          %2873 = vmatpush1.msra.mxu0 %v2812
          %2874 = vmatprep.subr.mxu0 0.0
          %2875 = vmatpush1.msra.mxu0 %v2811
          %2876 = vmatprep.subr.mxu0 0.0
          %2877 = vmatpush1.msra.mxu0 %v2810
          %2878 = vmatprep.subr.mxu0 0.0
          %2879 = vmatpush1.msra.mxu0 %v2809
          %2880 = vmatprep.subr.mxu0 0.0
          %2881 = vmatpush1.msra.mxu0 %v2808
          %2882 = vmatprep.subr.mxu0 0.0
          %2883 = vmatpush1.msra.mxu0 %v2807
          %2884 = vmatprep.subr.mxu0 0.0
          %2885 = vmatpush1.msra.mxu0 %v2806
          %2886 = vmatprep.subr.mxu0 0.0
          %2887 = vmatpush1.msra.mxu0 %v2805
          %2888 = vmatprep.subr.mxu0 0.0
          %2889 = vmatpush1.msra.mxu0 %v2804
          %2890 = vmatprep.subr.mxu0 0.0
          %2891 = vmatpush1.msra.mxu0 %v2803
          %2892 = vmatprep.subr.mxu0 0.0
          %2893 = vmatpush1.msra.mxu0 %v2802
          %2894 = vmatprep.subr.mxu0 0.0
          %2895 = vmatpush2.msra.mxu0 %v2833
          %2896 = vmatprep.subr.mxu0 0.0
          %2897 = vmatpush2.msra.mxu0 %v2832
          %2898 = vmatprep.subr.mxu0 0.0
          %2899 = vmatpush2.msra.mxu0 %v2831
          %2900 = vmatprep.subr.mxu0 0.0
          %2901 = vmatpush2.msra.mxu0 %v2830
          %2902 = vmatprep.subr.mxu0 0.0
          %2903 = vmatpush2.msra.mxu0 %v2829
          %2904 = vmatprep.subr.mxu0 0.0
          %2905 = vmatpush2.msra.mxu0 %v2828
          %2906 = vmatprep.subr.mxu0 0.0
          %2907 = vmatpush2.msra.mxu0 %v2827
          %2908 = vmatprep.subr.mxu0 0.0
          %2909 = vmatpush2.msra.mxu0 %v2826
          %2910 = vmatprep.subr.mxu0 0.0
          %2911 = vmatpush2.msra.mxu0 %v2825
          %2912 = vmatprep.subr.mxu0 0.0
          %2913 = vmatpush2.msra.mxu0 %v2824
          %2914 = vmatprep.subr.mxu0 0.0
          %2915 = vmatpush2.msra.mxu0 %v2823
          %2916 = vmatprep.subr.mxu0 0.0
          %2917 = vmatpush2.msra.mxu0 %v2822
          %2918 = vmatprep.subr.mxu0 0.0
          %2919 = vmatpush2.msra.mxu0 %v2821
          %2920 = vmatprep.subr.mxu0 0.0
          %2921 = vmatpush2.msra.mxu0 %v2820
          %2922 = vmatprep.subr.mxu0 0.0
          %2923 = vmatpush2.msra.mxu0 %v2819
          %2924 = vmatprep.subr.mxu0 0.0
          %2925 = vmatpush2.msra.mxu0 %v2818
          %2926 = vmatprep.mubr.f32.mxu0 %v2464
          %2927 = vmatmul.mubr.f32.gmra.mxu0 %v2463
          %v2928 = vpop.f32.mrf.mxu0
          %v2929 = vadd.f32 %v2861, %v2928
          %v2930 = vpop.f32.mrf.mxu0
          %2931 = vdwg.mxu0
          %2932 = vmatprep.subr.mxu0 0.0
          %2933 = vmatpush1.msra.mxu0 %v2849
          %2934 = vmatprep.subr.mxu0 0.0
          %2935 = vmatpush1.msra.mxu0 %v2848
          %2936 = vmatprep.subr.mxu0 0.0
          %2937 = vmatpush1.msra.mxu0 %v2847
          %2938 = vmatprep.subr.mxu0 0.0
          %2939 = vmatpush1.msra.mxu0 %v2846
          %2940 = vmatprep.subr.mxu0 0.0
          %2941 = vmatpush1.msra.mxu0 %v2845
          %2942 = vmatprep.subr.mxu0 0.0
          %2943 = vmatpush1.msra.mxu0 %v2844
          %2944 = vmatprep.subr.mxu0 0.0
          %2945 = vmatpush1.msra.mxu0 %v2843
          %2946 = vmatprep.subr.mxu0 0.0
          %2947 = vmatpush1.msra.mxu0 %v2842
          %2948 = vmatprep.subr.mxu0 0.0
          %2949 = vmatpush1.msra.mxu0 %v2841
          %2950 = vmatprep.subr.mxu0 0.0
          %2951 = vmatpush1.msra.mxu0 %v2840
          %2952 = vmatprep.subr.mxu0 0.0
          %2953 = vmatpush1.msra.mxu0 %v2839
          %2954 = vmatprep.subr.mxu0 0.0
          %2955 = vmatpush1.msra.mxu0 %v2838
          %2956 = vmatprep.subr.mxu0 0.0
          %2957 = vmatpush1.msra.mxu0 %v2837
          %2958 = vmatprep.subr.mxu0 0.0
          %2959 = vmatpush1.msra.mxu0 %v2836
          %2960 = vmatprep.subr.mxu0 0.0
          %2961 = vmatpush1.msra.mxu0 %v2835
          %2962 = vmatprep.subr.mxu0 0.0
          %2963 = vmatpush1.msra.mxu0 %v2834
          %2964 = vmatprep.subr.mxu0 0.0
          %2965 = vmatpush2.msra.mxu0 0.0
          %2966 = vmatprep.subr.mxu0 0.0
          %2967 = vmatpush2.msra.mxu0 0.0
          %2968 = vmatprep.subr.mxu0 0.0
          %2969 = vmatpush2.msra.mxu0 0.0
          %2970 = vmatprep.subr.mxu0 0.0
          %2971 = vmatpush2.msra.mxu0 0.0
          %2972 = vmatprep.subr.mxu0 0.0
          %2973 = vmatpush2.msra.mxu0 0.0
          %2974 = vmatprep.subr.mxu0 0.0
          %2975 = vmatpush2.msra.mxu0 0.0
          %2976 = vmatprep.subr.mxu0 0.0
          %2977 = vmatpush2.msra.mxu0 0.0
          %2978 = vmatprep.subr.mxu0 0.0
          %2979 = vmatpush2.msra.mxu0 0.0
          %2980 = vmatprep.subr.mxu0 0.0
          %2981 = vmatpush2.msra.mxu0 0.0
          %2982 = vmatprep.subr.mxu0 0.0
          %2983 = vmatpush2.msra.mxu0 0.0
          %2984 = vmatprep.subr.mxu0 0.0
          %2985 = vmatpush2.msra.mxu0 0.0
          %2986 = vmatprep.subr.mxu0 0.0
          %2987 = vmatpush2.msra.mxu0 0.0
          %2988 = vmatprep.subr.mxu0 0.0
          %2989 = vmatpush2.msra.mxu0 0.0
          %2990 = vmatprep.subr.mxu0 0.0
          %2991 = vmatpush2.msra.mxu0 0.0
          %2992 = vmatprep.subr.mxu0 0.0
          %2993 = vmatpush2.msra.mxu0 0.0
          %2994 = vmatprep.subr.mxu0 0.0
          %2995 = vmatpush2.msra.mxu0 0.0
          %2996 = vmatprep.mubr.f32.mxu0 0.0
          %2997 = vmatmul.mubr.f32.gmra.mxu0 %v2465
          %v2998 = vpop.f32.mrf.mxu0
          %v2999 = vadd.f32 %v2929, %v2998
          %v3000 = vpop.f32.mrf.mxu0
          %3001 = vdwg.mxu0
          %v3002 = vmax.f32 %v2999, 0.0
          %v3003 = vld [vmem:[%s13] sm:$0xf]
          %v3004 = vld [vmem:[%s13 + $0x4] sm:$0xf]
          %v3005 = vld [vmem:[%s13 + $0x8] sm:$0xf]
          %v3006 = vld [vmem:[%s13 + $0xc] sm:$0xf]
          %v3007 = vld [vmem:[%s13 + $0x10] sm:$0xf]
          %v3008 = vld [vmem:[%s13 + $0x14] sm:$0xf]
          %v3009 = vld [vmem:[%s13 + $0x18] sm:$0xf]
          %v3010 = vld [vmem:[%s13 + $0x1c] sm:$0xf]
          %v3011 = vld [vmem:[%s13 + $0x20] sm:$0xf]
          %v3012 = vld [vmem:[%s13 + $0x24] sm:$0xf]
          %v3013 = vld [vmem:[%s13 + $0x28] sm:$0xf]
          %v3014 = vld [vmem:[%s13 + $0x2c] sm:$0xf]
          %v3015 = vld [vmem:[%s13 + $0x30] sm:$0xf]
          %v3016 = vld [vmem:[%s13 + $0x34] sm:$0xf]
          %v3017 = vld [vmem:[%s13 + $0x38] sm:$0xf]
          %v3018 = vld [vmem:[%s13 + $0x3c] sm:$0xf]
          %v3019 = vunpack.c.l.bf16 %v3003
          %v3020 = vunpack.c.l.bf16 %v3004
          %v3021 = vunpack.c.l.bf16 %v3005
          %v3022 = vunpack.c.l.bf16 %v3006
          %v3023 = vunpack.c.l.bf16 %v3007
          %v3024 = vunpack.c.l.bf16 %v3008
          %v3025 = vunpack.c.l.bf16 %v3009
          %v3026 = vunpack.c.l.bf16 %v3010
          %v3027 = vunpack.c.l.bf16 %v3011
          %v3028 = vunpack.c.l.bf16 %v3012
          %v3029 = vunpack.c.l.bf16 %v3013
          %v3030 = vunpack.c.l.bf16 %v3014
          %v3031 = vunpack.c.l.bf16 %v3015
          %v3032 = vunpack.c.l.bf16 %v3016
          %v3033 = vunpack.c.l.bf16 %v3017
          %v3034 = vunpack.c.l.bf16 %v3018
          %v3035 = vld [vmem:[#allocation11] sm:$0xf]
          %v3036 = vld [vmem:[#allocation11 + $0x4] sm:$0xf]
          %v3037 = vld [vmem:[#allocation11 + $0x8] sm:$0xf]
          %v3038 = vld [vmem:[#allocation11 + $0xc] sm:$0xf]
          %v3039 = vld [vmem:[#allocation11 + $0x10] sm:$0xf]
          %v3040 = vld [vmem:[#allocation11 + $0x14] sm:$0xf]
          %v3041 = vld [vmem:[#allocation11 + $0x18] sm:$0xf]
          %v3042 = vld [vmem:[#allocation11 + $0x1c] sm:$0xf]
          %v3043 = vld [vmem:[#allocation11 + $0x20] sm:$0xf]
          %v3044 = vld [vmem:[#allocation11 + $0x24] sm:$0xf]
          %v3045 = vld [vmem:[#allocation11 + $0x28] sm:$0xf]
          %v3046 = vld [vmem:[#allocation11 + $0x2c] sm:$0xf]
          %v3047 = vld [vmem:[#allocation11 + $0x30] sm:$0xf]
          %v3048 = vld [vmem:[#allocation11 + $0x34] sm:$0xf]
          %v3049 = vld [vmem:[#allocation11 + $0x38] sm:$0xf]
          %v3050 = vld [vmem:[#allocation11 + $0x3c] sm:$0xf]
          %v3051 = vunpack.c.l.bf16 %v3035
          %v3052 = vunpack.c.l.bf16 %v3036
          %v3053 = vunpack.c.l.bf16 %v3037
          %v3054 = vunpack.c.l.bf16 %v3038
          %v3055 = vunpack.c.l.bf16 %v3039
          %v3056 = vunpack.c.l.bf16 %v3040
          %v3057 = vunpack.c.l.bf16 %v3041
          %v3058 = vunpack.c.l.bf16 %v3042
          %v3059 = vunpack.c.l.bf16 %v3043
          %v3060 = vunpack.c.l.bf16 %v3044
          %v3061 = vunpack.c.l.bf16 %v3045
          %v3062 = vunpack.c.l.bf16 %v3046
          %v3063 = vunpack.c.l.bf16 %v3047
          %v3064 = vunpack.c.l.bf16 %v3048
          %v3065 = vunpack.c.l.bf16 %v3049
          %v3066 = vunpack.c.l.bf16 %v3050
          %v3067 = vld [vmem:[#allocation13] sm:$0xf]
          %v3068 = vld [vmem:[#allocation13 + $0x4] sm:$0xf]
          %v3069 = vld [vmem:[#allocation13 + $0x8] sm:$0xf]
          %v3070 = vld [vmem:[#allocation13 + $0xc] sm:$0xf]
          %v3071 = vld [vmem:[#allocation13 + $0x10] sm:$0xf]
          %v3072 = vld [vmem:[#allocation13 + $0x14] sm:$0xf]
          %v3073 = vld [vmem:[#allocation13 + $0x18] sm:$0xf]
          %v3074 = vld [vmem:[#allocation13 + $0x1c] sm:$0xf]
          %v3075 = vld [vmem:[#allocation13 + $0x20] sm:$0xf]
          %v3076 = vld [vmem:[#allocation13 + $0x24] sm:$0xf]
          %v3077 = vld [vmem:[#allocation13 + $0x28] sm:$0xf]
          %v3078 = vld [vmem:[#allocation13 + $0x2c] sm:$0xf]
          %v3079 = vld [vmem:[#allocation13 + $0x30] sm:$0xf]
          %v3080 = vld [vmem:[#allocation13 + $0x34] sm:$0xf]
          %v3081 = vld [vmem:[#allocation13 + $0x38] sm:$0xf]
          %v3082 = vld [vmem:[#allocation13 + $0x3c] sm:$0xf]
          %v3083 = vunpack.c.l.bf16 %v3067
          %v3084 = vunpack.c.l.bf16 %v3068
          %v3085 = vunpack.c.l.bf16 %v3069
          %v3086 = vunpack.c.l.bf16 %v3070
          %v3087 = vunpack.c.l.bf16 %v3071
          %v3088 = vunpack.c.l.bf16 %v3072
          %v3089 = vunpack.c.l.bf16 %v3073
          %v3090 = vunpack.c.l.bf16 %v3074
          %v3091 = vunpack.c.l.bf16 %v3075
          %v3092 = vunpack.c.l.bf16 %v3076
          %v3093 = vunpack.c.l.bf16 %v3077
          %v3094 = vunpack.c.l.bf16 %v3078
          %v3095 = vunpack.c.l.bf16 %v3079
          %v3096 = vunpack.c.l.bf16 %v3080
          %v3097 = vunpack.c.l.bf16 %v3081
          %v3098 = vunpack.c.l.bf16 %v3082
          %v3099 = vmul.f32 %v3051, %v3083
          %v3100 = vmul.f32 %v3052, %v3084
          %v3101 = vmul.f32 %v3053, %v3085
          %v3102 = vmul.f32 %v3054, %v3086
          %v3103 = vmul.f32 %v3055, %v3087
          %v3104 = vmul.f32 %v3056, %v3088
          %v3105 = vmul.f32 %v3057, %v3089
          %v3106 = vmul.f32 %v3058, %v3090
          %v3107 = vmul.f32 %v3059, %v3091
          %v3108 = vmul.f32 %v3060, %v3092
          %v3109 = vmul.f32 %v3061, %v3093
          %v3110 = vmul.f32 %v3062, %v3094
          %v3111 = vmul.f32 %v3063, %v3095
          %v3112 = vmul.f32 %v3064, %v3096
          %v3113 = vmul.f32 %v3065, %v3097
          %v3114 = vmul.f32 %v3066, %v3098
          %v3115 = vadd.f32 %v3019, %v3099
          %v3116 = vadd.f32 %v3020, %v3100
          %v3117 = vadd.f32 %v3021, %v3101
          %v3118 = vadd.f32 %v3022, %v3102
          %v3119 = vadd.f32 %v3023, %v3103
          %v3120 = vadd.f32 %v3024, %v3104
          %v3121 = vadd.f32 %v3025, %v3105
          %v3122 = vadd.f32 %v3026, %v3106
          %v3123 = vadd.f32 %v3027, %v3107
          %v3124 = vadd.f32 %v3028, %v3108
          %v3125 = vadd.f32 %v3029, %v3109
          %v3126 = vadd.f32 %v3030, %v3110
          %v3127 = vadd.f32 %v3031, %v3111
          %v3128 = vadd.f32 %v3032, %v3112
          %v3129 = vadd.f32 %v3033, %v3113
          %v3130 = vadd.f32 %v3034, %v3114
          %v3131 = vld [vmem:[%s16] sm:$0x1]
          %v3132 = vunpack.c.l.bf16 %v3131
          %v3133 = vld [vmem:[%s17] sm:$0x1]
          %v3134 = vunpack.c.l.bf16 %v3133
          %v3135 = vld [vmem:[%s18] sm:$0x1]
          %v3136 = vunpack.c.l.bf16 %v3135
          %v3137 = vmul.f32 %v3134, %v3136
          %v3138 = vadd.f32 %v3132, %v3137
          %v3139 = vlaneseq
          %v3140 = vshrl.u32 %v3139, 7
          %v3141 = vsub.s32 0, %v3140
          %v3142 = vrot.slane %v3138, %v3141
          %3143 = vmatprep.subr.mxu0 0.0
          %3144 = vmatpush1.msra.mxu0 %v3130
          %3145 = vmatprep.subr.mxu0 0.0
          %3146 = vmatpush1.msra.mxu0 %v3129
          %3147 = vmatprep.subr.mxu0 0.0
          %3148 = vmatpush1.msra.mxu0 %v3128
          %3149 = vmatprep.subr.mxu0 0.0
          %3150 = vmatpush1.msra.mxu0 %v3127
          %3151 = vmatprep.subr.mxu0 0.0
          %3152 = vmatpush1.msra.mxu0 %v3126
          %3153 = vmatprep.subr.mxu0 0.0
          %3154 = vmatpush1.msra.mxu0 %v3125
          %3155 = vmatprep.subr.mxu0 0.0
          %3156 = vmatpush1.msra.mxu0 %v3124
          %3157 = vmatprep.subr.mxu0 0.0
          %3158 = vmatpush1.msra.mxu0 %v3123
          %3159 = vmatprep.subr.mxu0 0.0
          %3160 = vmatpush1.msra.mxu0 %v3122
          %3161 = vmatprep.subr.mxu0 0.0
          %3162 = vmatpush1.msra.mxu0 %v3121
          %3163 = vmatprep.subr.mxu0 0.0
          %3164 = vmatpush1.msra.mxu0 %v3120
          %3165 = vmatprep.subr.mxu0 0.0
          %3166 = vmatpush1.msra.mxu0 %v3119
          %3167 = vmatprep.subr.mxu0 0.0
          %3168 = vmatpush1.msra.mxu0 %v3118
          %3169 = vmatprep.subr.mxu0 0.0
          %3170 = vmatpush1.msra.mxu0 %v3117
          %3171 = vmatprep.subr.mxu0 0.0
          %3172 = vmatpush1.msra.mxu0 %v3116
          %3173 = vmatprep.subr.mxu0 0.0
          %3174 = vmatpush1.msra.mxu0 %v3115
          %3175 = vmatprep.subr.mxu0 0.0
          %3176 = vmatpush2.msra.mxu0 0.0
          %3177 = vmatprep.subr.mxu0 0.0
          %3178 = vmatpush2.msra.mxu0 0.0
          %3179 = vmatprep.subr.mxu0 0.0
          %3180 = vmatpush2.msra.mxu0 0.0
          %3181 = vmatprep.subr.mxu0 0.0
          %3182 = vmatpush2.msra.mxu0 0.0
          %3183 = vmatprep.subr.mxu0 0.0
          %3184 = vmatpush2.msra.mxu0 0.0
          %3185 = vmatprep.subr.mxu0 0.0
          %3186 = vmatpush2.msra.mxu0 0.0
          %3187 = vmatprep.subr.mxu0 0.0
          %3188 = vmatpush2.msra.mxu0 0.0
          %3189 = vmatprep.subr.mxu0 0.0
          %3190 = vmatpush2.msra.mxu0 0.0
          %3191 = vmatprep.subr.mxu0 0.0
          %3192 = vmatpush2.msra.mxu0 0.0
          %3193 = vmatprep.subr.mxu0 0.0
          %3194 = vmatpush2.msra.mxu0 0.0
          %3195 = vmatprep.subr.mxu0 0.0
          %3196 = vmatpush2.msra.mxu0 0.0
          %3197 = vmatprep.subr.mxu0 0.0
          %3198 = vmatpush2.msra.mxu0 0.0
          %3199 = vmatprep.subr.mxu0 0.0
          %3200 = vmatpush2.msra.mxu0 0.0
          %3201 = vmatprep.subr.mxu0 0.0
          %3202 = vmatpush2.msra.mxu0 0.0
          %3203 = vmatprep.subr.mxu0 0.0
          %3204 = vmatpush2.msra.mxu0 0.0
          %3205 = vmatprep.subr.mxu0 0.0
          %3206 = vmatpush2.msra.mxu0 0.0
          %3207 = vmatprep.mubr.f32.mxu0 0.0
          %3208 = vmatmul.mubr.f32.gmra.mxu0 %v3002
          %v3209 = vpop.f32.mrf.mxu0
          %v3210 = vadd.f32 %v3142, %v3209
          %v3211 = vpop.f32.mrf.mxu0
          %3212 = vdwg.mxu0
          %3213 = vst [vmem:[%s19] sm:$0xff] %v3210
        $region132: #{lenet300_100_bbb_forward.1} parent=95 // pred_fallthru
          _
        // Predicated region
        $region133: #{lenet300_100_bbb_forward.1} parent=95 // pred_check
          %p3214 = pneg %p470
        $region134: #{lenet300_100_bbb_forward.1} parent=95 // pred_check_branch
          %3216 = sbr.rel (%p3214) target = $region136
        $region135: #{lenet300_100_bbb_forward.1} parent=95 // pred_region
          _
        $region136: #{lenet300_100_bbb_forward.1} parent=95 // pred_fallthru
          _
        // Predicated region
        $region137: #{lenet300_100_bbb_forward.1} parent=95 // pred_check
          %p3217 = pneg %p470
        $region138: #{lenet300_100_bbb_forward.1} parent=95 // pred_check_branch
          %3219 = sbr.rel (%p3217) target = $region140
        $region139: #{lenet300_100_bbb_forward.1} parent=95 // pred_region
          _
        $region140: #{lenet300_100_bbb_forward.1} parent=95 // pred_fallthru
          _
      $region96: #{lenet300_100_bbb_forward.1} parent=5 // pred_fallthru
        _
      %p3220 = scmp.le.s32.totalorder 2, %s33
      // Predicated region
      $region141: #{lenet300_100_bbb_forward.1} parent=5 // pred_check
        %p3221 = pneg %p3220
      $region142: #{lenet300_100_bbb_forward.1} parent=5 // pred_check_branch
        %3223 = sbr.rel (%p3221) target = $region144
      $region143: #{lenet300_100_bbb_forward.1} parent=5 // pred_region
        %s3224 = ssub.s32 %s33, 2
      $region144: #{lenet300_100_bbb_forward.1} parent=5 // pred_fallthru
        _
    $region6: #{lenet300_100_bbb_forward.1} parent=1 // loop_footer
      %s37 = sadd.s32 1, %s33
    $region7: #{lenet300_100_bbb_forward.1} parent=1 // loop_footer_branch
      %32 = sbr.rel target = $region3
    $region8: #{lenet300_100_bbb_forward.1} parent=1 // loop_exit
      _
    %3225 = vsyncpa [#allocation4], 1
    %s3226 = scalar_lea.sflag [#allocation4], 1
    %3227 = vsyncpa %s3226, 1
    %3228 = vsyncpa [#allocation6], 1
    %s3229 = scalar_lea.sflag [#allocation6], 1
    %3230 = vsyncpa %s3229, 1
    %3231 = vsyncpa [#allocation9], 1
    %3232 = vsyncpa [#allocation12], 1

</llo_original>
